<compile_context>
chip_gen: v7x
topology: tpu7x:2x2x1
jax: 0.10.0
libtpu: 0.0.40
codegen_flags: <defaults>
</compile_context>

<pallas_src>
import jax
import jax.numpy as jnp
import numpy as np
from jax.experimental import pallas as pl
from jax.experimental.pallas import tpu as pltpu

BN_EPS = 1e-5
LANES = 128
SUBLANES = 8


# ----------------------------------------------------------------------------
# Parameter setup (deterministic, BN folded into conv/linear weights).
# ----------------------------------------------------------------------------
def _fold_bn(w, b, gamma, beta, mean, var):
    scale = gamma / jnp.sqrt(var + BN_EPS)
    return w * scale[None, :], (b - mean) * scale + beta


def init_params(key, input_dim=6, settings_dim=6, hidden_dim=64, output_dim=6,
                stn_dim=3):
    keys = iter(jax.random.split(key, 80))

    def lin(cin, cout):
        bound = 1.0 / float(cin) ** 0.5
        w = jax.random.uniform(next(keys), (cin, cout), jnp.float32, -bound, bound)
        b = jax.random.uniform(next(keys), (cout,), jnp.float32, -bound, bound)
        return w, b

    def bn(c):
        gamma = jax.random.uniform(next(keys), (c,), jnp.float32, 0.8, 1.2)
        beta = 0.05 * jax.random.normal(next(keys), (c,), jnp.float32)
        mean = 0.05 * jax.random.normal(next(keys), (c,), jnp.float32)
        var = jax.random.uniform(next(keys), (c,), jnp.float32, 0.5, 1.5)
        return gamma, beta, mean, var

    def lin_bn(cin, cout):
        w, b = lin(cin, cout)
        wf, bf = _fold_bn(w, b, *bn(cout))
        return wf, bf.reshape(1, cout)

    H = hidden_dim
    p = {}
    # STN (k=stn_dim): conv stack + fc head.
    p["s_w1"], p["s_b1"] = lin_bn(stn_dim, H // 4)
    p["s_w2"], p["s_b2"] = lin_bn(H // 4, H // 2)
    p["s_w3"], p["s_b3"] = lin_bn(H // 2, H)
    p["s_fw1"], p["s_fb1"] = lin_bn(H, H)
    p["s_fw2"], p["s_fb2"] = lin_bn(H, H // 2)
    w, b = lin(H // 2, stn_dim * stn_dim)
    p["s_fw3"], p["s_fb3"] = w, b.reshape(1, -1)
    # PointNetfeat stack.
    p["w1"], p["b1"] = lin_bn(input_dim, H // 4)
    p["w2"], p["b2"] = lin_bn(H // 4, H // 2)
    p["w3"], p["b3"] = lin_bn(H + settings_dim, H)      # input = [h2, gmax32, settings]
    # Regression head.
    p["r_w1"], p["r_b1"] = lin_bn(H + H // 4, H // 2)   # input = [gmax64, pointfeat]
    p["r_w2"], p["r_b2"] = lin_bn(H // 2, H // 4)
    w, b = lin(H // 4, output_dim)
    p["r_w3"], p["r_b3"] = w, b.reshape(1, -1)
    return p


# ----------------------------------------------------------------------------
# Pack every grid-invariant weight/bias into ONE lane-padded bf16 slab.
# ----------------------------------------------------------------------------
def build_slab(p, *, input_dim, hidden_dim, output_dim, stn_dim,
               dtype=jnp.bfloat16):
    H, C, k = hidden_dim, input_dim, stn_dim

    # STN conv1 weight zero-padded to input_dim rows so the kernel consumes the
    # full (N, input_dim) tile (extra channels hit exact-zero rows).
    s_w1p = jnp.concatenate(
        [p["s_w1"], jnp.zeros((C - k, p["s_w1"].shape[1]), jnp.float32)], axis=0)

    # Fold STN fc3 (+identity) with conv1's spatial rows (all in f32):
    #   row i of (trans @ w1[:3]) = h_fc @ A_i + d_i
    #   A_i = s_fw3[:, 3i:3i+3] @ w1[:3],   d_i = (s_fb3[:, 3i:3i+3] + e_i) @ w1[:3]
    w1_top, w1_bot = p["w1"][:k], p["w1"][k:]
    eye = jnp.eye(k, dtype=jnp.float32)
    A = jnp.concatenate(
        [p["s_fw3"][:, k * i:k * (i + 1)] @ w1_top for i in range(k)], axis=1)
    d = jnp.concatenate(
        [(p["s_fb3"][:, k * i:k * (i + 1)] + eye[i:i + 1]) @ w1_top
         for i in range(k)], axis=1)

    # conv3 weight split by its concatenated input: [h2 | max(h2) | settings].
    w3x, w3g, w3s = p["w3"][:H // 2], p["w3"][H // 2:H], p["w3"][H:]
    # regression conv1 split by its concatenated input: [max(h3) | pointfeat].
    wr1g, wr1x = p["r_w1"][:H], p["r_w1"][H:]
    # conv2 and the regression point path share h1 as LHS -> merged weight.
    w2_r1x = jnp.concatenate([p["w2"], wr1x], axis=1)
    # Lane-dense output: pad the last conv from output_dim to 128 channels.
    wr3p = jnp.pad(p["r_w3"], ((0, 0), (0, LANES - output_dim)))
    br3p = jnp.pad(p["r_b3"], ((0, 0), (0, LANES - output_dim)))

    pieces = [
        ("s_w1p", s_w1p), ("s_b1", p["s_b1"]),
        ("s_w2", p["s_w2"]), ("s_b2", p["s_b2"]),
        ("s_w3", p["s_w3"]), ("s_b3", p["s_b3"]),
        ("s_fw1", p["s_fw1"]), ("s_fb1", p["s_fb1"]),
        ("s_fw2", p["s_fw2"]), ("s_fb2", p["s_fb2"]),
        ("A", A), ("d", d),
        ("w1_bot", w1_bot), ("b1", p["b1"]),
        ("w2_r1x", w2_r1x), ("b2", p["b2"]),
        ("w3x", w3x), ("w3g", w3g), ("w3s", w3s), ("b3", p["b3"]),
        ("wr1g", wr1g), ("br1", p["r_b1"]),
        ("wr2", p["r_w2"]), ("br2", p["r_b2"]),
        ("wr3p", wr3p), ("br3p", br3p),
    ]
    layout, rows, off = {}, [], 0
    for name, a in pieces:
        a = jnp.asarray(a, jnp.float32)
        r, c = a.shape
        rp = r + (-r) % SUBLANES                     # 8-align each piece's rows
        rows.append(jnp.pad(a, ((0, rp - r), (0, LANES - c))))
        layout[name] = (off, r, c)
        off += rp
    slab = jnp.concatenate(rows, axis=0).astype(dtype)
    return slab, layout


# ----------------------------------------------------------------------------
# The fused kernel: whole network for one batch item per grid step.
# ----------------------------------------------------------------------------
def _make_kernel(layout, hidden_dim):
    n1, n2 = hidden_dim // 4, hidden_dim // 2
    f32, bf16 = jnp.float32, jnp.bfloat16

    def dotf(a, b):
        return jnp.dot(a, b, preferred_element_type=f32)

    def relu(v):
        return jnp.maximum(v, 0.0)

    def kernel(x_ref, set_ref, slab_ref, out_ref):
        def W(name):                                  # static slab slice (free)
            off, r, c = layout[name]
            return slab_ref[off:off + r, :c]

        x = x_ref[0]                                  # (N, C) bf16
        settings = set_ref[0]                         # (1, S) f32

        # ---- STN conv stack + max over points ----
        h = relu(dotf(x, W("s_w1p")) + W("s_b1"))                       # (N, 16)
        h = relu(dotf(h.astype(bf16), W("s_w2")) + W("s_b2"))           # (N, 32)
        h = relu(dotf(h.astype(bf16), W("s_w3")) + W("s_b3"))           # (N, 64)
        g = jnp.max(h, axis=0, keepdims=True)                           # (1, 64)

        # ---- STN fc head (tiny; f32); fc3+identity pre-folded with w1[:3] ----
        h = relu(dotf(g, W("s_fw1")) + W("s_fb1"))                      # (1, 64)
        h = relu(dotf(h, W("s_fw2")) + W("s_fb2"))                      # (1, 32)
        v = dotf(h, W("A")) + W("d")                                    # (1, 3*16)

        # ---- fold the per-item input transform into conv1's weight ----
        w1_eff = jnp.concatenate(
            [v[:, 0:n1], v[:, n1:2 * n1], v[:, 2 * n1:3 * n1],
             W("w1_bot").astype(f32)], axis=0)                          # (C, 16)

        # ---- main point path ----
        h1 = relu(dotf(x, w1_eff.astype(bf16)) + W("b1"))               # (N, 16)
        h2r = dotf(h1.astype(bf16), W("w2_r1x"))       # merged conv2 | reg point part
        h2 = relu(h2r[:, :n2] + W("b2"))                                # (N, 32)
        g32 = jnp.max(h2, axis=0, keepdims=True)                        # (1, 32)
        bias3 = dotf(g32, W("w3g")) + dotf(settings, W("w3s")) + W("b3")
        h3 = relu(dotf(h2.astype(bf16), W("w3x")) + bias3)              # (N, 64)
        g64 = jnp.max(h3, axis=0, keepdims=True)                        # (1, 64)

        # ---- regression head ----
        rb1 = dotf(g64, W("wr1g")) + W("br1")                           # (1, 32)
        r1 = relu(h2r[:, n2:] + rb1)                                    # (N, 32)
        r2 = relu(dotf(r1.astype(bf16), W("wr2")) + W("br2"))           # (N, 16)
        out_ref[0] = dotf(r2.astype(bf16), W("wr3p")) + W("br3p")       # (N, 128)

    return kernel


# ----------------------------------------------------------------------------
# Wrapper: one pallas_call, grid=(B,), lane-dense (N, 128) output block.
# ----------------------------------------------------------------------------
def pointnet_regression_forward(x, settings, p, *, stn_dim=3, hidden_dim=64,
                                output_dim=6):
    # x: (B, n_pts, input_dim) -- the module permutes to NCL internally; we keep
    #    the point-major layout and fold the permute away.
    B, N, C = x.shape
    S = settings.shape[1]
    H = hidden_dim

    slab, layout = build_slab(p, input_dim=C, hidden_dim=H,
                              output_dim=output_dim, stn_dim=stn_dim)
    x_in = x.astype(jnp.bfloat16)
    set_in = settings.astype(jnp.float32).reshape(B, 1, S)
    kernel = _make_kernel(layout, H)

    per_point_macs = (C * (H // 4) + (H // 4) * (H // 2) + (H // 2) * H   # STN convs
                      + C * (H // 4) + (H // 4) * H + (H // 2) * H        # conv1..3
                      + (H // 2) * (H // 4) + (H // 4) * LANES)           # reg head
    cost = pl.CostEstimate(
        flops=2 * B * N * per_point_macs,
        transcendentals=0,
        bytes_accessed=(x_in.size * 2 + slab.size * 2 + set_in.size * 4
                        + B * N * LANES * 4))

    out_full = pl.pallas_call(
        kernel,
        out_shape=jax.ShapeDtypeStruct((B, N, LANES), jnp.float32),
        grid_spec=pltpu.PrefetchScalarGridSpec(
            num_scalar_prefetch=0,
            grid=(B,),
            in_specs=[
                pl.BlockSpec((1, N, C), lambda b: (b, 0, 0)),
                pl.BlockSpec((1, 1, S), lambda b: (b, 0, 0)),
                pl.BlockSpec(slab.shape, lambda b: (0, 0)),   # constant -> DMA'd once
            ],
            out_specs=pl.BlockSpec((1, N, LANES), lambda b: (b, 0, 0)),
        ),
        compiler_params=pltpu.CompilerParams(
            dimension_semantics=("parallel",)),
        cost_estimate=cost,
    )(x_in, set_in, slab)
    return out_full[:, :, :output_dim]                                  # (B, N, out)


# ----------------------------------------------------------------------------
# Pure-JAX f32 reference (same folded params, PyTorch op ordering).
# ----------------------------------------------------------------------------
def ref_forward(x, settings, p, *, stn_dim=3):
    relu = jax.nn.relu
    B, N, C = x.shape
    H = p["w3"].shape[1]
    x_sp = x[:, :, :stn_dim]
    # STN
    h = relu(x_sp @ p["s_w1"] + p["s_b1"])
    h = relu(h @ p["s_w2"] + p["s_b2"])
    h = relu(h @ p["s_w3"] + p["s_b3"])
    g = h.max(axis=1)
    h = relu(g @ p["s_fw1"] + p["s_fb1"])
    h = relu(h @ p["s_fw2"] + p["s_fb2"])
    t = (h @ p["s_fw3"] + p["s_fb3"]
         + jnp.eye(stn_dim, dtype=jnp.float32).reshape(1, -1))
    trans = t.reshape(B, stn_dim, stn_dim)
    # PointNetfeat (global_feat=False)
    x_t = jnp.concatenate([jnp.einsum("bnk,bkj->bnj", x_sp, trans),
                           x[:, :, stn_dim:]], axis=-1)
    h1 = relu(x_t @ p["w1"] + p["b1"])                    # pointfeat (B,N,16)
    h2 = relu(h1 @ p["w2"] + p["b2"])                     # (B,N,32)
    g32 = h2.max(axis=1)                                  # (B,32)
    glob = jnp.concatenate([g32, settings], axis=1)       # (B,38)
    cat3 = jnp.concatenate(
        [h2, jnp.broadcast_to(glob[:, None, :], (B, N, glob.shape[1]))], axis=-1)
    h3 = relu(cat3 @ p["w3"] + p["b3"])                   # (B,N,64)
    g64 = h3.max(axis=1)                                  # (B,64)
    feat = jnp.concatenate(
        [jnp.broadcast_to(g64[:, None, :], (B, N, H)), h1], axis=-1)  # (B,N,80)
    # Regression head
    r = relu(feat @ p["r_w1"] + p["r_b1"])
    r = relu(r @ p["r_w2"] + p["r_b2"])
    return r @ p["r_w3"] + p["r_b3"]                      # (B,N,out_dim)


if __name__ == "__main__":
    B, N_PTS = 2, 256
    INPUT_DIM, SETTINGS_DIM, OUTPUT_DIM, HIDDEN, STN_DIM = 6, 6, 6, 64, 3

    key = jax.random.PRNGKey(0)
    kx, ks, kp = jax.random.split(key, 3)
    x = jax.random.normal(kx, (B, N_PTS, INPUT_DIM), jnp.float32)
    settings = jax.random.normal(ks, (B, SETTINGS_DIM), jnp.float32)
    params = init_params(kp, INPUT_DIM, SETTINGS_DIM, HIDDEN, OUTPUT_DIM, STN_DIM)

    fwd = jax.jit(lambda xx, ss: pointnet_regression_forward(
        xx, ss, params, stn_dim=STN_DIM, hidden_dim=HIDDEN,
        output_dim=OUTPUT_DIM))
    out = fwd(x, settings)
    jax.block_until_ready(out)

    assert out.shape == (B, N_PTS, OUTPUT_DIM)

    ref = ref_forward(x, settings, params, stn_dim=STN_DIM)
    np.testing.assert_allclose(np.asarray(out), np.asarray(ref),
                               rtol=5e-2, atol=5e-2)
    print("KERNEL_OK")
</pallas_src>

<mosaic_0001>
module attributes {stable_mosaic.version = 11 : i64} {
  func.func @kernel(%arg0: i32, %arg1: memref<1x256x6xbf16, #tpu.memory_space<vmem>>, %arg2: memref<1x1x6xf32, #tpu.memory_space<vmem>>, %arg3: memref<520x128xbf16, #tpu.memory_space<vmem>>, %arg4: memref<1x256x128xf32, #tpu.memory_space<vmem>>) attributes {dimension_semantics = [#tpu.dimension_semantics<parallel>], iteration_bounds = array<i64: 2>, scalar_prefetch = 0 : i64, scratch_operands = 0 : i64, tpu.core_type = #tpu.core_type<tc>, window_params = [{transform_indices = @transform_0, window_bounds = array<i64: 1, 256, 6>}, {transform_indices = @transform_1, window_bounds = array<i64: 1, 1, 6>}, {pipeline_mode = #tpu.pipeline_mode<synchronous>, transform_indices = @transform_2, window_bounds = array<i64: 520, 128>}, {transform_indices = @transform_3, window_bounds = array<i64: 1, 256, 128>}]} {
    %c0 = arith.constant 0 : index
    %c0_0 = arith.constant 0 : index
    %c0_1 = arith.constant 0 : index
    %0 = vector.load %arg1[%c0, %c0_0, %c0_1] : memref<1x256x6xbf16, #tpu.memory_space<vmem>>, vector<1x256x6xbf16>
    %1 = vector.shape_cast %0 : vector<1x256x6xbf16> to vector<256x6xbf16>
    %c0_2 = arith.constant 0 : index
    %c0_3 = arith.constant 0 : index
    %c0_4 = arith.constant 0 : index
    %2 = vector.load %arg2[%c0_2, %c0_3, %c0_4] : memref<1x1x6xf32, #tpu.memory_space<vmem>>, vector<1x1x6xf32>
    %3 = vector.shape_cast %2 : vector<1x1x6xf32> to vector<1x6xf32>
    %c0_5 = arith.constant 0 : index
    %c0_6 = arith.constant 0 : index
    %4 = vector.load %arg3[%c0_5, %c0_6] : memref<520x128xbf16, #tpu.memory_space<vmem>>, vector<6x16xbf16>
    %cst = arith.constant dense<0.000000e+00> : vector<256x16xf32>
    %5 = tpu.matmul %1, %4, %cst {dimension_numbers = #tpu.dot_dimension_numbers<[1], [0], [0], [1], [0, 0, 1, 1], [], []>} : vector<256x6xbf16>, vector<6x16xbf16>, vector<256x16xf32> -> vector<256x16xf32>
    %c8 = arith.constant 8 : index
    %c0_7 = arith.constant 0 : index
    %6 = vector.load %arg3[%c8, %c0_7] : memref<520x128xbf16, #tpu.memory_space<vmem>>, vector<1x16xbf16>
    %7 = arith.extf %6 : vector<1x16xbf16> to vector<1x16xf32>
    %8 = vector.broadcast %7 : vector<1x16xf32> to vector<256x16xf32>
    %9 = arith.addf %5, %8 : vector<256x16xf32>
    %cst_8 = arith.constant 0.000000e+00 : f32
    %10 = vector.broadcast %cst_8 : f32 to vector<256x16xf32>
    %11 = arith.maximumf %9, %10 : vector<256x16xf32>
    %12 = arith.truncf %11 : vector<256x16xf32> to vector<256x16xbf16>
    %c16 = arith.constant 16 : index
    %c0_9 = arith.constant 0 : index
    %13 = vector.load %arg3[%c16, %c0_9] : memref<520x128xbf16, #tpu.memory_space<vmem>>, vector<16x32xbf16>
    %cst_10 = arith.constant dense<0.000000e+00> : vector<256x32xf32>
    %14 = tpu.matmul %12, %13, %cst_10 {dimension_numbers = #tpu.dot_dimension_numbers<[1], [0], [0], [1], [0, 0, 1, 1], [], []>} : vector<256x16xbf16>, vector<16x32xbf16>, vector<256x32xf32> -> vector<256x32xf32>
    %c32 = arith.constant 32 : index
    %c0_11 = arith.constant 0 : index
    %15 = vector.load %arg3[%c32, %c0_11] : memref<520x128xbf16, #tpu.memory_space<vmem>>, vector<1x32xbf16>
    %16 = arith.extf %15 : vector<1x32xbf16> to vector<1x32xf32>
    %17 = vector.broadcast %16 : vector<1x32xf32> to vector<256x32xf32>
    %18 = arith.addf %14, %17 : vector<256x32xf32>
    %cst_12 = arith.constant 0.000000e+00 : f32
    %19 = vector.broadcast %cst_12 : f32 to vector<256x32xf32>
    %20 = arith.maximumf %18, %19 : vector<256x32xf32>
    %21 = arith.truncf %20 : vector<256x32xf32> to vector<256x32xbf16>
    %c40 = arith.constant 40 : index
    %c0_13 = arith.constant 0 : index
    %22 = vector.load %arg3[%c40, %c0_13] : memref<520x128xbf16, #tpu.memory_space<vmem>>, vector<32x64xbf16>
    %cst_14 = arith.constant dense<0.000000e+00> : vector<256x64xf32>
    %23 = tpu.matmul %21, %22, %cst_14 {dimension_numbers = #tpu.dot_dimension_numbers<[1], [0], [0], [1], [0, 0, 1, 1], [], []>} : vector<256x32xbf16>, vector<32x64xbf16>, vector<256x64xf32> -> vector<256x64xf32>
    %c72 = arith.constant 72 : index
    %c0_15 = arith.constant 0 : index
    %24 = vector.load %arg3[%c72, %c0_15] : memref<520x128xbf16, #tpu.memory_space<vmem>>, vector<1x64xbf16>
    %25 = arith.extf %24 : vector<1x64xbf16> to vector<1x64xf32>
    %26 = vector.broadcast %25 : vector<1x64xf32> to vector<256x64xf32>
    %27 = arith.addf %23, %26 : vector<256x64xf32>
    %cst_16 = arith.constant 0.000000e+00 : f32
    %28 = vector.broadcast %cst_16 : f32 to vector<256x64xf32>
    %29 = arith.maximumf %27, %28 : vector<256x64xf32>
    %cst_17 = arith.constant dense<0xFF800000> : vector<64xf32>
    %30 = vector.multi_reduction <maximumf>, %29, %cst_17 [0] : vector<256x64xf32> to vector<64xf32>
    %31 = vector.shape_cast %30 : vector<64xf32> to vector<1x64xf32>
    %c80 = arith.constant 80 : index
    %c0_18 = arith.constant 0 : index
    %32 = vector.load %arg3[%c80, %c0_18] : memref<520x128xbf16, #tpu.memory_space<vmem>>, vector<64x64xbf16>
    %cst_19 = arith.constant dense<0.000000e+00> : vector<1x64xf32>
    %33 = tpu.matmul %31, %32, %cst_19 {dimension_numbers = #tpu.dot_dimension_numbers<[1], [0], [0], [1], [0, 0, 1, 1], [], []>} : vector<1x64xf32>, vector<64x64xbf16>, vector<1x64xf32> -> vector<1x64xf32>
    %c144 = arith.constant 144 : index
    %c0_20 = arith.constant 0 : index
    %34 = vector.load %arg3[%c144, %c0_20] : memref<520x128xbf16, #tpu.memory_space<vmem>>, vector<1x64xbf16>
    %35 = arith.extf %34 : vector<1x64xbf16> to vector<1x64xf32>
    %36 = arith.addf %33, %35 : vector<1x64xf32>
    %cst_21 = arith.constant 0.000000e+00 : f32
    %37 = vector.broadcast %cst_21 : f32 to vector<1x64xf32>
    %38 = arith.maximumf %36, %37 : vector<1x64xf32>
    %c152 = arith.constant 152 : index
    %c0_22 = arith.constant 0 : index
    %39 = vector.load %arg3[%c152, %c0_22] : memref<520x128xbf16, #tpu.memory_space<vmem>>, vector<64x32xbf16>
    %cst_23 = arith.constant dense<0.000000e+00> : vector<1x32xf32>
    %40 = tpu.matmul %38, %39, %cst_23 {dimension_numbers = #tpu.dot_dimension_numbers<[1], [0], [0], [1], [0, 0, 1, 1], [], []>} : vector<1x64xf32>, vector<64x32xbf16>, vector<1x32xf32> -> vector<1x32xf32>
    %c216 = arith.constant 216 : index
    %c0_24 = arith.constant 0 : index
    %41 = vector.load %arg3[%c216, %c0_24] : memref<520x128xbf16, #tpu.memory_space<vmem>>, vector<1x32xbf16>
    %42 = arith.extf %41 : vector<1x32xbf16> to vector<1x32xf32>
    %43 = arith.addf %40, %42 : vector<1x32xf32>
    %cst_25 = arith.constant 0.000000e+00 : f32
    %44 = vector.broadcast %cst_25 : f32 to vector<1x32xf32>
    %45 = arith.maximumf %43, %44 : vector<1x32xf32>
    %c224 = arith.constant 224 : index
    %c0_26 = arith.constant 0 : index
    %46 = vector.load %arg3[%c224, %c0_26] : memref<520x128xbf16, #tpu.memory_space<vmem>>, vector<32x48xbf16>
    %cst_27 = arith.constant dense<0.000000e+00> : vector<1x48xf32>
    %47 = tpu.matmul %45, %46, %cst_27 {dimension_numbers = #tpu.dot_dimension_numbers<[1], [0], [0], [1], [0, 0, 1, 1], [], []>} : vector<1x32xf32>, vector<32x48xbf16>, vector<1x48xf32> -> vector<1x48xf32>
    %c256 = arith.constant 256 : index
    %c0_28 = arith.constant 0 : index
    %48 = vector.load %arg3[%c256, %c0_28] : memref<520x128xbf16, #tpu.memory_space<vmem>>, vector<1x48xbf16>
    %49 = arith.extf %48 : vector<1x48xbf16> to vector<1x48xf32>
    %50 = arith.addf %47, %49 : vector<1x48xf32>
    %51 = vector.extract_strided_slice %50 {offsets = [0, 0], sizes = [1, 16], strides = [1, 1]} : vector<1x48xf32> to vector<1x16xf32>
    %52 = vector.extract_strided_slice %50 {offsets = [0, 16], sizes = [1, 16], strides = [1, 1]} : vector<1x48xf32> to vector<1x16xf32>
    %53 = vector.extract_strided_slice %50 {offsets = [0, 32], sizes = [1, 16], strides = [1, 1]} : vector<1x48xf32> to vector<1x16xf32>
    %c264 = arith.constant 264 : index
    %c0_29 = arith.constant 0 : index
    %54 = vector.load %arg3[%c264, %c0_29] : memref<520x128xbf16, #tpu.memory_space<vmem>>, vector<3x16xbf16>
    %55 = arith.extf %54 : vector<3x16xbf16> to vector<3x16xf32>
    %56 = tpu.concatenate %51, %52, %53, %55 in 0 : vector<1x16xf32>, vector<1x16xf32>, vector<1x16xf32>, vector<3x16xf32> -> vector<6x16xf32>
    %57 = arith.truncf %56 : vector<6x16xf32> to vector<6x16xbf16>
    %cst_30 = arith.constant dense<0.000000e+00> : vector<256x16xf32>
    %58 = tpu.matmul %1, %57, %cst_30 {dimension_numbers = #tpu.dot_dimension_numbers<[1], [0], [0], [1], [0, 0, 1, 1], [], []>} : vector<256x6xbf16>, vector<6x16xbf16>, vector<256x16xf32> -> vector<256x16xf32>
    %c272 = arith.constant 272 : index
    %c0_31 = arith.constant 0 : index
    %59 = vector.load %arg3[%c272, %c0_31] : memref<520x128xbf16, #tpu.memory_space<vmem>>, vector<1x16xbf16>
    %60 = arith.extf %59 : vector<1x16xbf16> to vector<1x16xf32>
    %61 = vector.broadcast %60 : vector<1x16xf32> to vector<256x16xf32>
    %62 = arith.addf %58, %61 : vector<256x16xf32>
    %cst_32 = arith.constant 0.000000e+00 : f32
    %63 = vector.broadcast %cst_32 : f32 to vector<256x16xf32>
    %64 = arith.maximumf %62, %63 : vector<256x16xf32>
    %65 = arith.truncf %64 : vector<256x16xf32> to vector<256x16xbf16>
    %c280 = arith.constant 280 : index
    %c0_33 = arith.constant 0 : index
    %66 = vector.load %arg3[%c280, %c0_33] : memref<520x128xbf16, #tpu.memory_space<vmem>>, vector<16x64xbf16>
    %cst_34 = arith.constant dense<0.000000e+00> : vector<256x64xf32>
    %67 = tpu.matmul %65, %66, %cst_34 {dimension_numbers = #tpu.dot_dimension_numbers<[1], [0], [0], [1], [0, 0, 1, 1], [], []>} : vector<256x16xbf16>, vector<16x64xbf16>, vector<256x64xf32> -> vector<256x64xf32>
    %68 = vector.extract_strided_slice %67 {offsets = [0, 0], sizes = [256, 32], strides = [1, 1]} : vector<256x64xf32> to vector<256x32xf32>
    %c296 = arith.constant 296 : index
    %c0_35 = arith.constant 0 : index
    %69 = vector.load %arg3[%c296, %c0_35] : memref<520x128xbf16, #tpu.memory_space<vmem>>, vector<1x32xbf16>
    %70 = arith.extf %69 : vector<1x32xbf16> to vector<1x32xf32>
    %71 = vector.broadcast %70 : vector<1x32xf32> to vector<256x32xf32>
    %72 = arith.addf %68, %71 : vector<256x32xf32>
    %cst_36 = arith.constant 0.000000e+00 : f32
    %73 = vector.broadcast %cst_36 : f32 to vector<256x32xf32>
    %74 = arith.maximumf %72, %73 : vector<256x32xf32>
    %cst_37 = arith.constant dense<0xFF800000> : vector<32xf32>
    %75 = vector.multi_reduction <maximumf>, %74, %cst_37 [0] : vector<256x32xf32> to vector<32xf32>
    %76 = vector.shape_cast %75 : vector<32xf32> to vector<1x32xf32>
    %c336 = arith.constant 336 : index
    %c0_38 = arith.constant 0 : index
    %77 = vector.load %arg3[%c336, %c0_38] : memref<520x128xbf16, #tpu.memory_space<vmem>>, vector<32x64xbf16>
    %cst_39 = arith.constant dense<0.000000e+00> : vector<1x64xf32>
    %78 = tpu.matmul %76, %77, %cst_39 {dimension_numbers = #tpu.dot_dimension_numbers<[1], [0], [0], [1], [0, 0, 1, 1], [], []>} : vector<1x32xf32>, vector<32x64xbf16>, vector<1x64xf32> -> vector<1x64xf32>
    %c368 = arith.constant 368 : index
    %c0_40 = arith.constant 0 : index
    %79 = vector.load %arg3[%c368, %c0_40] : memref<520x128xbf16, #tpu.memory_space<vmem>>, vector<6x64xbf16>
    %cst_41 = arith.constant dense<0.000000e+00> : vector<1x64xf32>
    %80 = tpu.matmul %3, %79, %cst_41 {dimension_numbers = #tpu.dot_dimension_numbers<[1], [0], [0], [1], [0, 0, 1, 1], [], []>} : vector<1x6xf32>, vector<6x64xbf16>, vector<1x64xf32> -> vector<1x64xf32>
    %81 = arith.addf %78, %80 : vector<1x64xf32>
    %c376 = arith.constant 376 : index
    %c0_42 = arith.constant 0 : index
    %82 = vector.load %arg3[%c376, %c0_42] : memref<520x128xbf16, #tpu.memory_space<vmem>>, vector<1x64xbf16>
    %83 = arith.extf %82 : vector<1x64xbf16> to vector<1x64xf32>
    %84 = arith.addf %81, %83 : vector<1x64xf32>
    %85 = arith.truncf %74 : vector<256x32xf32> to vector<256x32xbf16>
    %c304 = arith.constant 304 : index
    %c0_43 = arith.constant 0 : index
    %86 = vector.load %arg3[%c304, %c0_43] : memref<520x128xbf16, #tpu.memory_space<vmem>>, vector<32x64xbf16>
    %cst_44 = arith.constant dense<0.000000e+00> : vector<256x64xf32>
    %87 = tpu.matmul %85, %86, %cst_44 {dimension_numbers = #tpu.dot_dimension_numbers<[1], [0], [0], [1], [0, 0, 1, 1], [], []>} : vector<256x32xbf16>, vector<32x64xbf16>, vector<256x64xf32> -> vector<256x64xf32>
    %88 = vector.broadcast %84 : vector<1x64xf32> to vector<256x64xf32>
    %89 = arith.addf %87, %88 : vector<256x64xf32>
    %cst_45 = arith.constant 0.000000e+00 : f32
    %90 = vector.broadcast %cst_45 : f32 to vector<256x64xf32>
    %91 = arith.maximumf %89, %90 : vector<256x64xf32>
    %cst_46 = arith.constant dense<0xFF800000> : vector<64xf32>
    %92 = vector.multi_reduction <maximumf>, %91, %cst_46 [0] : vector<256x64xf32> to vector<64xf32>
    %93 = vector.shape_cast %92 : vector<64xf32> to vector<1x64xf32>
    %c384 = arith.constant 384 : index
    %c0_47 = arith.constant 0 : index
    %94 = vector.load %arg3[%c384, %c0_47] : memref<520x128xbf16, #tpu.memory_space<vmem>>, vector<64x32xbf16>
    %cst_48 = arith.constant dense<0.000000e+00> : vector<1x32xf32>
    %95 = tpu.matmul %93, %94, %cst_48 {dimension_numbers = #tpu.dot_dimension_numbers<[1], [0], [0], [1], [0, 0, 1, 1], [], []>} : vector<1x64xf32>, vector<64x32xbf16>, vector<1x32xf32> -> vector<1x32xf32>
    %c448 = arith.constant 448 : index
    %c0_49 = arith.constant 0 : index
    %96 = vector.load %arg3[%c448, %c0_49] : memref<520x128xbf16, #tpu.memory_space<vmem>>, vector<1x32xbf16>
    %97 = arith.extf %96 : vector<1x32xbf16> to vector<1x32xf32>
    %98 = arith.addf %95, %97 : vector<1x32xf32>
    %99 = vector.extract_strided_slice %67 {offsets = [0, 32], sizes = [256, 32], strides = [1, 1]} : vector<256x64xf32> to vector<256x32xf32>
    %100 = vector.broadcast %98 : vector<1x32xf32> to vector<256x32xf32>
    %101 = arith.addf %99, %100 : vector<256x32xf32>
    %cst_50 = arith.constant 0.000000e+00 : f32
    %102 = vector.broadcast %cst_50 : f32 to vector<256x32xf32>
    %103 = arith.maximumf %101, %102 : vector<256x32xf32>
    %104 = arith.truncf %103 : vector<256x32xf32> to vector<256x32xbf16>
    %c456 = arith.constant 456 : index
    %c0_51 = arith.constant 0 : index
    %105 = vector.load %arg3[%c456, %c0_51] : memref<520x128xbf16, #tpu.memory_space<vmem>>, vector<32x16xbf16>
    %cst_52 = arith.constant dense<0.000000e+00> : vector<256x16xf32>
    %106 = tpu.matmul %104, %105, %cst_52 {dimension_numbers = #tpu.dot_dimension_numbers<[1], [0], [0], [1], [0, 0, 1, 1], [], []>} : vector<256x32xbf16>, vector<32x16xbf16>, vector<256x16xf32> -> vector<256x16xf32>
    %c488 = arith.constant 488 : index
    %c0_53 = arith.constant 0 : index
    %107 = vector.load %arg3[%c488, %c0_53] : memref<520x128xbf16, #tpu.memory_space<vmem>>, vector<1x16xbf16>
    %108 = arith.extf %107 : vector<1x16xbf16> to vector<1x16xf32>
    %109 = vector.broadcast %108 : vector<1x16xf32> to vector<256x16xf32>
    %110 = arith.addf %106, %109 : vector<256x16xf32>
    %cst_54 = arith.constant 0.000000e+00 : f32
    %111 = vector.broadcast %cst_54 : f32 to vector<256x16xf32>
    %112 = arith.maximumf %110, %111 : vector<256x16xf32>
    %113 = arith.truncf %112 : vector<256x16xf32> to vector<256x16xbf16>
    %c496 = arith.constant 496 : index
    %c0_55 = arith.constant 0 : index
    %114 = vector.load %arg3[%c496, %c0_55] : memref<520x128xbf16, #tpu.memory_space<vmem>>, vector<16x128xbf16>
    %cst_56 = arith.constant dense<0.000000e+00> : vector<256x128xf32>
    %115 = tpu.matmul %113, %114, %cst_56 {dimension_numbers = #tpu.dot_dimension_numbers<[1], [0], [0], [1], [0, 0, 1, 1], [], []>} : vector<256x16xbf16>, vector<16x128xbf16>, vector<256x128xf32> -> vector<256x128xf32>
    %c512 = arith.constant 512 : index
    %c0_57 = arith.constant 0 : index
    %116 = vector.load %arg3[%c512, %c0_57] : memref<520x128xbf16, #tpu.memory_space<vmem>>, vector<1x128xbf16>
    %117 = arith.extf %116 : vector<1x128xbf16> to vector<1x128xf32>
    %118 = vector.broadcast %117 : vector<1x128xf32> to vector<256x128xf32>
    %119 = arith.addf %115, %118 : vector<256x128xf32>
    %c0_58 = arith.constant 0 : index
    %c0_59 = arith.constant 0 : index
    %c0_60 = arith.constant 0 : index
    %120 = vector.load %arg4[%c0_58, %c0_59, %c0_60] : memref<1x256x128xf32, #tpu.memory_space<vmem>>, vector<1x256x128xf32>
    %121 = vector.shape_cast %120 : vector<1x256x128xf32> to vector<256x128xf32>
    %122 = vector.shape_cast %119 : vector<256x128xf32> to vector<1x256x128xf32>
    tpu.vector_store %arg4[%c0_58, %c0_59, %c0_60], %122 {strides = array<i32>} : memref<1x256x128xf32, #tpu.memory_space<vmem>>, vector<1x256x128xf32>,
    return
  }
  func.func @transform_0(%arg0: i32) -> (i32, i32, i32) {
    %c0_i32 = arith.constant 0 : i32
    %c0_i32_0 = arith.constant 0 : i32
    %c0_i32_1 = arith.constant 0 : i32
    return %arg0, %c0_i32, %c0_i32_0 : i32, i32, i32
  }
  func.func @transform_1(%arg0: i32) -> (i32, i32, i32) {
    %c0_i32 = arith.constant 0 : i32
    %c0_i32_0 = arith.constant 0 : i32
    %c0_i32_1 = arith.constant 0 : i32
    return %arg0, %c0_i32, %c0_i32_0 : i32, i32, i32
  }
  func.func @transform_2(%arg0: i32) -> (i32, i32) {
    %c0_i32 = arith.constant 0 : i32
    %c0_i32_0 = arith.constant 0 : i32
    %c0_i32_1 = arith.constant 0 : i32
    return %c0_i32, %c0_i32_0 : i32, i32
  }
  func.func @transform_3(%arg0: i32) -> (i32, i32, i32) {
    %c0_i32 = arith.constant 0 : i32
    %c0_i32_0 = arith.constant 0 : i32
    %c0_i32_1 = arith.constant 0 : i32
    return %arg0, %c0_i32, %c0_i32_0 : i32, i32, i32
  }
}

</mosaic_0001>

<llo_original>
// kernel: _lambda_.1
$region0: #{_lambda_.1}
  #allocation0 [shape = 'u32[]', space=smem, size = 0x4, offset = 0x4, fixed_abs, tag = 'smem constant byte address 0x4 - core index']
  #allocation1 [shape = 'u32[144,128]{1,0:T(1,128)}', space=vmem, size = 0x12000, scoped, tag = 'internal scratch']
  %s0 = inlined_call_operand.vmem [shape: bf16[2,256,6], index: 0, kind: input, shape index: {}]
  %s1 = inlined_call_operand.vmem [shape: f32[2,1,6], index: 1, kind: input, shape index: {}]
  %s2 = inlined_call_operand.vmem [shape: bf16[520,128], index: 2, kind: input, shape index: {}]
  %s3 = inlined_call_operand.vmem [shape: f32[2,256,128], index: 3, kind: output, shape index: {}]
  %s4 = sld [smem:[#allocation0]]
  $region45: #{_lambda_.1} parent=0
    _
  %s6 = ssub.s32 1, %s4
  %s7 = scalar_select 0, %s6, %s4
  loop: start=0, step=1, limit=4
  $region2: #{_lambda_.1} parent=0 // loop_pre_header
    _
  $region3: #{_lambda_.1} parent=0 // loop_header
    %s9 = sphi 0, %s13
    %p10 = scmp.ge.s32.totalorder %s9, 4
    %s19 = sphi 0, %s21
    %s22 = sphi 0, %s19
    %s23 = sphi 0, %s22
    %s39 = sphi 0, %s23
    %s45 = sphi 0, %s47
    %s48 = sphi 0, %s45
    %s49 = sphi 0, %s48
    %s65 = sphi 0, %s49
    %s69 = sphi 0, %s69
    %s71 = sphi 0, %s69
    %s72 = sphi 0, %s71
    %s86 = sphi 0, %s72
    %s92 = sphi 0, %s94
    %s95 = sphi 0, %s92
    %s96 = sphi 0, %s95
    %s112 = sphi 0, %s96
  $region4: #{_lambda_.1} parent=0 // loop_header_branch
    %12 = sbr.rel (%p10) target = $region8
  $region5: #{_lambda_.1} parent=0 // loop_body
    %s14 = ssub.s32 %s9, 1
    %s15 = ssub.s32 %s9, 2
    %s16 = sadd.s32 %s9, 1
    %s17 = ssub.s32 %s9, %s16
    %p18 = scmp.eq.s32.totalorder %s17, 0
    %s20 = sadd.s32 %s19, 1
    %s21 = scalar_select %p18, %s19, %s20
    %p24 = pneg %p18
    %p25 = scmp.eq.s32.totalorder %s9, 1
    %p26 = por %p24, %p25
    %p27 = scmp.ne.s32.totalorder %s19, %s22
    %p28 = scmp.eq.s32.totalorder %s9, 0
    %p29 = por %p27, %p28
    %p30 = scmp.ne.s32.totalorder %s19, %s22
    %p31 = scmp.eq.s32.totalorder %s14, 1
    %p32 = por %p30, %p31
    %p33 = scmp.ne.s32.totalorder %s22, %s23
    %p34 = scmp.eq.s32.totalorder %s14, 0
    %p35 = por %p33, %p34
    %p36 = scmp.ne.s32.totalorder %s22, %s23
    %p37 = scmp.eq.s32.totalorder %s15, 1
    %p38 = por %p36, %p37
    %p40 = scmp.ne.s32.totalorder %s23, %s39
    %p41 = scmp.eq.s32.totalorder %s15, 0
    %p42 = por %p40, %p41
    %s43 = ssub.s32 %s9, %s16
    %p44 = scmp.eq.s32.totalorder %s43, 0
    %s46 = sadd.s32 %s45, 1
    %s47 = scalar_select %p44, %s45, %s46
    %p50 = pneg %p44
    %p51 = scmp.eq.s32.totalorder %s9, 1
    %p52 = por %p50, %p51
    %p53 = scmp.ne.s32.totalorder %s45, %s48
    %p54 = scmp.eq.s32.totalorder %s9, 0
    %p55 = por %p53, %p54
    %p56 = scmp.ne.s32.totalorder %s45, %s48
    %p57 = scmp.eq.s32.totalorder %s14, 1
    %p58 = por %p56, %p57
    %p59 = scmp.ne.s32.totalorder %s48, %s49
    %p60 = scmp.eq.s32.totalorder %s14, 0
    %p61 = por %p59, %p60
    %p62 = scmp.ne.s32.totalorder %s48, %s49
    %p63 = scmp.eq.s32.totalorder %s15, 1
    %p64 = por %p62, %p63
    %p66 = scmp.ne.s32.totalorder %s49, %s65
    %p67 = scmp.eq.s32.totalorder %s15, 0
    %p68 = por %p66, %p67
    %s70 = sadd.s32 %s69, 1
    %p73 = scmp.eq.s32.totalorder %s9, 1
    %p74 = scmp.ne.s32.totalorder %s69, %s71
    %p75 = scmp.eq.s32.totalorder %s9, 0
    %p76 = por %p74, %p75
    %p77 = scmp.ne.s32.totalorder %s69, %s71
    %p78 = scmp.eq.s32.totalorder %s14, 1
    %p79 = por %p77, %p78
    %p80 = scmp.ne.s32.totalorder %s71, %s72
    %p81 = scmp.eq.s32.totalorder %s14, 0
    %p82 = por %p80, %p81
    %p83 = scmp.ne.s32.totalorder %s71, %s72
    %p84 = scmp.eq.s32.totalorder %s15, 1
    %p85 = por %p83, %p84
    %p87 = scmp.ne.s32.totalorder %s72, %s86
    %p88 = scmp.eq.s32.totalorder %s15, 0
    %p89 = por %p87, %p88
    %s90 = ssub.s32 %s9, %s16
    %p91 = scmp.eq.s32.totalorder %s90, 0
    %s93 = sadd.s32 %s92, 1
    %s94 = scalar_select %p91, %s92, %s93
    %p97 = pneg %p91
    %p98 = scmp.eq.s32.totalorder %s9, 1
    %p99 = por %p97, %p98
    %p100 = scmp.ne.s32.totalorder %s92, %s95
    %p101 = scmp.eq.s32.totalorder %s9, 0
    %p102 = por %p100, %p101
    %p103 = scmp.ne.s32.totalorder %s92, %s95
    %p104 = scmp.eq.s32.totalorder %s14, 1
    %p105 = por %p103, %p104
    %p106 = scmp.ne.s32.totalorder %s95, %s96
    %p107 = scmp.eq.s32.totalorder %s14, 0
    %p108 = por %p106, %p107
    %p109 = scmp.ne.s32.totalorder %s95, %s96
    %p110 = scmp.eq.s32.totalorder %s15, 1
    %p111 = por %p109, %p110
    %p113 = scmp.ne.s32.totalorder %s96, %s112
    %p114 = scmp.eq.s32.totalorder %s15, 0
    %p115 = por %p113, %p114
    %p116 = scmp.le.s32.totalorder 1, %s9
    %p117 = scmp.lt.s32.totalorder %s9, 3
    %p118 = pnand %p116, %p117
    %p119 = pneg %p118
    // Predicated region
    $region9: #{_lambda_.1} parent=5 // pred_check
      _
    $region10: #{_lambda_.1} parent=5 // pred_check_branch
      %121 = sbr.rel (%p118) target = $region12
    $region11: #{_lambda_.1} parent=5 // pred_region
      %s122 = ssub.s32 %s9, 1
      // Predicated region
      $region13: #{_lambda_.1} parent=11 // pred_check
        %p123 = pneg %p82
      $region14: #{_lambda_.1} parent=11 // pred_check_branch
        %125 = sbr.rel (%p123) target = $region16
      $region15: #{_lambda_.1} parent=11 // pred_region
        _
      $region16: #{_lambda_.1} parent=11 // pred_fallthru
        _
    $region12: #{_lambda_.1} parent=5 // pred_fallthru
      _
    %p126 = scmp.lt.s32.totalorder %s9, 2
    // Predicated region
    $region17: #{_lambda_.1} parent=5 // pred_check
      %p127 = pneg %p126
    $region18: #{_lambda_.1} parent=5 // pred_check_branch
      %129 = sbr.rel (%p127) target = $region20
    $region19: #{_lambda_.1} parent=5 // pred_region
      // Predicated region
      $region21: #{_lambda_.1} parent=19 // pred_check
        %p130 = pneg %p29
      $region22: #{_lambda_.1} parent=19 // pred_check_branch
        %132 = sbr.rel (%p130) target = $region24
      $region23: #{_lambda_.1} parent=19 // pred_region
        %p133 = scmp.lt.s32.totalorder %s9, 1
        %s134 = scalar_select %p133, %s9, 1
        %s135 = smul.addr %s134, 32
        %s136 = smul.addr %s135, 4
        %s137 = scalar_lea.vmem %s0, %s136
      $region24: #{_lambda_.1} parent=19 // pred_fallthru
        _
      // Predicated region
      $region25: #{_lambda_.1} parent=19 // pred_check
        %p138 = pneg %p55
      $region26: #{_lambda_.1} parent=19 // pred_check_branch
        %140 = sbr.rel (%p138) target = $region28
      $region27: #{_lambda_.1} parent=19 // pred_region
        %p141 = scmp.lt.s32.totalorder %s9, 1
        %s142 = scalar_select %p141, %s9, 1
        %s143 = scalar_lea.vmem %s1, %s142
      $region28: #{_lambda_.1} parent=19 // pred_fallthru
        _
    $region20: #{_lambda_.1} parent=5 // pred_fallthru
      _
    %p144 = scmp.le.s32.totalorder 1, %s9
    %p145 = scmp.lt.s32.totalorder %s9, 3
    %p146 = pnand %p144, %p145
    %p147 = pneg %p146
    // Predicated region
    $region29: #{_lambda_.1} parent=5 // pred_check
      _
    $region30: #{_lambda_.1} parent=5 // pred_check_branch
      %149 = sbr.rel (%p146) target = $region32
    $region31: #{_lambda_.1} parent=5 // pred_region
      %s150 = ssub.s32 %s9, 1
      %p151 = scmp.lt.s32.totalorder %s14, 1
      %s152 = scalar_select %p151, %s14, 1
      %s153 = smul.addr %s152, 32
      %s154 = smul.addr %s153, 4
      %s155 = scalar_lea.vmem %s0, %s154
      %p156 = pneg %p35
      %p157 = pneg %p32
      %p158 = scmp.lt.s32.totalorder %s14, 1
      %s159 = scalar_select %p158, %s14, 1
      %s160 = scalar_lea.vmem %s1, %s159
      %p161 = pneg %p61
      %p162 = pneg %p58
      %p163 = pneg %p82
      %p164 = pneg %p79
      %p165 = pneg %p108
      %p166 = pneg %p105
      %p167 = scmp.lt.s32.totalorder %s14, 1
      %s168 = scalar_select %p167, %s14, 1
      %s169 = smul.addr %s168, 32
      %s170 = smul.addr %s169, 8
      %s171 = scalar_lea.vmem %s3, %s170
      %p172 = scmp.lt.s32.totalorder %s14, 1
      %s173 = scalar_select %p172, %s14, 1
      %s174 = smul.addr %s173, 32
      %s175 = smul.addr %s174, 4
      %s176 = scalar_lea.vmem %s0, %s175
      %p177 = scmp.lt.s32.totalorder %s14, 1
      %s178 = scalar_select %p177, %s14, 1
      %s179 = scalar_lea.vmem %s1, %s178
      %p180 = scmp.lt.s32.totalorder %s14, 1
      %s181 = scalar_select %p180, %s14, 1
      %s182 = smul.addr %s181, 32
      %s183 = smul.addr %s182, 8
      %s184 = scalar_lea.vmem %s3, %s183
      %v186 = vld [vmem:[%s176] sm:$0xf]
      %v187 = vld [vmem:[%s176 + $0x4] sm:$0xf]
      %v188 = vld [vmem:[%s176 + $0x8] sm:$0xf]
      %v189 = vld [vmem:[%s176 + $0xc] sm:$0xf]
      %v190 = vld [vmem:[%s176 + $0x10] sm:$0xf]
      %v191 = vld [vmem:[%s176 + $0x14] sm:$0xf]
      %v192 = vld [vmem:[%s176 + $0x18] sm:$0xf]
      %v193 = vld [vmem:[%s176 + $0x1c] sm:$0xf]
      %v194 = vld [vmem:[%s176 + $0x20] sm:$0xf]
      %v195 = vld [vmem:[%s176 + $0x24] sm:$0xf]
      %v196 = vld [vmem:[%s176 + $0x28] sm:$0xf]
      %v197 = vld [vmem:[%s176 + $0x2c] sm:$0xf]
      %v198 = vld [vmem:[%s176 + $0x30] sm:$0xf]
      %v199 = vld [vmem:[%s176 + $0x34] sm:$0xf]
      %v200 = vld [vmem:[%s176 + $0x38] sm:$0xf]
      %v201 = vld [vmem:[%s176 + $0x3c] sm:$0xf]
      %v202 = vld [vmem:[%s176 + $0x40] sm:$0xf]
      %v203 = vld [vmem:[%s176 + $0x44] sm:$0xf]
      %v204 = vld [vmem:[%s176 + $0x48] sm:$0xf]
      %v205 = vld [vmem:[%s176 + $0x4c] sm:$0xf]
      %v206 = vld [vmem:[%s176 + $0x50] sm:$0xf]
      %v207 = vld [vmem:[%s176 + $0x54] sm:$0xf]
      %v208 = vld [vmem:[%s176 + $0x58] sm:$0xf]
      %v209 = vld [vmem:[%s176 + $0x5c] sm:$0xf]
      %v210 = vld [vmem:[%s176 + $0x60] sm:$0xf]
      %v211 = vld [vmem:[%s176 + $0x64] sm:$0xf]
      %v212 = vld [vmem:[%s176 + $0x68] sm:$0xf]
      %v213 = vld [vmem:[%s176 + $0x6c] sm:$0xf]
      %v214 = vld [vmem:[%s176 + $0x70] sm:$0xf]
      %v215 = vld [vmem:[%s176 + $0x74] sm:$0xf]
      %v216 = vld [vmem:[%s176 + $0x78] sm:$0xf]
      %v217 = vld [vmem:[%s176 + $0x7c] sm:$0xf]
      %v218 = vld [vmem:[%s179] sm:$0x1]
      %v219 = vld [vmem:[%s2] sm:$0x7]
      %v220 = vld [vmem:[%s2 + $0x4] sm:$0x1]
      %v221 = vunpack.c.l.bf16 %v220
      %v222 = vlaneseq
      %v223 = vshrl.u32 %v222, 7
      %v224 = vsub.s32 0, %v223
      %v225 = vrot.slane %v221, %v224
      %v258 = vunpack.c.l.b16 %v186
      %v259 = vunpack.c.l.b16 %v187
      %v260 = vunpack.c.l.b16 %v188
      %v261 = vunpack.c.l.b16 %v189
      %v262 = vunpack.c.l.b16 %v190
      %v263 = vunpack.c.l.b16 %v191
      %v264 = vunpack.c.l.b16 %v192
      %v265 = vunpack.c.l.b16 %v193
      %v266 = vunpack.c.l.b16 %v194
      %v267 = vunpack.c.l.b16 %v195
      %v268 = vunpack.c.l.b16 %v196
      %v269 = vunpack.c.l.b16 %v197
      %v270 = vunpack.c.l.b16 %v198
      %v271 = vunpack.c.l.b16 %v199
      %v272 = vunpack.c.l.b16 %v200
      %v273 = vunpack.c.l.b16 %v201
      %v274 = vunpack.c.l.b16 %v202
      %v275 = vunpack.c.l.b16 %v203
      %v276 = vunpack.c.l.b16 %v204
      %v277 = vunpack.c.l.b16 %v205
      %v278 = vunpack.c.l.b16 %v206
      %v279 = vunpack.c.l.b16 %v207
      %v280 = vunpack.c.l.b16 %v208
      %v281 = vunpack.c.l.b16 %v209
      %v282 = vunpack.c.l.b16 %v210
      %v283 = vunpack.c.l.b16 %v211
      %v284 = vunpack.c.l.b16 %v212
      %v285 = vunpack.c.l.b16 %v213
      %v286 = vunpack.c.l.b16 %v214
      %v287 = vunpack.c.l.b16 %v215
      %v288 = vunpack.c.l.b16 %v216
      %v289 = vunpack.c.l.b16 %v217
      %v290 = vpack.c.b16 %v259, %v258
      %v291 = vpack.c.b16 %v261, %v260
      %v292 = vpack.c.b16 %v263, %v262
      %v293 = vpack.c.b16 %v265, %v264
      %v294 = vpack.c.b16 %v267, %v266
      %v295 = vpack.c.b16 %v269, %v268
      %v296 = vpack.c.b16 %v271, %v270
      %v297 = vpack.c.b16 %v273, %v272
      %v298 = vpack.c.b16 %v275, %v274
      %v299 = vpack.c.b16 %v277, %v276
      %v300 = vpack.c.b16 %v279, %v278
      %v301 = vpack.c.b16 %v281, %v280
      %v302 = vpack.c.b16 %v283, %v282
      %v303 = vpack.c.b16 %v285, %v284
      %v304 = vpack.c.b16 %v287, %v286
      %v305 = vpack.c.b16 %v289, %v288
      %vm306 = vcmask 48128
      %v308 = vsel %vm306, %v290, 0
      %v311 = vsel %vm306, %v291, 0
      %v314 = vsel %vm306, %v292, 0
      %v317 = vsel %vm306, %v293, 0
      %v320 = vsel %vm306, %v294, 0
      %v323 = vsel %vm306, %v295, 0
      %v326 = vsel %vm306, %v296, 0
      %v329 = vsel %vm306, %v297, 0
      %v332 = vsel %vm306, %v298, 0
      %v335 = vsel %vm306, %v299, 0
      %v338 = vsel %vm306, %v300, 0
      %v341 = vsel %vm306, %v301, 0
      %v344 = vsel %vm306, %v302, 0
      %v347 = vsel %vm306, %v303, 0
      %v350 = vsel %vm306, %v304, 0
      %v353 = vsel %vm306, %v305, 0
      %vm355 = vcmask 1042432
      %v357 = vsel %vm355, %v219, 0
      %359 = vmatprep.subr.bf16.mxu0 0
      %360 = vmatpush1.bf16.msra.mxu0 %v357
      %361 = vmatprep.subr.bf16.mxu0 0
      %362 = vmatpush1.bf16.msra.mxu0 0
      %363 = vmatprep.subr.bf16.mxu0 0
      %364 = vmatpush1.bf16.msra.mxu0 0
      %365 = vmatprep.subr.bf16.mxu0 0
      %366 = vmatpush1.bf16.msra.mxu0 0
      %367 = vmatprep.subr.bf16.mxu0 0
      %368 = vmatpush1.bf16.msra.mxu0 0
      %369 = vmatprep.subr.bf16.mxu0 0
      %370 = vmatpush1.bf16.msra.mxu0 0
      %371 = vmatprep.subr.bf16.mxu0 0
      %372 = vmatpush1.bf16.msra.mxu0 0
      %373 = vmatprep.subr.bf16.mxu0 0
      %374 = vmatpush1.bf16.msra.mxu0 0
      %375 = vmatprep.subr.bf16.mxu0 0
      %376 = vmatpush1.bf16.msra.mxu0 0
      %377 = vmatprep.subr.bf16.mxu0 0
      %378 = vmatpush1.bf16.msra.mxu0 0
      %379 = vmatprep.subr.bf16.mxu0 0
      %380 = vmatpush1.bf16.msra.mxu0 0
      %381 = vmatprep.subr.bf16.mxu0 0
      %382 = vmatpush1.bf16.msra.mxu0 0
      %383 = vmatprep.subr.bf16.mxu0 0
      %384 = vmatpush1.bf16.msra.mxu0 0
      %385 = vmatprep.subr.bf16.mxu0 0
      %386 = vmatpush1.bf16.msra.mxu0 0
      %387 = vmatprep.subr.bf16.mxu0 0
      %388 = vmatpush1.bf16.msra.mxu0 0
      %389 = vmatprep.subr.bf16.mxu0 0
      %390 = vmatpush1.bf16.msra.mxu0 0
      %391 = vmatprep.mubr.bf16.mxu0 0
      %392 = vmatmul.mubr.bf16.gmra.mrb[0].mxu0 %v308
      %v393 = vpop.f32.mrb[0].mxu0
      %v394 = vadd.f32 %v225, %v393
      %v395 = vpop.f32.mrb[0].mxu0
      %v396 = vpop.f32.mrb[0].mxu0
      %v397 = vadd.f32 %v225, %v396
      %v398 = vpop.f32.mrb[0].mxu0
      %399 = vmatprep.mubr.bf16.mxu0 0
      %400 = vmatmul.mubr.bf16.gmra.mrb[0].mxu0 %v311
      %v401 = vpop.f32.mrb[0].mxu0
      %v402 = vadd.f32 %v225, %v401
      %v403 = vpop.f32.mrb[0].mxu0
      %v404 = vpop.f32.mrb[0].mxu0
      %v405 = vadd.f32 %v225, %v404
      %v406 = vpop.f32.mrb[0].mxu0
      %407 = vmatprep.mubr.bf16.mxu0 0
      %408 = vmatmul.mubr.bf16.gmra.mrb[0].mxu0 %v314
      %v409 = vpop.f32.mrb[0].mxu0
      %v410 = vadd.f32 %v225, %v409
      %v411 = vpop.f32.mrb[0].mxu0
      %v412 = vpop.f32.mrb[0].mxu0
      %v413 = vadd.f32 %v225, %v412
      %v414 = vpop.f32.mrb[0].mxu0
      %415 = vmatprep.mubr.bf16.mxu0 0
      %416 = vmatmul.mubr.bf16.gmra.mrb[0].mxu0 %v317
      %v417 = vpop.f32.mrb[0].mxu0
      %v418 = vadd.f32 %v225, %v417
      %v419 = vpop.f32.mrb[0].mxu0
      %v420 = vpop.f32.mrb[0].mxu0
      %v421 = vadd.f32 %v225, %v420
      %v422 = vpop.f32.mrb[0].mxu0
      %423 = vmatprep.mubr.bf16.mxu0 0
      %424 = vmatmul.mubr.bf16.gmra.mrb[0].mxu0 %v320
      %v425 = vpop.f32.mrb[0].mxu0
      %v426 = vadd.f32 %v225, %v425
      %v427 = vpop.f32.mrb[0].mxu0
      %v428 = vpop.f32.mrb[0].mxu0
      %v429 = vadd.f32 %v225, %v428
      %v430 = vpop.f32.mrb[0].mxu0
      %431 = vmatprep.mubr.bf16.mxu0 0
      %432 = vmatmul.mubr.bf16.gmra.mrb[0].mxu0 %v323
      %v433 = vpop.f32.mrb[0].mxu0
      %v434 = vadd.f32 %v225, %v433
      %v435 = vpop.f32.mrb[0].mxu0
      %v436 = vpop.f32.mrb[0].mxu0
      %v437 = vadd.f32 %v225, %v436
      %v438 = vpop.f32.mrb[0].mxu0
      %439 = vmatprep.mubr.bf16.mxu0 0
      %440 = vmatmul.mubr.bf16.gmra.mrb[0].mxu0 %v326
      %v441 = vpop.f32.mrb[0].mxu0
      %v442 = vadd.f32 %v225, %v441
      %v443 = vpop.f32.mrb[0].mxu0
      %v444 = vpop.f32.mrb[0].mxu0
      %v445 = vadd.f32 %v225, %v444
      %v446 = vpop.f32.mrb[0].mxu0
      %447 = vmatprep.mubr.bf16.mxu0 0
      %448 = vmatmul.mubr.bf16.gmra.mrb[0].mxu0 %v329
      %v449 = vpop.f32.mrb[0].mxu0
      %v450 = vadd.f32 %v225, %v449
      %v451 = vpop.f32.mrb[0].mxu0
      %v452 = vpop.f32.mrb[0].mxu0
      %v453 = vadd.f32 %v225, %v452
      %v454 = vpop.f32.mrb[0].mxu0
      %455 = vmatprep.mubr.bf16.mxu0 0
      %456 = vmatmul.mubr.bf16.gmra.mrb[0].mxu0 %v332
      %v457 = vpop.f32.mrb[0].mxu0
      %v458 = vadd.f32 %v225, %v457
      %v459 = vpop.f32.mrb[0].mxu0
      %v460 = vpop.f32.mrb[0].mxu0
      %v461 = vadd.f32 %v225, %v460
      %v462 = vpop.f32.mrb[0].mxu0
      %463 = vmatprep.mubr.bf16.mxu0 0
      %464 = vmatmul.mubr.bf16.gmra.mrb[0].mxu0 %v335
      %v465 = vpop.f32.mrb[0].mxu0
      %v466 = vadd.f32 %v225, %v465
      %v467 = vpop.f32.mrb[0].mxu0
      %v468 = vpop.f32.mrb[0].mxu0
      %v469 = vadd.f32 %v225, %v468
      %v470 = vpop.f32.mrb[0].mxu0
      %471 = vmatprep.mubr.bf16.mxu0 0
      %472 = vmatmul.mubr.bf16.gmra.mrb[0].mxu0 %v338
      %v473 = vpop.f32.mrb[0].mxu0
      %v474 = vadd.f32 %v225, %v473
      %v475 = vpop.f32.mrb[0].mxu0
      %v476 = vpop.f32.mrb[0].mxu0
      %v477 = vadd.f32 %v225, %v476
      %v478 = vpop.f32.mrb[0].mxu0
      %479 = vmatprep.mubr.bf16.mxu0 0
      %480 = vmatmul.mubr.bf16.gmra.mrb[0].mxu0 %v341
      %v481 = vpop.f32.mrb[0].mxu0
      %v482 = vadd.f32 %v225, %v481
      %v483 = vpop.f32.mrb[0].mxu0
      %v484 = vpop.f32.mrb[0].mxu0
      %v485 = vadd.f32 %v225, %v484
      %v486 = vpop.f32.mrb[0].mxu0
      %487 = vmatprep.mubr.bf16.mxu0 0
      %488 = vmatmul.mubr.bf16.gmra.mrb[0].mxu0 %v344
      %v489 = vpop.f32.mrb[0].mxu0
      %v490 = vadd.f32 %v225, %v489
      %v491 = vpop.f32.mrb[0].mxu0
      %v492 = vpop.f32.mrb[0].mxu0
      %v493 = vadd.f32 %v225, %v492
      %v494 = vpop.f32.mrb[0].mxu0
      %495 = vmatprep.mubr.bf16.mxu0 0
      %496 = vmatmul.mubr.bf16.gmra.mrb[0].mxu0 %v347
      %v497 = vpop.f32.mrb[0].mxu0
      %v498 = vadd.f32 %v225, %v497
      %v499 = vpop.f32.mrb[0].mxu0
      %v500 = vpop.f32.mrb[0].mxu0
      %v501 = vadd.f32 %v225, %v500
      %v502 = vpop.f32.mrb[0].mxu0
      %503 = vmatprep.mubr.bf16.mxu0 0
      %504 = vmatmul.mubr.bf16.gmra.mrb[0].mxu0 %v350
      %v505 = vpop.f32.mrb[0].mxu0
      %v506 = vadd.f32 %v225, %v505
      %v507 = vpop.f32.mrb[0].mxu0
      %v508 = vpop.f32.mrb[0].mxu0
      %v509 = vadd.f32 %v225, %v508
      %v510 = vpop.f32.mrb[0].mxu0
      %511 = vmatprep.mubr.bf16.mxu0 0
      %512 = vmatmul.mubr.bf16.gmra.mrb[0].mxu0 %v353
      %v513 = vpop.f32.mrb[0].mxu0
      %v514 = vadd.f32 %v225, %v513
      %v515 = vpop.f32.mrb[0].mxu0
      %v516 = vpop.f32.mrb[0].mxu0
      %v517 = vadd.f32 %v225, %v516
      %v518 = vpop.f32.mrb[0].mxu0
      %519 = vdwg.mxu0
      %v520 = vmax.f32 %v394, 0.0
      %v521 = vmax.f32 %v397, 0.0
      %v522 = vmax.f32 %v402, 0.0
      %v523 = vmax.f32 %v405, 0.0
      %v524 = vmax.f32 %v410, 0.0
      %v525 = vmax.f32 %v413, 0.0
      %v526 = vmax.f32 %v418, 0.0
      %v527 = vmax.f32 %v421, 0.0
      %v528 = vmax.f32 %v426, 0.0
      %v529 = vmax.f32 %v429, 0.0
      %v530 = vmax.f32 %v434, 0.0
      %v531 = vmax.f32 %v437, 0.0
      %v532 = vmax.f32 %v442, 0.0
      %v533 = vmax.f32 %v445, 0.0
      %v534 = vmax.f32 %v450, 0.0
      %v535 = vmax.f32 %v453, 0.0
      %v536 = vmax.f32 %v458, 0.0
      %v537 = vmax.f32 %v461, 0.0
      %v538 = vmax.f32 %v466, 0.0
      %v539 = vmax.f32 %v469, 0.0
      %v540 = vmax.f32 %v474, 0.0
      %v541 = vmax.f32 %v477, 0.0
      %v542 = vmax.f32 %v482, 0.0
      %v543 = vmax.f32 %v485, 0.0
      %v544 = vmax.f32 %v490, 0.0
      %v545 = vmax.f32 %v493, 0.0
      %v546 = vmax.f32 %v498, 0.0
      %v547 = vmax.f32 %v501, 0.0
      %v548 = vmax.f32 %v506, 0.0
      %v549 = vmax.f32 %v509, 0.0
      %v550 = vmax.f32 %v514, 0.0
      %v551 = vmax.f32 %v517, 0.0
      %v552 = vpack.c.bf16 %v521, %v520
      %v553 = vpack.c.bf16 %v523, %v522
      %v554 = vpack.c.bf16 %v525, %v524
      %v555 = vpack.c.bf16 %v527, %v526
      %v556 = vpack.c.bf16 %v529, %v528
      %v557 = vpack.c.bf16 %v531, %v530
      %v558 = vpack.c.bf16 %v533, %v532
      %v559 = vpack.c.bf16 %v535, %v534
      %v560 = vpack.c.bf16 %v537, %v536
      %v561 = vpack.c.bf16 %v539, %v538
      %v562 = vpack.c.bf16 %v541, %v540
      %v563 = vpack.c.bf16 %v543, %v542
      %v564 = vpack.c.bf16 %v545, %v544
      %v565 = vpack.c.bf16 %v547, %v546
      %v566 = vpack.c.bf16 %v549, %v548
      %v567 = vpack.c.bf16 %v551, %v550
      %v568 = vld [vmem:[%s2 + $0x8] sm:$0xf]
      %v569 = vld [vmem:[%s2 + $0xc] sm:$0xf]
      %v570 = vld [vmem:[%s2 + $0x10] sm:$0x1]
      %v571 = vunpack.c.l.bf16 %v570
      %v572 = vlaneseq
      %v573 = vshrl.u32 %v572, 7
      %v574 = vsub.s32 0, %v573
      %v575 = vrot.slane %v571, %v574
      %v578 = vunpack.c.l.b16 %v568
      %v579 = vunpack.c.l.b16 %v569
      %v580 = vpack.c.b16 %v579, %v578
      %vm582 = vcmask 130048
      %v584 = vsel %vm582, %v552, 0
      %v587 = vsel %vm582, %v553, 0
      %v590 = vsel %vm582, %v554, 0
      %v593 = vsel %vm582, %v555, 0
      %v596 = vsel %vm582, %v556, 0
      %v599 = vsel %vm582, %v557, 0
      %v602 = vsel %vm582, %v558, 0
      %v605 = vsel %vm582, %v559, 0
      %v608 = vsel %vm582, %v560, 0
      %v611 = vsel %vm582, %v561, 0
      %v614 = vsel %vm582, %v562, 0
      %v617 = vsel %vm582, %v563, 0
      %v620 = vsel %vm582, %v564, 0
      %v623 = vsel %vm582, %v565, 0
      %v626 = vsel %vm582, %v566, 0
      %v629 = vsel %vm582, %v567, 0
      %631 = vmatprep.subr.bf16.mxu0 0
      %632 = vmatpush1.bf16.msra.mxu0 %v580
      %633 = vmatprep.subr.bf16.mxu0 0
      %634 = vmatpush1.bf16.msra.mxu0 0
      %635 = vmatprep.subr.bf16.mxu0 0
      %636 = vmatpush1.bf16.msra.mxu0 0
      %637 = vmatprep.subr.bf16.mxu0 0
      %638 = vmatpush1.bf16.msra.mxu0 0
      %639 = vmatprep.subr.bf16.mxu0 0
      %640 = vmatpush1.bf16.msra.mxu0 0
      %641 = vmatprep.subr.bf16.mxu0 0
      %642 = vmatpush1.bf16.msra.mxu0 0
      %643 = vmatprep.subr.bf16.mxu0 0
      %644 = vmatpush1.bf16.msra.mxu0 0
      %645 = vmatprep.subr.bf16.mxu0 0
      %646 = vmatpush1.bf16.msra.mxu0 0
      %647 = vmatprep.subr.bf16.mxu0 0
      %648 = vmatpush1.bf16.msra.mxu0 0
      %649 = vmatprep.subr.bf16.mxu0 0
      %650 = vmatpush1.bf16.msra.mxu0 0
      %651 = vmatprep.subr.bf16.mxu0 0
      %652 = vmatpush1.bf16.msra.mxu0 0
      %653 = vmatprep.subr.bf16.mxu0 0
      %654 = vmatpush1.bf16.msra.mxu0 0
      %655 = vmatprep.subr.bf16.mxu0 0
      %656 = vmatpush1.bf16.msra.mxu0 0
      %657 = vmatprep.subr.bf16.mxu0 0
      %658 = vmatpush1.bf16.msra.mxu0 0
      %659 = vmatprep.subr.bf16.mxu0 0
      %660 = vmatpush1.bf16.msra.mxu0 0
      %661 = vmatprep.subr.bf16.mxu0 0
      %662 = vmatpush1.bf16.msra.mxu0 0
      %663 = vmatprep.mubr.bf16.mxu0 0
      %664 = vmatmul.mubr.bf16.gmra.mrb[0].mxu0 %v584
      %v665 = vpop.f32.mrb[0].mxu0
      %v666 = vadd.f32 %v575, %v665
      %v667 = vpop.f32.mrb[0].mxu0
      %v668 = vpop.f32.mrb[0].mxu0
      %v669 = vadd.f32 %v575, %v668
      %v670 = vpop.f32.mrb[0].mxu0
      %671 = vmatprep.mubr.bf16.mxu0 0
      %672 = vmatmul.mubr.bf16.gmra.mrb[0].mxu0 %v587
      %v673 = vpop.f32.mrb[0].mxu0
      %v674 = vadd.f32 %v575, %v673
      %v675 = vpop.f32.mrb[0].mxu0
      %v676 = vpop.f32.mrb[0].mxu0
      %v677 = vadd.f32 %v575, %v676
      %v678 = vpop.f32.mrb[0].mxu0
      %679 = vmatprep.mubr.bf16.mxu0 0
      %680 = vmatmul.mubr.bf16.gmra.mrb[0].mxu0 %v590
      %v681 = vpop.f32.mrb[0].mxu0
      %v682 = vadd.f32 %v575, %v681
      %v683 = vpop.f32.mrb[0].mxu0
      %v684 = vpop.f32.mrb[0].mxu0
      %v685 = vadd.f32 %v575, %v684
      %v686 = vpop.f32.mrb[0].mxu0
      %687 = vmatprep.mubr.bf16.mxu0 0
      %688 = vmatmul.mubr.bf16.gmra.mrb[0].mxu0 %v593
      %v689 = vpop.f32.mrb[0].mxu0
      %v690 = vadd.f32 %v575, %v689
      %v691 = vpop.f32.mrb[0].mxu0
      %v692 = vpop.f32.mrb[0].mxu0
      %v693 = vadd.f32 %v575, %v692
      %v694 = vpop.f32.mrb[0].mxu0
      %695 = vmatprep.mubr.bf16.mxu0 0
      %696 = vmatmul.mubr.bf16.gmra.mrb[0].mxu0 %v596
      %v697 = vpop.f32.mrb[0].mxu0
      %v698 = vadd.f32 %v575, %v697
      %v699 = vpop.f32.mrb[0].mxu0
      %v700 = vpop.f32.mrb[0].mxu0
      %v701 = vadd.f32 %v575, %v700
      %v702 = vpop.f32.mrb[0].mxu0
      %703 = vmatprep.mubr.bf16.mxu0 0
      %704 = vmatmul.mubr.bf16.gmra.mrb[0].mxu0 %v599
      %v705 = vpop.f32.mrb[0].mxu0
      %v706 = vadd.f32 %v575, %v705
      %v707 = vpop.f32.mrb[0].mxu0
      %v708 = vpop.f32.mrb[0].mxu0
      %v709 = vadd.f32 %v575, %v708
      %v710 = vpop.f32.mrb[0].mxu0
      %711 = vmatprep.mubr.bf16.mxu0 0
      %712 = vmatmul.mubr.bf16.gmra.mrb[0].mxu0 %v602
      %v713 = vpop.f32.mrb[0].mxu0
      %v714 = vadd.f32 %v575, %v713
      %v715 = vpop.f32.mrb[0].mxu0
      %v716 = vpop.f32.mrb[0].mxu0
      %v717 = vadd.f32 %v575, %v716
      %v718 = vpop.f32.mrb[0].mxu0
      %719 = vmatprep.mubr.bf16.mxu0 0
      %720 = vmatmul.mubr.bf16.gmra.mrb[0].mxu0 %v605
      %v721 = vpop.f32.mrb[0].mxu0
      %v722 = vadd.f32 %v575, %v721
      %v723 = vpop.f32.mrb[0].mxu0
      %v724 = vpop.f32.mrb[0].mxu0
      %v725 = vadd.f32 %v575, %v724
      %v726 = vpop.f32.mrb[0].mxu0
      %727 = vmatprep.mubr.bf16.mxu0 0
      %728 = vmatmul.mubr.bf16.gmra.mrb[0].mxu0 %v608
      %v729 = vpop.f32.mrb[0].mxu0
      %v730 = vadd.f32 %v575, %v729
      %v731 = vpop.f32.mrb[0].mxu0
      %v732 = vpop.f32.mrb[0].mxu0
      %v733 = vadd.f32 %v575, %v732
      %v734 = vpop.f32.mrb[0].mxu0
      %735 = vmatprep.mubr.bf16.mxu0 0
      %736 = vmatmul.mubr.bf16.gmra.mrb[0].mxu0 %v611
      %v737 = vpop.f32.mrb[0].mxu0
      %v738 = vadd.f32 %v575, %v737
      %v739 = vpop.f32.mrb[0].mxu0
      %v740 = vpop.f32.mrb[0].mxu0
      %v741 = vadd.f32 %v575, %v740
      %v742 = vpop.f32.mrb[0].mxu0
      %743 = vmatprep.mubr.bf16.mxu0 0
      %744 = vmatmul.mubr.bf16.gmra.mrb[0].mxu0 %v614
      %v745 = vpop.f32.mrb[0].mxu0
      %v746 = vadd.f32 %v575, %v745
      %v747 = vpop.f32.mrb[0].mxu0
      %v748 = vpop.f32.mrb[0].mxu0
      %v749 = vadd.f32 %v575, %v748
      %v750 = vpop.f32.mrb[0].mxu0
      %751 = vmatprep.mubr.bf16.mxu0 0
      %752 = vmatmul.mubr.bf16.gmra.mrb[0].mxu0 %v617
      %v753 = vpop.f32.mrb[0].mxu0
      %v754 = vadd.f32 %v575, %v753
      %v755 = vpop.f32.mrb[0].mxu0
      %v756 = vpop.f32.mrb[0].mxu0
      %v757 = vadd.f32 %v575, %v756
      %v758 = vpop.f32.mrb[0].mxu0
      %759 = vmatprep.mubr.bf16.mxu0 0
      %760 = vmatmul.mubr.bf16.gmra.mrb[0].mxu0 %v620
      %v761 = vpop.f32.mrb[0].mxu0
      %v762 = vadd.f32 %v575, %v761
      %v763 = vpop.f32.mrb[0].mxu0
      %v764 = vpop.f32.mrb[0].mxu0
      %v765 = vadd.f32 %v575, %v764
      %v766 = vpop.f32.mrb[0].mxu0
      %767 = vmatprep.mubr.bf16.mxu0 0
      %768 = vmatmul.mubr.bf16.gmra.mrb[0].mxu0 %v623
      %v769 = vpop.f32.mrb[0].mxu0
      %v770 = vadd.f32 %v575, %v769
      %v771 = vpop.f32.mrb[0].mxu0
      %v772 = vpop.f32.mrb[0].mxu0
      %v773 = vadd.f32 %v575, %v772
      %v774 = vpop.f32.mrb[0].mxu0
      %775 = vmatprep.mubr.bf16.mxu0 0
      %776 = vmatmul.mubr.bf16.gmra.mrb[0].mxu0 %v626
      %v777 = vpop.f32.mrb[0].mxu0
      %v778 = vadd.f32 %v575, %v777
      %v779 = vpop.f32.mrb[0].mxu0
      %v780 = vpop.f32.mrb[0].mxu0
      %v781 = vadd.f32 %v575, %v780
      %v782 = vpop.f32.mrb[0].mxu0
      %783 = vmatprep.mubr.bf16.mxu0 0
      %784 = vmatmul.mubr.bf16.gmra.mrb[0].mxu0 %v629
      %v785 = vpop.f32.mrb[0].mxu0
      %v786 = vadd.f32 %v575, %v785
      %v787 = vpop.f32.mrb[0].mxu0
      %v788 = vpop.f32.mrb[0].mxu0
      %v789 = vadd.f32 %v575, %v788
      %v790 = vpop.f32.mrb[0].mxu0
      %791 = vdwg.mxu0
      %v792 = vmax.f32 %v666, 0.0
      %v793 = vmax.f32 %v669, 0.0
      %v794 = vmax.f32 %v674, 0.0
      %v795 = vmax.f32 %v677, 0.0
      %v796 = vmax.f32 %v682, 0.0
      %v797 = vmax.f32 %v685, 0.0
      %v798 = vmax.f32 %v690, 0.0
      %v799 = vmax.f32 %v693, 0.0
      %v800 = vmax.f32 %v698, 0.0
      %v801 = vmax.f32 %v701, 0.0
      %v802 = vmax.f32 %v706, 0.0
      %v803 = vmax.f32 %v709, 0.0
      %v804 = vmax.f32 %v714, 0.0
      %v805 = vmax.f32 %v717, 0.0
      %v806 = vmax.f32 %v722, 0.0
      %v807 = vmax.f32 %v725, 0.0
      %v808 = vmax.f32 %v730, 0.0
      %v809 = vmax.f32 %v733, 0.0
      %v810 = vmax.f32 %v738, 0.0
      %v811 = vmax.f32 %v741, 0.0
      %v812 = vmax.f32 %v746, 0.0
      %v813 = vmax.f32 %v749, 0.0
      %v814 = vmax.f32 %v754, 0.0
      %v815 = vmax.f32 %v757, 0.0
      %v816 = vmax.f32 %v762, 0.0
      %v817 = vmax.f32 %v765, 0.0
      %v818 = vmax.f32 %v770, 0.0
      %v819 = vmax.f32 %v773, 0.0
      %v820 = vmax.f32 %v778, 0.0
      %v821 = vmax.f32 %v781, 0.0
      %v822 = vmax.f32 %v786, 0.0
      %v823 = vmax.f32 %v789, 0.0
      %v824 = vpack.c.bf16 %v793, %v792
      %v825 = vpack.c.bf16 %v795, %v794
      %v826 = vpack.c.bf16 %v797, %v796
      %v827 = vpack.c.bf16 %v799, %v798
      %v828 = vpack.c.bf16 %v801, %v800
      %v829 = vpack.c.bf16 %v803, %v802
      %v830 = vpack.c.bf16 %v805, %v804
      %v831 = vpack.c.bf16 %v807, %v806
      %v832 = vpack.c.bf16 %v809, %v808
      %v833 = vpack.c.bf16 %v811, %v810
      %v834 = vpack.c.bf16 %v813, %v812
      %v835 = vpack.c.bf16 %v815, %v814
      %v836 = vpack.c.bf16 %v817, %v816
      %v837 = vpack.c.bf16 %v819, %v818
      %v838 = vpack.c.bf16 %v821, %v820
      %v839 = vpack.c.bf16 %v823, %v822
      %v840 = vld [vmem:[%s2 + $0x14] sm:$0xf]
      %v841 = vld [vmem:[%s2 + $0x18] sm:$0xf]
      %v842 = vld [vmem:[%s2 + $0x1c] sm:$0xf]
      %v843 = vld [vmem:[%s2 + $0x20] sm:$0xf]
      %v844 = vld [vmem:[%s2 + $0x24] sm:$0x1]
      %v845 = vunpack.c.l.bf16 %v844
      %v846 = vlaneseq
      %v847 = vshrl.u32 %v846, 7
      %v848 = vsub.s32 0, %v847
      %v849 = vrot.slane %v845, %v848
      %v854 = vunpack.c.l.b16 %v840
      %v855 = vunpack.c.l.b16 %v841
      %v856 = vunpack.c.l.b16 %v842
      %v857 = vunpack.c.l.b16 %v843
      %v858 = vpack.c.b16 %v855, %v854
      %v859 = vpack.c.b16 %v857, %v856
      %vm862 = vcmask 261120
      %v864 = vsel %vm862, %v824, 0
      %v867 = vsel %vm862, %v825, 0
      %v870 = vsel %vm862, %v826, 0
      %v873 = vsel %vm862, %v827, 0
      %v876 = vsel %vm862, %v828, 0
      %v879 = vsel %vm862, %v829, 0
      %v882 = vsel %vm862, %v830, 0
      %v885 = vsel %vm862, %v831, 0
      %v888 = vsel %vm862, %v832, 0
      %v891 = vsel %vm862, %v833, 0
      %v894 = vsel %vm862, %v834, 0
      %v897 = vsel %vm862, %v835, 0
      %v900 = vsel %vm862, %v836, 0
      %v903 = vsel %vm862, %v837, 0
      %v906 = vsel %vm862, %v838, 0
      %v909 = vsel %vm862, %v839, 0
      %911 = vmatprep.subr.bf16.mxu0 0
      %912 = vmatpush1.bf16.msra.mxu0 %v858
      %913 = vmatprep.subr.bf16.mxu0 0
      %914 = vmatpush1.bf16.msra.mxu0 %v859
      %915 = vmatprep.subr.bf16.mxu0 0
      %916 = vmatpush1.bf16.msra.mxu0 0
      %917 = vmatprep.subr.bf16.mxu0 0
      %918 = vmatpush1.bf16.msra.mxu0 0
      %919 = vmatprep.subr.bf16.mxu0 0
      %920 = vmatpush1.bf16.msra.mxu0 0
      %921 = vmatprep.subr.bf16.mxu0 0
      %922 = vmatpush1.bf16.msra.mxu0 0
      %923 = vmatprep.subr.bf16.mxu0 0
      %924 = vmatpush1.bf16.msra.mxu0 0
      %925 = vmatprep.subr.bf16.mxu0 0
      %926 = vmatpush1.bf16.msra.mxu0 0
      %927 = vmatprep.subr.bf16.mxu0 0
      %928 = vmatpush1.bf16.msra.mxu0 0
      %929 = vmatprep.subr.bf16.mxu0 0
      %930 = vmatpush1.bf16.msra.mxu0 0
      %931 = vmatprep.subr.bf16.mxu0 0
      %932 = vmatpush1.bf16.msra.mxu0 0
      %933 = vmatprep.subr.bf16.mxu0 0
      %934 = vmatpush1.bf16.msra.mxu0 0
      %935 = vmatprep.subr.bf16.mxu0 0
      %936 = vmatpush1.bf16.msra.mxu0 0
      %937 = vmatprep.subr.bf16.mxu0 0
      %938 = vmatpush1.bf16.msra.mxu0 0
      %939 = vmatprep.subr.bf16.mxu0 0
      %940 = vmatpush1.bf16.msra.mxu0 0
      %941 = vmatprep.subr.bf16.mxu0 0
      %942 = vmatpush1.bf16.msra.mxu0 0
      %943 = vmatprep.mubr.bf16.mxu0 0
      %944 = vmatmul.mubr.bf16.gmra.mrb[0].mxu0 %v864
      %v945 = vpop.f32.mrb[0].mxu0
      %v946 = vadd.f32 %v849, %v945
      %v947 = vpop.f32.mrb[0].mxu0
      %v948 = vpop.f32.mrb[0].mxu0
      %v949 = vadd.f32 %v849, %v948
      %v950 = vpop.f32.mrb[0].mxu0
      %951 = vmatprep.mubr.bf16.mxu0 0
      %952 = vmatmul.mubr.bf16.gmra.mrb[0].mxu0 %v867
      %v953 = vpop.f32.mrb[0].mxu0
      %v954 = vadd.f32 %v849, %v953
      %v955 = vpop.f32.mrb[0].mxu0
      %v956 = vpop.f32.mrb[0].mxu0
      %v957 = vadd.f32 %v849, %v956
      %v958 = vpop.f32.mrb[0].mxu0
      %959 = vmatprep.mubr.bf16.mxu0 0
      %960 = vmatmul.mubr.bf16.gmra.mrb[0].mxu0 %v870
      %v961 = vpop.f32.mrb[0].mxu0
      %v962 = vadd.f32 %v849, %v961
      %v963 = vpop.f32.mrb[0].mxu0
      %v964 = vpop.f32.mrb[0].mxu0
      %v965 = vadd.f32 %v849, %v964
      %v966 = vpop.f32.mrb[0].mxu0
      %967 = vmatprep.mubr.bf16.mxu0 0
      %968 = vmatmul.mubr.bf16.gmra.mrb[0].mxu0 %v873
      %v969 = vpop.f32.mrb[0].mxu0
      %v970 = vadd.f32 %v849, %v969
      %v971 = vpop.f32.mrb[0].mxu0
      %v972 = vpop.f32.mrb[0].mxu0
      %v973 = vadd.f32 %v849, %v972
      %v974 = vpop.f32.mrb[0].mxu0
      %975 = vmatprep.mubr.bf16.mxu0 0
      %976 = vmatmul.mubr.bf16.gmra.mrb[0].mxu0 %v876
      %v977 = vpop.f32.mrb[0].mxu0
      %v978 = vadd.f32 %v849, %v977
      %v979 = vpop.f32.mrb[0].mxu0
      %v980 = vpop.f32.mrb[0].mxu0
      %v981 = vadd.f32 %v849, %v980
      %v982 = vpop.f32.mrb[0].mxu0
      %983 = vmatprep.mubr.bf16.mxu0 0
      %984 = vmatmul.mubr.bf16.gmra.mrb[0].mxu0 %v879
      %v985 = vpop.f32.mrb[0].mxu0
      %v986 = vadd.f32 %v849, %v985
      %v987 = vpop.f32.mrb[0].mxu0
      %v988 = vpop.f32.mrb[0].mxu0
      %v989 = vadd.f32 %v849, %v988
      %v990 = vpop.f32.mrb[0].mxu0
      %991 = vmatprep.mubr.bf16.mxu0 0
      %992 = vmatmul.mubr.bf16.gmra.mrb[0].mxu0 %v882
      %v993 = vpop.f32.mrb[0].mxu0
      %v994 = vadd.f32 %v849, %v993
      %v995 = vpop.f32.mrb[0].mxu0
      %v996 = vpop.f32.mrb[0].mxu0
      %v997 = vadd.f32 %v849, %v996
      %v998 = vpop.f32.mrb[0].mxu0
      %999 = vmatprep.mubr.bf16.mxu0 0
      %1000 = vmatmul.mubr.bf16.gmra.mrb[0].mxu0 %v885
      %v1001 = vpop.f32.mrb[0].mxu0
      %v1002 = vadd.f32 %v849, %v1001
      %v1003 = vpop.f32.mrb[0].mxu0
      %v1004 = vpop.f32.mrb[0].mxu0
      %v1005 = vadd.f32 %v849, %v1004
      %v1006 = vpop.f32.mrb[0].mxu0
      %1007 = vmatprep.mubr.bf16.mxu0 0
      %1008 = vmatmul.mubr.bf16.gmra.mrb[0].mxu0 %v888
      %v1009 = vpop.f32.mrb[0].mxu0
      %v1010 = vadd.f32 %v849, %v1009
      %v1011 = vpop.f32.mrb[0].mxu0
      %v1012 = vpop.f32.mrb[0].mxu0
      %v1013 = vadd.f32 %v849, %v1012
      %v1014 = vpop.f32.mrb[0].mxu0
      %1015 = vmatprep.mubr.bf16.mxu0 0
      %1016 = vmatmul.mubr.bf16.gmra.mrb[0].mxu0 %v891
      %v1017 = vpop.f32.mrb[0].mxu0
      %v1018 = vadd.f32 %v849, %v1017
      %v1019 = vpop.f32.mrb[0].mxu0
      %v1020 = vpop.f32.mrb[0].mxu0
      %v1021 = vadd.f32 %v849, %v1020
      %v1022 = vpop.f32.mrb[0].mxu0
      %1023 = vmatprep.mubr.bf16.mxu0 0
      %1024 = vmatmul.mubr.bf16.gmra.mrb[0].mxu0 %v894
      %v1025 = vpop.f32.mrb[0].mxu0
      %v1026 = vadd.f32 %v849, %v1025
      %v1027 = vpop.f32.mrb[0].mxu0
      %v1028 = vpop.f32.mrb[0].mxu0
      %v1029 = vadd.f32 %v849, %v1028
      %v1030 = vpop.f32.mrb[0].mxu0
      %1031 = vmatprep.mubr.bf16.mxu0 0
      %1032 = vmatmul.mubr.bf16.gmra.mrb[0].mxu0 %v897
      %v1033 = vpop.f32.mrb[0].mxu0
      %v1034 = vadd.f32 %v849, %v1033
      %v1035 = vpop.f32.mrb[0].mxu0
      %v1036 = vpop.f32.mrb[0].mxu0
      %v1037 = vadd.f32 %v849, %v1036
      %v1038 = vpop.f32.mrb[0].mxu0
      %1039 = vmatprep.mubr.bf16.mxu0 0
      %1040 = vmatmul.mubr.bf16.gmra.mrb[0].mxu0 %v900
      %v1041 = vpop.f32.mrb[0].mxu0
      %v1042 = vadd.f32 %v849, %v1041
      %v1043 = vpop.f32.mrb[0].mxu0
      %v1044 = vpop.f32.mrb[0].mxu0
      %v1045 = vadd.f32 %v849, %v1044
      %v1046 = vpop.f32.mrb[0].mxu0
      %1047 = vmatprep.mubr.bf16.mxu0 0
      %1048 = vmatmul.mubr.bf16.gmra.mrb[0].mxu0 %v903
      %v1049 = vpop.f32.mrb[0].mxu0
      %v1050 = vadd.f32 %v849, %v1049
      %v1051 = vpop.f32.mrb[0].mxu0
      %v1052 = vpop.f32.mrb[0].mxu0
      %v1053 = vadd.f32 %v849, %v1052
      %v1054 = vpop.f32.mrb[0].mxu0
      %1055 = vmatprep.mubr.bf16.mxu0 0
      %1056 = vmatmul.mubr.bf16.gmra.mrb[0].mxu0 %v906
      %v1057 = vpop.f32.mrb[0].mxu0
      %v1058 = vadd.f32 %v849, %v1057
      %v1059 = vpop.f32.mrb[0].mxu0
      %v1060 = vpop.f32.mrb[0].mxu0
      %v1061 = vadd.f32 %v849, %v1060
      %v1062 = vpop.f32.mrb[0].mxu0
      %1063 = vmatprep.mubr.bf16.mxu0 0
      %1064 = vmatmul.mubr.bf16.gmra.mrb[0].mxu0 %v909
      %v1065 = vpop.f32.mrb[0].mxu0
      %v1066 = vadd.f32 %v849, %v1065
      %v1067 = vpop.f32.mrb[0].mxu0
      %v1068 = vpop.f32.mrb[0].mxu0
      %v1069 = vadd.f32 %v849, %v1068
      %v1070 = vpop.f32.mrb[0].mxu0
      %1071 = vdwg.mxu0
      %v1072 = vmax.f32 %v946, 0.0
      %v1073 = vmax.f32 %v949, 0.0
      %v1074 = vmax.f32 %v954, 0.0
      %v1075 = vmax.f32 %v957, 0.0
      %v1076 = vmax.f32 %v962, 0.0
      %v1077 = vmax.f32 %v965, 0.0
      %v1078 = vmax.f32 %v970, 0.0
      %v1079 = vmax.f32 %v973, 0.0
      %v1080 = vmax.f32 %v978, 0.0
      %v1081 = vmax.f32 %v981, 0.0
      %v1082 = vmax.f32 %v986, 0.0
      %v1083 = vmax.f32 %v989, 0.0
      %v1084 = vmax.f32 %v994, 0.0
      %v1085 = vmax.f32 %v997, 0.0
      %v1086 = vmax.f32 %v1002, 0.0
      %v1087 = vmax.f32 %v1005, 0.0
      %v1088 = vmax.f32 %v1010, 0.0
      %v1089 = vmax.f32 %v1013, 0.0
      %v1090 = vmax.f32 %v1018, 0.0
      %v1091 = vmax.f32 %v1021, 0.0
      %v1092 = vmax.f32 %v1026, 0.0
      %v1093 = vmax.f32 %v1029, 0.0
      %v1094 = vmax.f32 %v1034, 0.0
      %v1095 = vmax.f32 %v1037, 0.0
      %v1096 = vmax.f32 %v1042, 0.0
      %v1097 = vmax.f32 %v1045, 0.0
      %v1098 = vmax.f32 %v1050, 0.0
      %v1099 = vmax.f32 %v1053, 0.0
      %v1100 = vmax.f32 %v1058, 0.0
      %v1101 = vmax.f32 %v1061, 0.0
      %v1102 = vmax.f32 %v1066, 0.0
      %v1103 = vmax.f32 %v1069, 0.0
      %vm1104 = vcmask 523264
      %v1105 = vsel %vm1104, %v1072, -inf
      %v1106 = vsel %vm1104, %v1073, -inf
      %v1107 = vsel %vm1104, %v1074, -inf
      %v1108 = vsel %vm1104, %v1075, -inf
      %v1109 = vsel %vm1104, %v1076, -inf
      %v1110 = vmax.f32 %v1105, %v1109
      %v1111 = vsel %vm1104, %v1077, -inf
      %v1112 = vmax.f32 %v1106, %v1111
      %v1113 = vsel %vm1104, %v1078, -inf
      %v1114 = vmax.f32 %v1107, %v1113
      %v1115 = vsel %vm1104, %v1079, -inf
      %v1116 = vmax.f32 %v1108, %v1115
      %v1117 = vsel %vm1104, %v1080, -inf
      %v1118 = vmax.f32 %v1110, %v1117
      %v1119 = vsel %vm1104, %v1081, -inf
      %v1120 = vmax.f32 %v1112, %v1119
      %v1121 = vsel %vm1104, %v1082, -inf
      %v1122 = vmax.f32 %v1114, %v1121
      %v1123 = vsel %vm1104, %v1083, -inf
      %v1124 = vmax.f32 %v1116, %v1123
      %v1125 = vsel %vm1104, %v1084, -inf
      %v1126 = vmax.f32 %v1118, %v1125
      %v1127 = vsel %vm1104, %v1085, -inf
      %v1128 = vmax.f32 %v1120, %v1127
      %v1129 = vsel %vm1104, %v1086, -inf
      %v1130 = vmax.f32 %v1122, %v1129
      %v1131 = vsel %vm1104, %v1087, -inf
      %v1132 = vmax.f32 %v1124, %v1131
      %v1133 = vsel %vm1104, %v1088, -inf
      %v1134 = vmax.f32 %v1126, %v1133
      %v1135 = vsel %vm1104, %v1089, -inf
      %v1136 = vmax.f32 %v1128, %v1135
      %v1137 = vsel %vm1104, %v1090, -inf
      %v1138 = vmax.f32 %v1130, %v1137
      %v1139 = vsel %vm1104, %v1091, -inf
      %v1140 = vmax.f32 %v1132, %v1139
      %v1141 = vsel %vm1104, %v1092, -inf
      %v1142 = vmax.f32 %v1134, %v1141
      %v1143 = vsel %vm1104, %v1093, -inf
      %v1144 = vmax.f32 %v1136, %v1143
      %v1145 = vsel %vm1104, %v1094, -inf
      %v1146 = vmax.f32 %v1138, %v1145
      %v1147 = vsel %vm1104, %v1095, -inf
      %v1148 = vmax.f32 %v1140, %v1147
      %v1149 = vsel %vm1104, %v1096, -inf
      %v1150 = vmax.f32 %v1142, %v1149
      %v1151 = vsel %vm1104, %v1097, -inf
      %v1152 = vmax.f32 %v1144, %v1151
      %v1153 = vsel %vm1104, %v1098, -inf
      %v1154 = vmax.f32 %v1146, %v1153
      %v1155 = vsel %vm1104, %v1099, -inf
      %v1156 = vmax.f32 %v1148, %v1155
      %v1157 = vsel %vm1104, %v1100, -inf
      %v1158 = vmax.f32 %v1150, %v1157
      %v1159 = vsel %vm1104, %v1101, -inf
      %v1160 = vmax.f32 %v1152, %v1159
      %v1161 = vsel %vm1104, %v1102, -inf
      %v1162 = vmax.f32 %v1154, %v1161
      %v1163 = vsel %vm1104, %v1103, -inf
      %v1164 = vmax.f32 %v1156, %v1163
      %v1165 = vmax.f32 %v1158, %v1160
      %v1166 = vmax.f32 %v1162, %v1164
      %v1167 = vmax.f32 %v1165, %v1166
      %v1168 = vrot.slane %v1167, 4
      %v1169 = vmax.f32 %v1167, %v1168
      %v1170 = vrot.slane %v1169, 2
      %v1171 = vmax.f32 %v1169, %v1170
      %v1172 = vrot.slane %v1171, 1
      %v1173 = vmax.f32 %v1171, %v1172
      %v1174 = vld [vmem:[%s2 + $0x28] sm:$0xf]
      %v1175 = vld [vmem:[%s2 + $0x2c] sm:$0xf]
      %v1176 = vld [vmem:[%s2 + $0x30] sm:$0xf]
      %v1177 = vld [vmem:[%s2 + $0x34] sm:$0xf]
      %v1178 = vld [vmem:[%s2 + $0x38] sm:$0xf]
      %v1179 = vld [vmem:[%s2 + $0x3c] sm:$0xf]
      %v1180 = vld [vmem:[%s2 + $0x40] sm:$0xf]
      %v1181 = vld [vmem:[%s2 + $0x44] sm:$0xf]
      %v1182 = vld [vmem:[%s2 + $0x48] sm:$0x1]
      %v1183 = vunpack.c.l.bf16 %v1182
      %v1192 = vunpack.c.l.b16 %v1174
      %v1193 = vunpack.c.l.b16 %v1175
      %v1194 = vunpack.c.l.b16 %v1176
      %v1195 = vunpack.c.l.b16 %v1177
      %v1196 = vunpack.c.l.b16 %v1178
      %v1197 = vunpack.c.l.b16 %v1179
      %v1198 = vunpack.c.l.b16 %v1180
      %v1199 = vunpack.c.l.b16 %v1181
      %v1200 = vpack.c.b16 %v1193, %v1192
      %v1201 = vpack.c.b16 %v1195, %v1194
      %v1202 = vpack.c.b16 %v1197, %v1196
      %v1203 = vpack.c.b16 %v1199, %v1198
      %v1209 = vsel %vm1104, %v1173, 0
      %1211 = vmatprep.subr.bf16.mxu0 0
      %1212 = vmatpush1.bf16.msra.mxu0 %v1200
      %1213 = vmatprep.subr.bf16.mxu0 0
      %1214 = vmatpush1.bf16.msra.mxu0 %v1201
      %1215 = vmatprep.subr.bf16.mxu0 0
      %1216 = vmatpush1.bf16.msra.mxu0 %v1202
      %1217 = vmatprep.subr.bf16.mxu0 0
      %1218 = vmatpush1.bf16.msra.mxu0 %v1203
      %1219 = vmatprep.subr.bf16.mxu0 0
      %1220 = vmatpush1.bf16.msra.mxu0 0
      %1221 = vmatprep.subr.bf16.mxu0 0
      %1222 = vmatpush1.bf16.msra.mxu0 0
      %1223 = vmatprep.subr.bf16.mxu0 0
      %1224 = vmatpush1.bf16.msra.mxu0 0
      %1225 = vmatprep.subr.bf16.mxu0 0
      %1226 = vmatpush1.bf16.msra.mxu0 0
      %1227 = vmatprep.subr.bf16.mxu0 0
      %1228 = vmatpush1.bf16.msra.mxu0 0
      %1229 = vmatprep.subr.bf16.mxu0 0
      %1230 = vmatpush1.bf16.msra.mxu0 0
      %1231 = vmatprep.subr.bf16.mxu0 0
      %1232 = vmatpush1.bf16.msra.mxu0 0
      %1233 = vmatprep.subr.bf16.mxu0 0
      %1234 = vmatpush1.bf16.msra.mxu0 0
      %1235 = vmatprep.subr.bf16.mxu0 0
      %1236 = vmatpush1.bf16.msra.mxu0 0
      %1237 = vmatprep.subr.bf16.mxu0 0
      %1238 = vmatpush1.bf16.msra.mxu0 0
      %1239 = vmatprep.subr.bf16.mxu0 0
      %1240 = vmatpush1.bf16.msra.mxu0 0
      %1241 = vmatprep.subr.bf16.mxu0 0
      %1242 = vmatpush1.bf16.msra.mxu0 0
      %1243 = vmatprep.mubr.f32.mxu0 0.0
      %1244 = vmatmul.mubr.f32.gmra.mrb[0].mxu0 %v1209
      %v1245 = vpop.f32.mrb[0].mxu0
      %v1246 = vadd.f32 %v1183, %v1245
      %v1247 = vpop.f32.mrb[0].mxu0
      %1248 = vdwg.mxu0
      %v1249 = vmax.f32 %v1246, 0.0
      %v1250 = vld [vmem:[%s2 + $0x4c] sm:$0xf]
      %v1251 = vld [vmem:[%s2 + $0x50] sm:$0xf]
      %v1252 = vld [vmem:[%s2 + $0x54] sm:$0xf]
      %v1253 = vld [vmem:[%s2 + $0x58] sm:$0xf]
      %v1254 = vld [vmem:[%s2 + $0x5c] sm:$0xf]
      %v1255 = vld [vmem:[%s2 + $0x60] sm:$0xf]
      %v1256 = vld [vmem:[%s2 + $0x64] sm:$0xf]
      %v1257 = vld [vmem:[%s2 + $0x68] sm:$0xf]
      %v1258 = vld [vmem:[%s2 + $0x6c] sm:$0x1]
      %v1259 = vunpack.c.l.bf16 %v1258
      %v1268 = vunpack.c.l.b16 %v1250
      %v1269 = vunpack.c.l.b16 %v1251
      %v1270 = vunpack.c.l.b16 %v1252
      %v1271 = vunpack.c.l.b16 %v1253
      %v1272 = vunpack.c.l.b16 %v1254
      %v1273 = vunpack.c.l.b16 %v1255
      %v1274 = vunpack.c.l.b16 %v1256
      %v1275 = vunpack.c.l.b16 %v1257
      %v1276 = vpack.c.b16 %v1269, %v1268
      %v1277 = vpack.c.b16 %v1271, %v1270
      %v1278 = vpack.c.b16 %v1273, %v1272
      %v1279 = vpack.c.b16 %v1275, %v1274
      %v1285 = vsel %vm1104, %v1249, 0
      %1287 = vmatprep.subr.bf16.mxu0 0
      %1288 = vmatpush1.bf16.msra.mxu0 %v1276
      %1289 = vmatprep.subr.bf16.mxu0 0
      %1290 = vmatpush1.bf16.msra.mxu0 %v1277
      %1291 = vmatprep.subr.bf16.mxu0 0
      %1292 = vmatpush1.bf16.msra.mxu0 %v1278
      %1293 = vmatprep.subr.bf16.mxu0 0
      %1294 = vmatpush1.bf16.msra.mxu0 %v1279
      %1295 = vmatprep.subr.bf16.mxu0 0
      %1296 = vmatpush1.bf16.msra.mxu0 0
      %1297 = vmatprep.subr.bf16.mxu0 0
      %1298 = vmatpush1.bf16.msra.mxu0 0
      %1299 = vmatprep.subr.bf16.mxu0 0
      %1300 = vmatpush1.bf16.msra.mxu0 0
      %1301 = vmatprep.subr.bf16.mxu0 0
      %1302 = vmatpush1.bf16.msra.mxu0 0
      %1303 = vmatprep.subr.bf16.mxu0 0
      %1304 = vmatpush1.bf16.msra.mxu0 0
      %1305 = vmatprep.subr.bf16.mxu0 0
      %1306 = vmatpush1.bf16.msra.mxu0 0
      %1307 = vmatprep.subr.bf16.mxu0 0
      %1308 = vmatpush1.bf16.msra.mxu0 0
      %1309 = vmatprep.subr.bf16.mxu0 0
      %1310 = vmatpush1.bf16.msra.mxu0 0
      %1311 = vmatprep.subr.bf16.mxu0 0
      %1312 = vmatpush1.bf16.msra.mxu0 0
      %1313 = vmatprep.subr.bf16.mxu0 0
      %1314 = vmatpush1.bf16.msra.mxu0 0
      %1315 = vmatprep.subr.bf16.mxu0 0
      %1316 = vmatpush1.bf16.msra.mxu0 0
      %1317 = vmatprep.subr.bf16.mxu0 0
      %1318 = vmatpush1.bf16.msra.mxu0 0
      %1319 = vmatprep.mubr.f32.mxu0 0.0
      %1320 = vmatmul.mubr.f32.gmra.mrb[0].mxu0 %v1285
      %v1321 = vpop.f32.mrb[0].mxu0
      %v1322 = vadd.f32 %v1259, %v1321
      %v1323 = vpop.f32.mrb[0].mxu0
      %1324 = vdwg.mxu0
      %v1325 = vmax.f32 %v1322, 0.0
      %v1326 = vld [vmem:[%s2 + $0x70] sm:$0xf]
      %v1327 = vld [vmem:[%s2 + $0x74] sm:$0xf]
      %v1328 = vld [vmem:[%s2 + $0x78] sm:$0xf]
      %v1329 = vld [vmem:[%s2 + $0x7c] sm:$0xf]
      %v1330 = vld [vmem:[%s2 + $0x80] sm:$0x1]
      %v1331 = vunpack.c.l.bf16 %v1330
      %v1336 = vunpack.c.l.b16 %v1326
      %v1337 = vunpack.c.l.b16 %v1327
      %v1338 = vunpack.c.l.b16 %v1328
      %v1339 = vunpack.c.l.b16 %v1329
      %v1340 = vpack.c.b16 %v1337, %v1336
      %v1341 = vpack.c.b16 %v1339, %v1338
      %v1345 = vsel %vm862, %v1325, 0
      %1347 = vmatprep.subr.bf16.mxu0 0
      %1348 = vmatpush1.bf16.msra.mxu0 %v1340
      %1349 = vmatprep.subr.bf16.mxu0 0
      %1350 = vmatpush1.bf16.msra.mxu0 %v1341
      %1351 = vmatprep.subr.bf16.mxu0 0
      %1352 = vmatpush1.bf16.msra.mxu0 0
      %1353 = vmatprep.subr.bf16.mxu0 0
      %1354 = vmatpush1.bf16.msra.mxu0 0
      %1355 = vmatprep.subr.bf16.mxu0 0
      %1356 = vmatpush1.bf16.msra.mxu0 0
      %1357 = vmatprep.subr.bf16.mxu0 0
      %1358 = vmatpush1.bf16.msra.mxu0 0
      %1359 = vmatprep.subr.bf16.mxu0 0
      %1360 = vmatpush1.bf16.msra.mxu0 0
      %1361 = vmatprep.subr.bf16.mxu0 0
      %1362 = vmatpush1.bf16.msra.mxu0 0
      %1363 = vmatprep.subr.bf16.mxu0 0
      %1364 = vmatpush1.bf16.msra.mxu0 0
      %1365 = vmatprep.subr.bf16.mxu0 0
      %1366 = vmatpush1.bf16.msra.mxu0 0
      %1367 = vmatprep.subr.bf16.mxu0 0
      %1368 = vmatpush1.bf16.msra.mxu0 0
      %1369 = vmatprep.subr.bf16.mxu0 0
      %1370 = vmatpush1.bf16.msra.mxu0 0
      %1371 = vmatprep.subr.bf16.mxu0 0
      %1372 = vmatpush1.bf16.msra.mxu0 0
      %1373 = vmatprep.subr.bf16.mxu0 0
      %1374 = vmatpush1.bf16.msra.mxu0 0
      %1375 = vmatprep.subr.bf16.mxu0 0
      %1376 = vmatpush1.bf16.msra.mxu0 0
      %1377 = vmatprep.subr.bf16.mxu0 0
      %1378 = vmatpush1.bf16.msra.mxu0 0
      %1379 = vmatprep.mubr.f32.mxu0 0.0
      %1380 = vmatmul.mubr.f32.gmra.mrb[0].mxu0 %v1345
      %v1381 = vpop.f32.mrb[0].mxu0
      %v1382 = vadd.f32 %v1331, %v1381
      %v1383 = vpop.f32.mrb[0].mxu0
      %1384 = vdwg.mxu0
      %v1385 = vld [vmem:[%s2 + $0x84] sm:$0x3]
      %v1386 = vunpack.c.l.bf16 %v1385
      %v1388 = vrot.slane %v1382, 7
      %1389 = vrot.lane.b32.xlu0 %v1388, 112
      %v1390 = vpop.permute.xlu0 %1389
      %v1392 = vrot.slane %v1382, 6
      %1393 = vrot.lane.b32.xlu0 %v1392, 96
      %v1394 = vpop.permute.xlu0 %1393
      %v1397 = vrot.slane %v1386, 5
      %vm1399 = vcmask 1040384
      %v1400 = vsel %vm1399, %v1382, %v1390
      %vm1401 = vcmask 1041408
      %v1402 = vsel %vm1401, %v1400, %v1394
      %v1403 = vsel %vm355, %v1402, %v1397
      %v1404 = vpack.c.bf16 %v1403, %v1403
      %v1405 = vld [vmem:[%s2 + $0x88] sm:$0x1]
      %v1406 = vunpack.c.l.bf16 %v1405
      %v1407 = vlaneseq
      %v1408 = vshrl.u32 %v1407, 7
      %v1409 = vsub.s32 0, %v1408
      %v1410 = vrot.slane %v1406, %v1409
      %v1412 = vsel %vm355, %v1404, 0
      %1414 = vmatprep.subr.bf16.mxu0 0
      %1415 = vmatpush1.bf16.msra.mxu0 %v1412
      %1416 = vmatprep.subr.bf16.mxu0 0
      %1417 = vmatpush1.bf16.msra.mxu0 0
      %1418 = vmatprep.subr.bf16.mxu0 0
      %1419 = vmatpush1.bf16.msra.mxu0 0
      %1420 = vmatprep.subr.bf16.mxu0 0
      %1421 = vmatpush1.bf16.msra.mxu0 0
      %1422 = vmatprep.subr.bf16.mxu0 0
      %1423 = vmatpush1.bf16.msra.mxu0 0
      %1424 = vmatprep.subr.bf16.mxu0 0
      %1425 = vmatpush1.bf16.msra.mxu0 0
      %1426 = vmatprep.subr.bf16.mxu0 0
      %1427 = vmatpush1.bf16.msra.mxu0 0
      %1428 = vmatprep.subr.bf16.mxu0 0
      %1429 = vmatpush1.bf16.msra.mxu0 0
      %1430 = vmatprep.subr.bf16.mxu0 0
      %1431 = vmatpush1.bf16.msra.mxu0 0
      %1432 = vmatprep.subr.bf16.mxu0 0
      %1433 = vmatpush1.bf16.msra.mxu0 0
      %1434 = vmatprep.subr.bf16.mxu0 0
      %1435 = vmatpush1.bf16.msra.mxu0 0
      %1436 = vmatprep.subr.bf16.mxu0 0
      %1437 = vmatpush1.bf16.msra.mxu0 0
      %1438 = vmatprep.subr.bf16.mxu0 0
      %1439 = vmatpush1.bf16.msra.mxu0 0
      %1440 = vmatprep.subr.bf16.mxu0 0
      %1441 = vmatpush1.bf16.msra.mxu0 0
      %1442 = vmatprep.subr.bf16.mxu0 0
      %1443 = vmatpush1.bf16.msra.mxu0 0
      %1444 = vmatprep.subr.bf16.mxu0 0
      %1445 = vmatpush1.bf16.msra.mxu0 0
      %1446 = vmatprep.mubr.bf16.mxu0 0
      %1447 = vmatmul.mubr.bf16.gmra.mrb[0].mxu0 %v308
      %v1448 = vpop.f32.mrb[0].mxu0
      %v1449 = vadd.f32 %v1410, %v1448
      %v1450 = vpop.f32.mrb[0].mxu0
      %v1451 = vpop.f32.mrb[0].mxu0
      %v1452 = vadd.f32 %v1410, %v1451
      %v1453 = vpop.f32.mrb[0].mxu0
      %1454 = vmatprep.mubr.bf16.mxu0 0
      %1455 = vmatmul.mubr.bf16.gmra.mrb[0].mxu0 %v311
      %v1456 = vpop.f32.mrb[0].mxu0
      %v1457 = vadd.f32 %v1410, %v1456
      %v1458 = vpop.f32.mrb[0].mxu0
      %v1459 = vpop.f32.mrb[0].mxu0
      %v1460 = vadd.f32 %v1410, %v1459
      %v1461 = vpop.f32.mrb[0].mxu0
      %1462 = vmatprep.mubr.bf16.mxu0 0
      %1463 = vmatmul.mubr.bf16.gmra.mrb[0].mxu0 %v314
      %v1464 = vpop.f32.mrb[0].mxu0
      %v1465 = vadd.f32 %v1410, %v1464
      %v1466 = vpop.f32.mrb[0].mxu0
      %v1467 = vpop.f32.mrb[0].mxu0
      %v1468 = vadd.f32 %v1410, %v1467
      %v1469 = vpop.f32.mrb[0].mxu0
      %1470 = vmatprep.mubr.bf16.mxu0 0
      %1471 = vmatmul.mubr.bf16.gmra.mrb[0].mxu0 %v317
      %v1472 = vpop.f32.mrb[0].mxu0
      %v1473 = vadd.f32 %v1410, %v1472
      %v1474 = vpop.f32.mrb[0].mxu0
      %v1475 = vpop.f32.mrb[0].mxu0
      %v1476 = vadd.f32 %v1410, %v1475
      %v1477 = vpop.f32.mrb[0].mxu0
      %1478 = vmatprep.mubr.bf16.mxu0 0
      %1479 = vmatmul.mubr.bf16.gmra.mrb[0].mxu0 %v320
      %v1480 = vpop.f32.mrb[0].mxu0
      %v1481 = vadd.f32 %v1410, %v1480
      %v1482 = vpop.f32.mrb[0].mxu0
      %v1483 = vpop.f32.mrb[0].mxu0
      %v1484 = vadd.f32 %v1410, %v1483
      %v1485 = vpop.f32.mrb[0].mxu0
      %1486 = vmatprep.mubr.bf16.mxu0 0
      %1487 = vmatmul.mubr.bf16.gmra.mrb[0].mxu0 %v323
      %v1488 = vpop.f32.mrb[0].mxu0
      %v1489 = vadd.f32 %v1410, %v1488
      %v1490 = vpop.f32.mrb[0].mxu0
      %v1491 = vpop.f32.mrb[0].mxu0
      %v1492 = vadd.f32 %v1410, %v1491
      %v1493 = vpop.f32.mrb[0].mxu0
      %1494 = vmatprep.mubr.bf16.mxu0 0
      %1495 = vmatmul.mubr.bf16.gmra.mrb[0].mxu0 %v326
      %v1496 = vpop.f32.mrb[0].mxu0
      %v1497 = vadd.f32 %v1410, %v1496
      %v1498 = vpop.f32.mrb[0].mxu0
      %v1499 = vpop.f32.mrb[0].mxu0
      %v1500 = vadd.f32 %v1410, %v1499
      %v1501 = vpop.f32.mrb[0].mxu0
      %1502 = vmatprep.mubr.bf16.mxu0 0
      %1503 = vmatmul.mubr.bf16.gmra.mrb[0].mxu0 %v329
      %v1504 = vpop.f32.mrb[0].mxu0
      %v1505 = vadd.f32 %v1410, %v1504
      %v1506 = vpop.f32.mrb[0].mxu0
      %v1507 = vpop.f32.mrb[0].mxu0
      %v1508 = vadd.f32 %v1410, %v1507
      %v1509 = vpop.f32.mrb[0].mxu0
      %1510 = vmatprep.mubr.bf16.mxu0 0
      %1511 = vmatmul.mubr.bf16.gmra.mrb[0].mxu0 %v332
      %v1512 = vpop.f32.mrb[0].mxu0
      %v1513 = vadd.f32 %v1410, %v1512
      %v1514 = vpop.f32.mrb[0].mxu0
      %v1515 = vpop.f32.mrb[0].mxu0
      %v1516 = vadd.f32 %v1410, %v1515
      %v1517 = vpop.f32.mrb[0].mxu0
      %1518 = vmatprep.mubr.bf16.mxu0 0
      %1519 = vmatmul.mubr.bf16.gmra.mrb[0].mxu0 %v335
      %v1520 = vpop.f32.mrb[0].mxu0
      %v1521 = vadd.f32 %v1410, %v1520
      %v1522 = vpop.f32.mrb[0].mxu0
      %v1523 = vpop.f32.mrb[0].mxu0
      %v1524 = vadd.f32 %v1410, %v1523
      %v1525 = vpop.f32.mrb[0].mxu0
      %1526 = vmatprep.mubr.bf16.mxu0 0
      %1527 = vmatmul.mubr.bf16.gmra.mrb[0].mxu0 %v338
      %v1528 = vpop.f32.mrb[0].mxu0
      %v1529 = vadd.f32 %v1410, %v1528
      %v1530 = vpop.f32.mrb[0].mxu0
      %v1531 = vpop.f32.mrb[0].mxu0
      %v1532 = vadd.f32 %v1410, %v1531
      %v1533 = vpop.f32.mrb[0].mxu0
      %1534 = vmatprep.mubr.bf16.mxu0 0
      %1535 = vmatmul.mubr.bf16.gmra.mrb[0].mxu0 %v341
      %v1536 = vpop.f32.mrb[0].mxu0
      %v1537 = vadd.f32 %v1410, %v1536
      %v1538 = vpop.f32.mrb[0].mxu0
      %v1539 = vpop.f32.mrb[0].mxu0
      %v1540 = vadd.f32 %v1410, %v1539
      %v1541 = vpop.f32.mrb[0].mxu0
      %1542 = vmatprep.mubr.bf16.mxu0 0
      %1543 = vmatmul.mubr.bf16.gmra.mrb[0].mxu0 %v344
      %v1544 = vpop.f32.mrb[0].mxu0
      %v1545 = vadd.f32 %v1410, %v1544
      %v1546 = vpop.f32.mrb[0].mxu0
      %v1547 = vpop.f32.mrb[0].mxu0
      %v1548 = vadd.f32 %v1410, %v1547
      %v1549 = vpop.f32.mrb[0].mxu0
      %1550 = vmatprep.mubr.bf16.mxu0 0
      %1551 = vmatmul.mubr.bf16.gmra.mrb[0].mxu0 %v347
      %v1552 = vpop.f32.mrb[0].mxu0
      %v1553 = vadd.f32 %v1410, %v1552
      %v1554 = vpop.f32.mrb[0].mxu0
      %v1555 = vpop.f32.mrb[0].mxu0
      %v1556 = vadd.f32 %v1410, %v1555
      %v1557 = vpop.f32.mrb[0].mxu0
      %1558 = vmatprep.mubr.bf16.mxu0 0
      %1559 = vmatmul.mubr.bf16.gmra.mrb[0].mxu0 %v350
      %v1560 = vpop.f32.mrb[0].mxu0
      %v1561 = vadd.f32 %v1410, %v1560
      %v1562 = vpop.f32.mrb[0].mxu0
      %v1563 = vpop.f32.mrb[0].mxu0
      %v1564 = vadd.f32 %v1410, %v1563
      %v1565 = vpop.f32.mrb[0].mxu0
      %1566 = vmatprep.mubr.bf16.mxu0 0
      %1567 = vmatmul.mubr.bf16.gmra.mrb[0].mxu0 %v353
      %v1568 = vpop.f32.mrb[0].mxu0
      %v1569 = vadd.f32 %v1410, %v1568
      %v1570 = vpop.f32.mrb[0].mxu0
      %v1571 = vpop.f32.mrb[0].mxu0
      %v1572 = vadd.f32 %v1410, %v1571
      %v1573 = vpop.f32.mrb[0].mxu0
      %1574 = vdwg.mxu0
      %v1575 = vmax.f32 %v1449, 0.0
      %v1576 = vmax.f32 %v1452, 0.0
      %v1577 = vmax.f32 %v1457, 0.0
      %v1578 = vmax.f32 %v1460, 0.0
      %v1579 = vmax.f32 %v1465, 0.0
      %v1580 = vmax.f32 %v1468, 0.0
      %v1581 = vmax.f32 %v1473, 0.0
      %v1582 = vmax.f32 %v1476, 0.0
      %v1583 = vmax.f32 %v1481, 0.0
      %v1584 = vmax.f32 %v1484, 0.0
      %v1585 = vmax.f32 %v1489, 0.0
      %v1586 = vmax.f32 %v1492, 0.0
      %v1587 = vmax.f32 %v1497, 0.0
      %v1588 = vmax.f32 %v1500, 0.0
      %v1589 = vmax.f32 %v1505, 0.0
      %v1590 = vmax.f32 %v1508, 0.0
      %v1591 = vmax.f32 %v1513, 0.0
      %v1592 = vmax.f32 %v1516, 0.0
      %v1593 = vmax.f32 %v1521, 0.0
      %v1594 = vmax.f32 %v1524, 0.0
      %v1595 = vmax.f32 %v1529, 0.0
      %v1596 = vmax.f32 %v1532, 0.0
      %v1597 = vmax.f32 %v1537, 0.0
      %v1598 = vmax.f32 %v1540, 0.0
      %v1599 = vmax.f32 %v1545, 0.0
      %v1600 = vmax.f32 %v1548, 0.0
      %v1601 = vmax.f32 %v1553, 0.0
      %v1602 = vmax.f32 %v1556, 0.0
      %v1603 = vmax.f32 %v1561, 0.0
      %v1604 = vmax.f32 %v1564, 0.0
      %v1605 = vmax.f32 %v1569, 0.0
      %v1606 = vmax.f32 %v1572, 0.0
      %v1607 = vpack.c.bf16 %v1576, %v1575
      %v1608 = vpack.c.bf16 %v1578, %v1577
      %v1609 = vpack.c.bf16 %v1580, %v1579
      %v1610 = vpack.c.bf16 %v1582, %v1581
      %v1611 = vpack.c.bf16 %v1584, %v1583
      %v1612 = vpack.c.bf16 %v1586, %v1585
      %v1613 = vpack.c.bf16 %v1588, %v1587
      %v1614 = vpack.c.bf16 %v1590, %v1589
      %v1615 = vpack.c.bf16 %v1592, %v1591
      %v1616 = vpack.c.bf16 %v1594, %v1593
      %v1617 = vpack.c.bf16 %v1596, %v1595
      %v1618 = vpack.c.bf16 %v1598, %v1597
      %v1619 = vpack.c.bf16 %v1600, %v1599
      %v1620 = vpack.c.bf16 %v1602, %v1601
      %v1621 = vpack.c.bf16 %v1604, %v1603
      %v1622 = vpack.c.bf16 %v1606, %v1605
      %v1623 = vld [vmem:[%s2 + $0x8c] sm:$0xf]
      %v1624 = vld [vmem:[%s2 + $0x90] sm:$0xf]
      %v1627 = vunpack.c.l.b16 %v1623
      %v1628 = vunpack.c.l.b16 %v1624
      %v1629 = vpack.c.b16 %v1628, %v1627
      %v1632 = vsel %vm582, %v1607, 0
      %v1635 = vsel %vm582, %v1608, 0
      %v1638 = vsel %vm582, %v1609, 0
      %v1641 = vsel %vm582, %v1610, 0
      %v1644 = vsel %vm582, %v1611, 0
      %v1647 = vsel %vm582, %v1612, 0
      %v1650 = vsel %vm582, %v1613, 0
      %v1653 = vsel %vm582, %v1614, 0
      %v1656 = vsel %vm582, %v1615, 0
      %v1659 = vsel %vm582, %v1616, 0
      %v1662 = vsel %vm582, %v1617, 0
      %v1665 = vsel %vm582, %v1618, 0
      %v1668 = vsel %vm582, %v1619, 0
      %v1671 = vsel %vm582, %v1620, 0
      %v1674 = vsel %vm582, %v1621, 0
      %v1677 = vsel %vm582, %v1622, 0
      %1679 = vmatprep.subr.bf16.mxu0 0
      %1680 = vmatpush1.bf16.msra.mxu0 %v1629
      %1681 = vmatprep.subr.bf16.mxu0 0
      %1682 = vmatpush1.bf16.msra.mxu0 0
      %1683 = vmatprep.subr.bf16.mxu0 0
      %1684 = vmatpush1.bf16.msra.mxu0 0
      %1685 = vmatprep.subr.bf16.mxu0 0
      %1686 = vmatpush1.bf16.msra.mxu0 0
      %1687 = vmatprep.subr.bf16.mxu0 0
      %1688 = vmatpush1.bf16.msra.mxu0 0
      %1689 = vmatprep.subr.bf16.mxu0 0
      %1690 = vmatpush1.bf16.msra.mxu0 0
      %1691 = vmatprep.subr.bf16.mxu0 0
      %1692 = vmatpush1.bf16.msra.mxu0 0
      %1693 = vmatprep.subr.bf16.mxu0 0
      %1694 = vmatpush1.bf16.msra.mxu0 0
      %1695 = vmatprep.subr.bf16.mxu0 0
      %1696 = vmatpush1.bf16.msra.mxu0 0
      %1697 = vmatprep.subr.bf16.mxu0 0
      %1698 = vmatpush1.bf16.msra.mxu0 0
      %1699 = vmatprep.subr.bf16.mxu0 0
      %1700 = vmatpush1.bf16.msra.mxu0 0
      %1701 = vmatprep.subr.bf16.mxu0 0
      %1702 = vmatpush1.bf16.msra.mxu0 0
      %1703 = vmatprep.subr.bf16.mxu0 0
      %1704 = vmatpush1.bf16.msra.mxu0 0
      %1705 = vmatprep.subr.bf16.mxu0 0
      %1706 = vmatpush1.bf16.msra.mxu0 0
      %1707 = vmatprep.subr.bf16.mxu0 0
      %1708 = vmatpush1.bf16.msra.mxu0 0
      %1709 = vmatprep.subr.bf16.mxu0 0
      %1710 = vmatpush1.bf16.msra.mxu0 0
      %1711 = vmatprep.mubr.bf16.mxu0 0
      %1712 = vmatmul.mubr.bf16.gmra.mrb[0].mxu0 %v1632
      %v1713 = vpop.f32.mrb[0].mxu0
      %v1714 = vadd.f32 0.0, %v1713
      %v1715 = vpop.f32.mrb[0].mxu0
      %v1716 = vpop.f32.mrb[0].mxu0
      %v1717 = vadd.f32 0.0, %v1716
      %v1718 = vpop.f32.mrb[0].mxu0
      %1719 = vmatprep.mubr.bf16.mxu0 0
      %1720 = vmatmul.mubr.bf16.gmra.mrb[0].mxu0 %v1635
      %v1721 = vpop.f32.mrb[0].mxu0
      %v1722 = vadd.f32 0.0, %v1721
      %v1723 = vpop.f32.mrb[0].mxu0
      %v1724 = vpop.f32.mrb[0].mxu0
      %v1725 = vadd.f32 0.0, %v1724
      %v1726 = vpop.f32.mrb[0].mxu0
      %1727 = vmatprep.mubr.bf16.mxu0 0
      %1728 = vmatmul.mubr.bf16.gmra.mrb[0].mxu0 %v1638
      %v1729 = vpop.f32.mrb[0].mxu0
      %v1730 = vadd.f32 0.0, %v1729
      %v1731 = vpop.f32.mrb[0].mxu0
      %v1732 = vpop.f32.mrb[0].mxu0
      %v1733 = vadd.f32 0.0, %v1732
      %v1734 = vpop.f32.mrb[0].mxu0
      %1735 = vmatprep.mubr.bf16.mxu0 0
      %1736 = vmatmul.mubr.bf16.gmra.mrb[0].mxu0 %v1641
      %v1737 = vpop.f32.mrb[0].mxu0
      %v1738 = vadd.f32 0.0, %v1737
      %v1739 = vpop.f32.mrb[0].mxu0
      %v1740 = vpop.f32.mrb[0].mxu0
      %v1741 = vadd.f32 0.0, %v1740
      %v1742 = vpop.f32.mrb[0].mxu0
      %1743 = vmatprep.mubr.bf16.mxu0 0
      %1744 = vmatmul.mubr.bf16.gmra.mrb[0].mxu0 %v1644
      %v1745 = vpop.f32.mrb[0].mxu0
      %v1746 = vadd.f32 0.0, %v1745
      %v1747 = vpop.f32.mrb[0].mxu0
      %v1748 = vpop.f32.mrb[0].mxu0
      %v1749 = vadd.f32 0.0, %v1748
      %v1750 = vpop.f32.mrb[0].mxu0
      %1751 = vmatprep.mubr.bf16.mxu0 0
      %1752 = vmatmul.mubr.bf16.gmra.mrb[0].mxu0 %v1647
      %v1753 = vpop.f32.mrb[0].mxu0
      %v1754 = vadd.f32 0.0, %v1753
      %v1755 = vpop.f32.mrb[0].mxu0
      %v1756 = vpop.f32.mrb[0].mxu0
      %v1757 = vadd.f32 0.0, %v1756
      %v1758 = vpop.f32.mrb[0].mxu0
      %1759 = vmatprep.mubr.bf16.mxu0 0
      %1760 = vmatmul.mubr.bf16.gmra.mrb[0].mxu0 %v1650
      %v1761 = vpop.f32.mrb[0].mxu0
      %v1762 = vadd.f32 0.0, %v1761
      %v1763 = vpop.f32.mrb[0].mxu0
      %v1764 = vpop.f32.mrb[0].mxu0
      %v1765 = vadd.f32 0.0, %v1764
      %v1766 = vpop.f32.mrb[0].mxu0
      %1767 = vmatprep.mubr.bf16.mxu0 0
      %1768 = vmatmul.mubr.bf16.gmra.mrb[0].mxu0 %v1653
      %v1769 = vpop.f32.mrb[0].mxu0
      %v1770 = vadd.f32 0.0, %v1769
      %v1771 = vpop.f32.mrb[0].mxu0
      %v1772 = vpop.f32.mrb[0].mxu0
      %v1773 = vadd.f32 0.0, %v1772
      %v1774 = vpop.f32.mrb[0].mxu0
      %1775 = vmatprep.mubr.bf16.mxu0 0
      %1776 = vmatmul.mubr.bf16.gmra.mrb[0].mxu0 %v1656
      %v1777 = vpop.f32.mrb[0].mxu0
      %v1778 = vadd.f32 0.0, %v1777
      %v1779 = vpop.f32.mrb[0].mxu0
      %v1780 = vpop.f32.mrb[0].mxu0
      %v1781 = vadd.f32 0.0, %v1780
      %v1782 = vpop.f32.mrb[0].mxu0
      %1783 = vmatprep.mubr.bf16.mxu0 0
      %1784 = vmatmul.mubr.bf16.gmra.mrb[0].mxu0 %v1659
      %v1785 = vpop.f32.mrb[0].mxu0
      %v1786 = vadd.f32 0.0, %v1785
      %v1787 = vpop.f32.mrb[0].mxu0
      %v1788 = vpop.f32.mrb[0].mxu0
      %v1789 = vadd.f32 0.0, %v1788
      %v1790 = vpop.f32.mrb[0].mxu0
      %1791 = vmatprep.mubr.bf16.mxu0 0
      %1792 = vmatmul.mubr.bf16.gmra.mrb[0].mxu0 %v1662
      %v1793 = vpop.f32.mrb[0].mxu0
      %v1794 = vadd.f32 0.0, %v1793
      %v1795 = vpop.f32.mrb[0].mxu0
      %v1796 = vpop.f32.mrb[0].mxu0
      %v1797 = vadd.f32 0.0, %v1796
      %v1798 = vpop.f32.mrb[0].mxu0
      %1799 = vmatprep.mubr.bf16.mxu0 0
      %1800 = vmatmul.mubr.bf16.gmra.mrb[0].mxu0 %v1665
      %v1801 = vpop.f32.mrb[0].mxu0
      %v1802 = vadd.f32 0.0, %v1801
      %v1803 = vpop.f32.mrb[0].mxu0
      %v1804 = vpop.f32.mrb[0].mxu0
      %v1805 = vadd.f32 0.0, %v1804
      %v1806 = vpop.f32.mrb[0].mxu0
      %1807 = vmatprep.mubr.bf16.mxu0 0
      %1808 = vmatmul.mubr.bf16.gmra.mrb[0].mxu0 %v1668
      %v1809 = vpop.f32.mrb[0].mxu0
      %v1810 = vadd.f32 0.0, %v1809
      %v1811 = vpop.f32.mrb[0].mxu0
      %v1812 = vpop.f32.mrb[0].mxu0
      %v1813 = vadd.f32 0.0, %v1812
      %v1814 = vpop.f32.mrb[0].mxu0
      %1815 = vmatprep.mubr.bf16.mxu0 0
      %1816 = vmatmul.mubr.bf16.gmra.mrb[0].mxu0 %v1671
      %v1817 = vpop.f32.mrb[0].mxu0
      %v1818 = vadd.f32 0.0, %v1817
      %v1819 = vpop.f32.mrb[0].mxu0
      %v1820 = vpop.f32.mrb[0].mxu0
      %v1821 = vadd.f32 0.0, %v1820
      %v1822 = vpop.f32.mrb[0].mxu0
      %1823 = vmatprep.mubr.bf16.mxu0 0
      %1824 = vmatmul.mubr.bf16.gmra.mrb[0].mxu0 %v1674
      %v1825 = vpop.f32.mrb[0].mxu0
      %v1826 = vadd.f32 0.0, %v1825
      %v1827 = vpop.f32.mrb[0].mxu0
      %v1828 = vpop.f32.mrb[0].mxu0
      %v1829 = vadd.f32 0.0, %v1828
      %v1830 = vpop.f32.mrb[0].mxu0
      %1831 = vmatprep.mubr.bf16.mxu0 0
      %1832 = vmatmul.mubr.bf16.gmra.mrb[0].mxu0 %v1677
      %v1833 = vpop.f32.mrb[0].mxu0
      %v1834 = vadd.f32 0.0, %v1833
      %v1835 = vpop.f32.mrb[0].mxu0
      %v1836 = vpop.f32.mrb[0].mxu0
      %v1837 = vadd.f32 0.0, %v1836
      %v1838 = vpop.f32.mrb[0].mxu0
      %1839 = vdwg.mxu0
      %v1840 = vld [vmem:[%s2 + $0x94] sm:$0x1]
      %v1841 = vunpack.c.l.bf16 %v1840
      %v1842 = vlaneseq
      %v1843 = vshrl.u32 %v1842, 7
      %v1844 = vsub.s32 0, %v1843
      %v1845 = vrot.slane %v1841, %v1844
      %v1846 = vadd.f32 %v1714, %v1845
      %v1847 = vadd.f32 %v1717, %v1845
      %v1848 = vadd.f32 %v1722, %v1845
      %v1849 = vadd.f32 %v1725, %v1845
      %v1850 = vadd.f32 %v1730, %v1845
      %v1851 = vadd.f32 %v1733, %v1845
      %v1852 = vadd.f32 %v1738, %v1845
      %v1853 = vadd.f32 %v1741, %v1845
      %v1854 = vadd.f32 %v1746, %v1845
      %v1855 = vadd.f32 %v1749, %v1845
      %v1856 = vadd.f32 %v1754, %v1845
      %v1857 = vadd.f32 %v1757, %v1845
      %v1858 = vadd.f32 %v1762, %v1845
      %v1859 = vadd.f32 %v1765, %v1845
      %v1860 = vadd.f32 %v1770, %v1845
      %v1861 = vadd.f32 %v1773, %v1845
      %v1862 = vadd.f32 %v1778, %v1845
      %v1863 = vadd.f32 %v1781, %v1845
      %v1864 = vadd.f32 %v1786, %v1845
      %v1865 = vadd.f32 %v1789, %v1845
      %v1866 = vadd.f32 %v1794, %v1845
      %v1867 = vadd.f32 %v1797, %v1845
      %v1868 = vadd.f32 %v1802, %v1845
      %v1869 = vadd.f32 %v1805, %v1845
      %v1870 = vadd.f32 %v1810, %v1845
      %v1871 = vadd.f32 %v1813, %v1845
      %v1872 = vadd.f32 %v1818, %v1845
      %v1873 = vadd.f32 %v1821, %v1845
      %v1874 = vadd.f32 %v1826, %v1845
      %v1875 = vadd.f32 %v1829, %v1845
      %v1876 = vadd.f32 %v1834, %v1845
      %v1877 = vadd.f32 %v1837, %v1845
      %v1878 = vmax.f32 %v1846, 0.0
      %v1879 = vmax.f32 %v1847, 0.0
      %v1880 = vmax.f32 %v1848, 0.0
      %v1881 = vmax.f32 %v1849, 0.0
      %v1882 = vmax.f32 %v1850, 0.0
      %v1883 = vmax.f32 %v1851, 0.0
      %v1884 = vmax.f32 %v1852, 0.0
      %v1885 = vmax.f32 %v1853, 0.0
      %v1886 = vmax.f32 %v1854, 0.0
      %v1887 = vmax.f32 %v1855, 0.0
      %v1888 = vmax.f32 %v1856, 0.0
      %v1889 = vmax.f32 %v1857, 0.0
      %v1890 = vmax.f32 %v1858, 0.0
      %v1891 = vmax.f32 %v1859, 0.0
      %v1892 = vmax.f32 %v1860, 0.0
      %v1893 = vmax.f32 %v1861, 0.0
      %v1894 = vmax.f32 %v1862, 0.0
      %v1895 = vmax.f32 %v1863, 0.0
      %v1896 = vmax.f32 %v1864, 0.0
      %v1897 = vmax.f32 %v1865, 0.0
      %v1898 = vmax.f32 %v1866, 0.0
      %v1899 = vmax.f32 %v1867, 0.0
      %v1900 = vmax.f32 %v1868, 0.0
      %v1901 = vmax.f32 %v1869, 0.0
      %v1902 = vmax.f32 %v1870, 0.0
      %v1903 = vmax.f32 %v1871, 0.0
      %v1904 = vmax.f32 %v1872, 0.0
      %v1905 = vmax.f32 %v1873, 0.0
      %v1906 = vmax.f32 %v1874, 0.0
      %v1907 = vmax.f32 %v1875, 0.0
      %v1908 = vmax.f32 %v1876, 0.0
      %v1909 = vmax.f32 %v1877, 0.0
      %v1910 = vsel %vm862, %v1878, -inf
      %v1911 = vsel %vm862, %v1879, -inf
      %v1912 = vsel %vm862, %v1880, -inf
      %v1913 = vsel %vm862, %v1881, -inf
      %v1914 = vsel %vm862, %v1882, -inf
      %v1915 = vmax.f32 %v1910, %v1914
      %v1916 = vsel %vm862, %v1883, -inf
      %v1917 = vmax.f32 %v1911, %v1916
      %v1918 = vsel %vm862, %v1884, -inf
      %v1919 = vmax.f32 %v1912, %v1918
      %v1920 = vsel %vm862, %v1885, -inf
      %v1921 = vmax.f32 %v1913, %v1920
      %v1922 = vsel %vm862, %v1886, -inf
      %v1923 = vmax.f32 %v1915, %v1922
      %v1924 = vsel %vm862, %v1887, -inf
      %v1925 = vmax.f32 %v1917, %v1924
      %v1926 = vsel %vm862, %v1888, -inf
      %v1927 = vmax.f32 %v1919, %v1926
      %v1928 = vsel %vm862, %v1889, -inf
      %v1929 = vmax.f32 %v1921, %v1928
      %v1930 = vsel %vm862, %v1890, -inf
      %v1931 = vmax.f32 %v1923, %v1930
      %v1932 = vsel %vm862, %v1891, -inf
      %v1933 = vmax.f32 %v1925, %v1932
      %v1934 = vsel %vm862, %v1892, -inf
      %v1935 = vmax.f32 %v1927, %v1934
      %v1936 = vsel %vm862, %v1893, -inf
      %v1937 = vmax.f32 %v1929, %v1936
      %v1938 = vsel %vm862, %v1894, -inf
      %v1939 = vmax.f32 %v1931, %v1938
      %v1940 = vsel %vm862, %v1895, -inf
      %v1941 = vmax.f32 %v1933, %v1940
      %v1942 = vsel %vm862, %v1896, -inf
      %v1943 = vmax.f32 %v1935, %v1942
      %v1944 = vsel %vm862, %v1897, -inf
      %v1945 = vmax.f32 %v1937, %v1944
      %v1946 = vsel %vm862, %v1898, -inf
      %v1947 = vmax.f32 %v1939, %v1946
      %v1948 = vsel %vm862, %v1899, -inf
      %v1949 = vmax.f32 %v1941, %v1948
      %v1950 = vsel %vm862, %v1900, -inf
      %v1951 = vmax.f32 %v1943, %v1950
      %v1952 = vsel %vm862, %v1901, -inf
      %v1953 = vmax.f32 %v1945, %v1952
      %v1954 = vsel %vm862, %v1902, -inf
      %v1955 = vmax.f32 %v1947, %v1954
      %v1956 = vsel %vm862, %v1903, -inf
      %v1957 = vmax.f32 %v1949, %v1956
      %v1958 = vsel %vm862, %v1904, -inf
      %v1959 = vmax.f32 %v1951, %v1958
      %v1960 = vsel %vm862, %v1905, -inf
      %v1961 = vmax.f32 %v1953, %v1960
      %v1962 = vsel %vm862, %v1906, -inf
      %v1963 = vmax.f32 %v1955, %v1962
      %v1964 = vsel %vm862, %v1907, -inf
      %v1965 = vmax.f32 %v1957, %v1964
      %v1966 = vsel %vm862, %v1908, -inf
      %v1967 = vmax.f32 %v1959, %v1966
      %v1968 = vsel %vm862, %v1909, -inf
      %v1969 = vmax.f32 %v1961, %v1968
      %v1970 = vmax.f32 %v1963, %v1965
      %v1971 = vmax.f32 %v1967, %v1969
      %v1972 = vmax.f32 %v1970, %v1971
      %v1973 = vrot.slane %v1972, 4
      %v1974 = vmax.f32 %v1972, %v1973
      %v1975 = vrot.slane %v1974, 2
      %v1976 = vmax.f32 %v1974, %v1975
      %v1977 = vrot.slane %v1976, 1
      %v1978 = vmax.f32 %v1976, %v1977
      %v1979 = vld [vmem:[%s2 + $0xa8] sm:$0xf]
      %v1980 = vld [vmem:[%s2 + $0xac] sm:$0xf]
      %v1981 = vld [vmem:[%s2 + $0xb0] sm:$0xf]
      %v1982 = vld [vmem:[%s2 + $0xb4] sm:$0xf]
      %v1983 = vld [vmem:[%s2 + $0xb8] sm:$0x7]
      %v1985 = vsel %vm306, %v218, 0
      %v1988 = vsel %vm355, %v1983, 0
      %1990 = vmatprep.subr.bf16.mxu0 0
      %1991 = vmatpush1.bf16.msra.mxu0 %v1988
      %1992 = vmatprep.subr.bf16.mxu0 0
      %1993 = vmatpush1.bf16.msra.mxu0 0
      %1994 = vmatprep.subr.bf16.mxu0 0
      %1995 = vmatpush1.bf16.msra.mxu0 0
      %1996 = vmatprep.subr.bf16.mxu0 0
      %1997 = vmatpush1.bf16.msra.mxu0 0
      %1998 = vmatprep.subr.bf16.mxu0 0
      %1999 = vmatpush1.bf16.msra.mxu0 0
      %2000 = vmatprep.subr.bf16.mxu0 0
      %2001 = vmatpush1.bf16.msra.mxu0 0
      %2002 = vmatprep.subr.bf16.mxu0 0
      %2003 = vmatpush1.bf16.msra.mxu0 0
      %2004 = vmatprep.subr.bf16.mxu0 0
      %2005 = vmatpush1.bf16.msra.mxu0 0
      %2006 = vmatprep.subr.bf16.mxu0 0
      %2007 = vmatpush1.bf16.msra.mxu0 0
      %2008 = vmatprep.subr.bf16.mxu0 0
      %2009 = vmatpush1.bf16.msra.mxu0 0
      %2010 = vmatprep.subr.bf16.mxu0 0
      %2011 = vmatpush1.bf16.msra.mxu0 0
      %2012 = vmatprep.subr.bf16.mxu0 0
      %2013 = vmatpush1.bf16.msra.mxu0 0
      %2014 = vmatprep.subr.bf16.mxu0 0
      %2015 = vmatpush1.bf16.msra.mxu0 0
      %2016 = vmatprep.subr.bf16.mxu0 0
      %2017 = vmatpush1.bf16.msra.mxu0 0
      %2018 = vmatprep.subr.bf16.mxu0 0
      %2019 = vmatpush1.bf16.msra.mxu0 0
      %2020 = vmatprep.subr.bf16.mxu0 0
      %2021 = vmatpush1.bf16.msra.mxu0 0
      %2022 = vmatprep.mubr.f32.mxu0 0.0
      %2023 = vmatmul.mubr.f32.gmra.mrb[0].mxu0 %v1985
      %v2024 = vpop.f32.mrb[0].mxu0
      %v2025 = vadd.f32 0.0, %v2024
      %v2026 = vpop.f32.mrb[0].mxu0
      %2027 = vdwg.mxu0
      %v2032 = vunpack.c.l.b16 %v1979
      %v2033 = vunpack.c.l.b16 %v1980
      %v2034 = vunpack.c.l.b16 %v1981
      %v2035 = vunpack.c.l.b16 %v1982
      %v2036 = vpack.c.b16 %v2033, %v2032
      %v2037 = vpack.c.b16 %v2035, %v2034
      %v2041 = vsel %vm862, %v1978, 0
      %2043 = vmatprep.subr.bf16.mxu0 0
      %2044 = vmatpush1.bf16.msra.mxu0 %v2036
      %2045 = vmatprep.subr.bf16.mxu0 0
      %2046 = vmatpush1.bf16.msra.mxu0 %v2037
      %2047 = vmatprep.subr.bf16.mxu0 0
      %2048 = vmatpush1.bf16.msra.mxu0 0
      %2049 = vmatprep.subr.bf16.mxu0 0
      %2050 = vmatpush1.bf16.msra.mxu0 0
      %2051 = vmatprep.subr.bf16.mxu0 0
      %2052 = vmatpush1.bf16.msra.mxu0 0
      %2053 = vmatprep.subr.bf16.mxu0 0
      %2054 = vmatpush1.bf16.msra.mxu0 0
      %2055 = vmatprep.subr.bf16.mxu0 0
      %2056 = vmatpush1.bf16.msra.mxu0 0
      %2057 = vmatprep.subr.bf16.mxu0 0
      %2058 = vmatpush1.bf16.msra.mxu0 0
      %2059 = vmatprep.subr.bf16.mxu0 0
      %2060 = vmatpush1.bf16.msra.mxu0 0
      %2061 = vmatprep.subr.bf16.mxu0 0
      %2062 = vmatpush1.bf16.msra.mxu0 0
      %2063 = vmatprep.subr.bf16.mxu0 0
      %2064 = vmatpush1.bf16.msra.mxu0 0
      %2065 = vmatprep.subr.bf16.mxu0 0
      %2066 = vmatpush1.bf16.msra.mxu0 0
      %2067 = vmatprep.subr.bf16.mxu0 0
      %2068 = vmatpush1.bf16.msra.mxu0 0
      %2069 = vmatprep.subr.bf16.mxu0 0
      %2070 = vmatpush1.bf16.msra.mxu0 0
      %2071 = vmatprep.subr.bf16.mxu0 0
      %2072 = vmatpush1.bf16.msra.mxu0 0
      %2073 = vmatprep.subr.bf16.mxu0 0
      %2074 = vmatpush1.bf16.msra.mxu0 0
      %2075 = vmatprep.mubr.f32.mxu0 0.0
      %2076 = vmatmul.mubr.f32.gmra.mrb[0].mxu0 %v2041
      %v2077 = vpop.f32.mrb[0].mxu0
      %v2078 = vadd.f32 %v2025, %v2077
      %v2079 = vpop.f32.mrb[0].mxu0
      %2080 = vdwg.mxu0
      %v2081 = vld [vmem:[%s2 + $0xbc] sm:$0x1]
      %v2082 = vunpack.c.l.bf16 %v2081
      %v2083 = vadd.f32 %v2078, %v2082
      %v2084 = vpack.c.bf16 %v1879, %v1878
      %v2085 = vpack.c.bf16 %v1881, %v1880
      %v2086 = vpack.c.bf16 %v1883, %v1882
      %v2087 = vpack.c.bf16 %v1885, %v1884
      %v2088 = vpack.c.bf16 %v1887, %v1886
      %v2089 = vpack.c.bf16 %v1889, %v1888
      %v2090 = vpack.c.bf16 %v1891, %v1890
      %v2091 = vpack.c.bf16 %v1893, %v1892
      %v2092 = vpack.c.bf16 %v1895, %v1894
      %v2093 = vpack.c.bf16 %v1897, %v1896
      %v2094 = vpack.c.bf16 %v1899, %v1898
      %v2095 = vpack.c.bf16 %v1901, %v1900
      %v2096 = vpack.c.bf16 %v1903, %v1902
      %v2097 = vpack.c.bf16 %v1905, %v1904
      %v2098 = vpack.c.bf16 %v1907, %v1906
      %v2099 = vpack.c.bf16 %v1909, %v1908
      %v2100 = vld [vmem:[%s2 + $0x98] sm:$0xf]
      %v2101 = vld [vmem:[%s2 + $0x9c] sm:$0xf]
      %v2102 = vld [vmem:[%s2 + $0xa0] sm:$0xf]
      %v2103 = vld [vmem:[%s2 + $0xa4] sm:$0xf]
      %v2104 = vlaneseq
      %v2105 = vshrl.u32 %v2104, 7
      %v2106 = vsub.s32 0, %v2105
      %v2107 = vrot.slane %v2083, %v2106
      %v2112 = vunpack.c.l.b16 %v2100
      %v2113 = vunpack.c.l.b16 %v2101
      %v2114 = vunpack.c.l.b16 %v2102
      %v2115 = vunpack.c.l.b16 %v2103
      %v2116 = vpack.c.b16 %v2113, %v2112
      %v2117 = vpack.c.b16 %v2115, %v2114
      %v2121 = vsel %vm862, %v2084, 0
      %v2124 = vsel %vm862, %v2085, 0
      %v2127 = vsel %vm862, %v2086, 0
      %v2130 = vsel %vm862, %v2087, 0
      %v2133 = vsel %vm862, %v2088, 0
      %v2136 = vsel %vm862, %v2089, 0
      %v2139 = vsel %vm862, %v2090, 0
      %v2142 = vsel %vm862, %v2091, 0
      %v2145 = vsel %vm862, %v2092, 0
      %v2148 = vsel %vm862, %v2093, 0
      %v2151 = vsel %vm862, %v2094, 0
      %v2154 = vsel %vm862, %v2095, 0
      %v2157 = vsel %vm862, %v2096, 0
      %v2160 = vsel %vm862, %v2097, 0
      %v2163 = vsel %vm862, %v2098, 0
      %v2166 = vsel %vm862, %v2099, 0
      %2168 = vmatprep.subr.bf16.mxu0 0
      %2169 = vmatpush1.bf16.msra.mxu0 %v2116
      %2170 = vmatprep.subr.bf16.mxu0 0
      %2171 = vmatpush1.bf16.msra.mxu0 %v2117
      %2172 = vmatprep.subr.bf16.mxu0 0
      %2173 = vmatpush1.bf16.msra.mxu0 0
      %2174 = vmatprep.subr.bf16.mxu0 0
      %2175 = vmatpush1.bf16.msra.mxu0 0
      %2176 = vmatprep.subr.bf16.mxu0 0
      %2177 = vmatpush1.bf16.msra.mxu0 0
      %2178 = vmatprep.subr.bf16.mxu0 0
      %2179 = vmatpush1.bf16.msra.mxu0 0
      %2180 = vmatprep.subr.bf16.mxu0 0
      %2181 = vmatpush1.bf16.msra.mxu0 0
      %2182 = vmatprep.subr.bf16.mxu0 0
      %2183 = vmatpush1.bf16.msra.mxu0 0
      %2184 = vmatprep.subr.bf16.mxu0 0
      %2185 = vmatpush1.bf16.msra.mxu0 0
      %2186 = vmatprep.subr.bf16.mxu0 0
      %2187 = vmatpush1.bf16.msra.mxu0 0
      %2188 = vmatprep.subr.bf16.mxu0 0
      %2189 = vmatpush1.bf16.msra.mxu0 0
      %2190 = vmatprep.subr.bf16.mxu0 0
      %2191 = vmatpush1.bf16.msra.mxu0 0
      %2192 = vmatprep.subr.bf16.mxu0 0
      %2193 = vmatpush1.bf16.msra.mxu0 0
      %2194 = vmatprep.subr.bf16.mxu0 0
      %2195 = vmatpush1.bf16.msra.mxu0 0
      %2196 = vmatprep.subr.bf16.mxu0 0
      %2197 = vmatpush1.bf16.msra.mxu0 0
      %2198 = vmatprep.subr.bf16.mxu0 0
      %2199 = vmatpush1.bf16.msra.mxu0 0
      %2200 = vmatprep.mubr.bf16.mxu0 0
      %2201 = vmatmul.mubr.bf16.gmra.mrb[0].mxu0 %v2121
      %v2202 = vpop.f32.mrb[0].mxu0
      %v2203 = vadd.f32 %v2107, %v2202
      %v2204 = vpop.f32.mrb[0].mxu0
      %v2205 = vpop.f32.mrb[0].mxu0
      %v2206 = vadd.f32 %v2107, %v2205
      %v2207 = vpop.f32.mrb[0].mxu0
      %2208 = vmatprep.mubr.bf16.mxu0 0
      %2209 = vmatmul.mubr.bf16.gmra.mrb[0].mxu0 %v2124
      %v2210 = vpop.f32.mrb[0].mxu0
      %v2211 = vadd.f32 %v2107, %v2210
      %v2212 = vpop.f32.mrb[0].mxu0
      %v2213 = vpop.f32.mrb[0].mxu0
      %v2214 = vadd.f32 %v2107, %v2213
      %v2215 = vpop.f32.mrb[0].mxu0
      %2216 = vmatprep.mubr.bf16.mxu0 0
      %2217 = vmatmul.mubr.bf16.gmra.mrb[0].mxu0 %v2127
      %v2218 = vpop.f32.mrb[0].mxu0
      %v2219 = vadd.f32 %v2107, %v2218
      %v2220 = vpop.f32.mrb[0].mxu0
      %v2221 = vpop.f32.mrb[0].mxu0
      %v2222 = vadd.f32 %v2107, %v2221
      %v2223 = vpop.f32.mrb[0].mxu0
      %2224 = vmatprep.mubr.bf16.mxu0 0
      %2225 = vmatmul.mubr.bf16.gmra.mrb[0].mxu0 %v2130
      %v2226 = vpop.f32.mrb[0].mxu0
      %v2227 = vadd.f32 %v2107, %v2226
      %v2228 = vpop.f32.mrb[0].mxu0
      %v2229 = vpop.f32.mrb[0].mxu0
      %v2230 = vadd.f32 %v2107, %v2229
      %v2231 = vpop.f32.mrb[0].mxu0
      %2232 = vmatprep.mubr.bf16.mxu0 0
      %2233 = vmatmul.mubr.bf16.gmra.mrb[0].mxu0 %v2133
      %v2234 = vpop.f32.mrb[0].mxu0
      %v2235 = vadd.f32 %v2107, %v2234
      %v2236 = vpop.f32.mrb[0].mxu0
      %v2237 = vpop.f32.mrb[0].mxu0
      %v2238 = vadd.f32 %v2107, %v2237
      %v2239 = vpop.f32.mrb[0].mxu0
      %2240 = vmatprep.mubr.bf16.mxu0 0
      %2241 = vmatmul.mubr.bf16.gmra.mrb[0].mxu0 %v2136
      %v2242 = vpop.f32.mrb[0].mxu0
      %v2243 = vadd.f32 %v2107, %v2242
      %v2244 = vpop.f32.mrb[0].mxu0
      %v2245 = vpop.f32.mrb[0].mxu0
      %v2246 = vadd.f32 %v2107, %v2245
      %v2247 = vpop.f32.mrb[0].mxu0
      %2248 = vmatprep.mubr.bf16.mxu0 0
      %2249 = vmatmul.mubr.bf16.gmra.mrb[0].mxu0 %v2139
      %v2250 = vpop.f32.mrb[0].mxu0
      %v2251 = vadd.f32 %v2107, %v2250
      %v2252 = vpop.f32.mrb[0].mxu0
      %v2253 = vpop.f32.mrb[0].mxu0
      %v2254 = vadd.f32 %v2107, %v2253
      %v2255 = vpop.f32.mrb[0].mxu0
      %2256 = vmatprep.mubr.bf16.mxu0 0
      %2257 = vmatmul.mubr.bf16.gmra.mrb[0].mxu0 %v2142
      %v2258 = vpop.f32.mrb[0].mxu0
      %v2259 = vadd.f32 %v2107, %v2258
      %v2260 = vpop.f32.mrb[0].mxu0
      %v2261 = vpop.f32.mrb[0].mxu0
      %v2262 = vadd.f32 %v2107, %v2261
      %v2263 = vpop.f32.mrb[0].mxu0
      %2264 = vmatprep.mubr.bf16.mxu0 0
      %2265 = vmatmul.mubr.bf16.gmra.mrb[0].mxu0 %v2145
      %v2266 = vpop.f32.mrb[0].mxu0
      %v2267 = vadd.f32 %v2107, %v2266
      %v2268 = vpop.f32.mrb[0].mxu0
      %v2269 = vpop.f32.mrb[0].mxu0
      %v2270 = vadd.f32 %v2107, %v2269
      %v2271 = vpop.f32.mrb[0].mxu0
      %2272 = vmatprep.mubr.bf16.mxu0 0
      %2273 = vmatmul.mubr.bf16.gmra.mrb[0].mxu0 %v2148
      %v2274 = vpop.f32.mrb[0].mxu0
      %v2275 = vadd.f32 %v2107, %v2274
      %v2276 = vpop.f32.mrb[0].mxu0
      %v2277 = vpop.f32.mrb[0].mxu0
      %v2278 = vadd.f32 %v2107, %v2277
      %v2279 = vpop.f32.mrb[0].mxu0
      %2280 = vmatprep.mubr.bf16.mxu0 0
      %2281 = vmatmul.mubr.bf16.gmra.mrb[0].mxu0 %v2151
      %v2282 = vpop.f32.mrb[0].mxu0
      %v2283 = vadd.f32 %v2107, %v2282
      %v2284 = vpop.f32.mrb[0].mxu0
      %v2285 = vpop.f32.mrb[0].mxu0
      %v2286 = vadd.f32 %v2107, %v2285
      %v2287 = vpop.f32.mrb[0].mxu0
      %2288 = vmatprep.mubr.bf16.mxu0 0
      %2289 = vmatmul.mubr.bf16.gmra.mrb[0].mxu0 %v2154
      %v2290 = vpop.f32.mrb[0].mxu0
      %v2291 = vadd.f32 %v2107, %v2290
      %v2292 = vpop.f32.mrb[0].mxu0
      %v2293 = vpop.f32.mrb[0].mxu0
      %v2294 = vadd.f32 %v2107, %v2293
      %v2295 = vpop.f32.mrb[0].mxu0
      %2296 = vmatprep.mubr.bf16.mxu0 0
      %2297 = vmatmul.mubr.bf16.gmra.mrb[0].mxu0 %v2157
      %v2298 = vpop.f32.mrb[0].mxu0
      %v2299 = vadd.f32 %v2107, %v2298
      %v2300 = vpop.f32.mrb[0].mxu0
      %v2301 = vpop.f32.mrb[0].mxu0
      %v2302 = vadd.f32 %v2107, %v2301
      %v2303 = vpop.f32.mrb[0].mxu0
      %2304 = vmatprep.mubr.bf16.mxu0 0
      %2305 = vmatmul.mubr.bf16.gmra.mrb[0].mxu0 %v2160
      %v2306 = vpop.f32.mrb[0].mxu0
      %v2307 = vadd.f32 %v2107, %v2306
      %v2308 = vpop.f32.mrb[0].mxu0
      %v2309 = vpop.f32.mrb[0].mxu0
      %v2310 = vadd.f32 %v2107, %v2309
      %v2311 = vpop.f32.mrb[0].mxu0
      %2312 = vmatprep.mubr.bf16.mxu0 0
      %2313 = vmatmul.mubr.bf16.gmra.mrb[0].mxu0 %v2163
      %v2314 = vpop.f32.mrb[0].mxu0
      %v2315 = vadd.f32 %v2107, %v2314
      %v2316 = vpop.f32.mrb[0].mxu0
      %v2317 = vpop.f32.mrb[0].mxu0
      %v2318 = vadd.f32 %v2107, %v2317
      %v2319 = vpop.f32.mrb[0].mxu0
      %2320 = vmatprep.mubr.bf16.mxu0 0
      %2321 = vmatmul.mubr.bf16.gmra.mrb[0].mxu0 %v2166
      %v2322 = vpop.f32.mrb[0].mxu0
      %v2323 = vadd.f32 %v2107, %v2322
      %v2324 = vpop.f32.mrb[0].mxu0
      %v2325 = vpop.f32.mrb[0].mxu0
      %v2326 = vadd.f32 %v2107, %v2325
      %v2327 = vpop.f32.mrb[0].mxu0
      %2328 = vdwg.mxu0
      %v2329 = vmax.f32 %v2203, 0.0
      %v2330 = vmax.f32 %v2206, 0.0
      %v2331 = vmax.f32 %v2211, 0.0
      %v2332 = vmax.f32 %v2214, 0.0
      %v2333 = vmax.f32 %v2219, 0.0
      %v2334 = vmax.f32 %v2222, 0.0
      %v2335 = vmax.f32 %v2227, 0.0
      %v2336 = vmax.f32 %v2230, 0.0
      %v2337 = vmax.f32 %v2235, 0.0
      %v2338 = vmax.f32 %v2238, 0.0
      %v2339 = vmax.f32 %v2243, 0.0
      %v2340 = vmax.f32 %v2246, 0.0
      %v2341 = vmax.f32 %v2251, 0.0
      %v2342 = vmax.f32 %v2254, 0.0
      %v2343 = vmax.f32 %v2259, 0.0
      %v2344 = vmax.f32 %v2262, 0.0
      %v2345 = vmax.f32 %v2267, 0.0
      %v2346 = vmax.f32 %v2270, 0.0
      %v2347 = vmax.f32 %v2275, 0.0
      %v2348 = vmax.f32 %v2278, 0.0
      %v2349 = vmax.f32 %v2283, 0.0
      %v2350 = vmax.f32 %v2286, 0.0
      %v2351 = vmax.f32 %v2291, 0.0
      %v2352 = vmax.f32 %v2294, 0.0
      %v2353 = vmax.f32 %v2299, 0.0
      %v2354 = vmax.f32 %v2302, 0.0
      %v2355 = vmax.f32 %v2307, 0.0
      %v2356 = vmax.f32 %v2310, 0.0
      %v2357 = vmax.f32 %v2315, 0.0
      %v2358 = vmax.f32 %v2318, 0.0
      %v2359 = vmax.f32 %v2323, 0.0
      %v2360 = vmax.f32 %v2326, 0.0
      %v2361 = vsel %vm1104, %v2329, -inf
      %v2362 = vsel %vm1104, %v2330, -inf
      %v2363 = vsel %vm1104, %v2331, -inf
      %v2364 = vsel %vm1104, %v2332, -inf
      %v2365 = vsel %vm1104, %v2333, -inf
      %v2366 = vmax.f32 %v2361, %v2365
      %v2367 = vsel %vm1104, %v2334, -inf
      %v2368 = vmax.f32 %v2362, %v2367
      %v2369 = vsel %vm1104, %v2335, -inf
      %v2370 = vmax.f32 %v2363, %v2369
      %v2371 = vsel %vm1104, %v2336, -inf
      %v2372 = vmax.f32 %v2364, %v2371
      %v2373 = vsel %vm1104, %v2337, -inf
      %v2374 = vmax.f32 %v2366, %v2373
      %v2375 = vsel %vm1104, %v2338, -inf
      %v2376 = vmax.f32 %v2368, %v2375
      %v2377 = vsel %vm1104, %v2339, -inf
      %v2378 = vmax.f32 %v2370, %v2377
      %v2379 = vsel %vm1104, %v2340, -inf
      %v2380 = vmax.f32 %v2372, %v2379
      %v2381 = vsel %vm1104, %v2341, -inf
      %v2382 = vmax.f32 %v2374, %v2381
      %v2383 = vsel %vm1104, %v2342, -inf
      %v2384 = vmax.f32 %v2376, %v2383
      %v2385 = vsel %vm1104, %v2343, -inf
      %v2386 = vmax.f32 %v2378, %v2385
      %v2387 = vsel %vm1104, %v2344, -inf
      %v2388 = vmax.f32 %v2380, %v2387
      %v2389 = vsel %vm1104, %v2345, -inf
      %v2390 = vmax.f32 %v2382, %v2389
      %v2391 = vsel %vm1104, %v2346, -inf
      %v2392 = vmax.f32 %v2384, %v2391
      %v2393 = vsel %vm1104, %v2347, -inf
      %v2394 = vmax.f32 %v2386, %v2393
      %v2395 = vsel %vm1104, %v2348, -inf
      %v2396 = vmax.f32 %v2388, %v2395
      %v2397 = vsel %vm1104, %v2349, -inf
      %v2398 = vmax.f32 %v2390, %v2397
      %v2399 = vsel %vm1104, %v2350, -inf
      %v2400 = vmax.f32 %v2392, %v2399
      %v2401 = vsel %vm1104, %v2351, -inf
      %v2402 = vmax.f32 %v2394, %v2401
      %v2403 = vsel %vm1104, %v2352, -inf
      %v2404 = vmax.f32 %v2396, %v2403
      %v2405 = vsel %vm1104, %v2353, -inf
      %v2406 = vmax.f32 %v2398, %v2405
      %v2407 = vsel %vm1104, %v2354, -inf
      %v2408 = vmax.f32 %v2400, %v2407
      %v2409 = vsel %vm1104, %v2355, -inf
      %v2410 = vmax.f32 %v2402, %v2409
      %v2411 = vsel %vm1104, %v2356, -inf
      %v2412 = vmax.f32 %v2404, %v2411
      %v2413 = vsel %vm1104, %v2357, -inf
      %v2414 = vmax.f32 %v2406, %v2413
      %v2415 = vsel %vm1104, %v2358, -inf
      %v2416 = vmax.f32 %v2408, %v2415
      %v2417 = vsel %vm1104, %v2359, -inf
      %v2418 = vmax.f32 %v2410, %v2417
      %v2419 = vsel %vm1104, %v2360, -inf
      %v2420 = vmax.f32 %v2412, %v2419
      %v2421 = vmax.f32 %v2414, %v2416
      %v2422 = vmax.f32 %v2418, %v2420
      %v2423 = vmax.f32 %v2421, %v2422
      %v2424 = vrot.slane %v2423, 4
      %v2425 = vmax.f32 %v2423, %v2424
      %v2426 = vrot.slane %v2425, 2
      %v2427 = vmax.f32 %v2425, %v2426
      %v2428 = vrot.slane %v2427, 1
      %v2429 = vmax.f32 %v2427, %v2428
      %v2430 = vld [vmem:[%s2 + $0xc0] sm:$0xf]
      %v2431 = vld [vmem:[%s2 + $0xc4] sm:$0xf]
      %v2432 = vld [vmem:[%s2 + $0xc8] sm:$0xf]
      %v2433 = vld [vmem:[%s2 + $0xcc] sm:$0xf]
      %v2434 = vld [vmem:[%s2 + $0xd0] sm:$0xf]
      %v2435 = vld [vmem:[%s2 + $0xd4] sm:$0xf]
      %v2436 = vld [vmem:[%s2 + $0xd8] sm:$0xf]
      %v2437 = vld [vmem:[%s2 + $0xdc] sm:$0xf]
      %v2438 = vld [vmem:[%s2 + $0xe0] sm:$0x1]
      %v2439 = vunpack.c.l.bf16 %v2438
      %v2448 = vunpack.c.l.b16 %v2430
      %v2449 = vunpack.c.l.b16 %v2431
      %v2450 = vunpack.c.l.b16 %v2432
      %v2451 = vunpack.c.l.b16 %v2433
      %v2452 = vunpack.c.l.b16 %v2434
      %v2453 = vunpack.c.l.b16 %v2435
      %v2454 = vunpack.c.l.b16 %v2436
      %v2455 = vunpack.c.l.b16 %v2437
      %v2456 = vpack.c.b16 %v2449, %v2448
      %v2457 = vpack.c.b16 %v2451, %v2450
      %v2458 = vpack.c.b16 %v2453, %v2452
      %v2459 = vpack.c.b16 %v2455, %v2454
      %v2465 = vsel %vm1104, %v2429, 0
      %2467 = vmatprep.subr.bf16.mxu0 0
      %2468 = vmatpush1.bf16.msra.mxu0 %v2456
      %2469 = vmatprep.subr.bf16.mxu0 0
      %2470 = vmatpush1.bf16.msra.mxu0 %v2457
      %2471 = vmatprep.subr.bf16.mxu0 0
      %2472 = vmatpush1.bf16.msra.mxu0 %v2458
      %2473 = vmatprep.subr.bf16.mxu0 0
      %2474 = vmatpush1.bf16.msra.mxu0 %v2459
      %2475 = vmatprep.subr.bf16.mxu0 0
      %2476 = vmatpush1.bf16.msra.mxu0 0
      %2477 = vmatprep.subr.bf16.mxu0 0
      %2478 = vmatpush1.bf16.msra.mxu0 0
      %2479 = vmatprep.subr.bf16.mxu0 0
      %2480 = vmatpush1.bf16.msra.mxu0 0
      %2481 = vmatprep.subr.bf16.mxu0 0
      %2482 = vmatpush1.bf16.msra.mxu0 0
      %2483 = vmatprep.subr.bf16.mxu0 0
      %2484 = vmatpush1.bf16.msra.mxu0 0
      %2485 = vmatprep.subr.bf16.mxu0 0
      %2486 = vmatpush1.bf16.msra.mxu0 0
      %2487 = vmatprep.subr.bf16.mxu0 0
      %2488 = vmatpush1.bf16.msra.mxu0 0
      %2489 = vmatprep.subr.bf16.mxu0 0
      %2490 = vmatpush1.bf16.msra.mxu0 0
      %2491 = vmatprep.subr.bf16.mxu0 0
      %2492 = vmatpush1.bf16.msra.mxu0 0
      %2493 = vmatprep.subr.bf16.mxu0 0
      %2494 = vmatpush1.bf16.msra.mxu0 0
      %2495 = vmatprep.subr.bf16.mxu0 0
      %2496 = vmatpush1.bf16.msra.mxu0 0
      %2497 = vmatprep.subr.bf16.mxu0 0
      %2498 = vmatpush1.bf16.msra.mxu0 0
      %2499 = vmatprep.mubr.f32.mxu0 0.0
      %2500 = vmatmul.mubr.f32.gmra.mrb[0].mxu0 %v2465
      %v2501 = vpop.f32.mrb[0].mxu0
      %v2502 = vadd.f32 %v2439, %v2501
      %v2503 = vpop.f32.mrb[0].mxu0
      %2504 = vdwg.mxu0
      %v2505 = vlaneseq
      %v2506 = vshrl.u32 %v2505, 7
      %v2507 = vsub.s32 0, %v2506
      %v2508 = vrot.slane %v2502, %v2507
      %2510 = vrot.lane.b32.xlu0 %v2508, 32
      %v2511 = vpop.permute.xlu0 %2510
      %v2513 = vadd.f32 %v1714, %v2511
      %v2514 = vadd.f32 %v1717, %v2511
      %v2515 = vadd.f32 %v1722, %v2511
      %v2516 = vadd.f32 %v1725, %v2511
      %v2517 = vadd.f32 %v1730, %v2511
      %v2518 = vadd.f32 %v1733, %v2511
      %v2519 = vadd.f32 %v1738, %v2511
      %v2520 = vadd.f32 %v1741, %v2511
      %v2521 = vadd.f32 %v1746, %v2511
      %v2522 = vadd.f32 %v1749, %v2511
      %v2523 = vadd.f32 %v1754, %v2511
      %v2524 = vadd.f32 %v1757, %v2511
      %v2525 = vadd.f32 %v1762, %v2511
      %v2526 = vadd.f32 %v1765, %v2511
      %v2527 = vadd.f32 %v1770, %v2511
      %v2528 = vadd.f32 %v1773, %v2511
      %v2529 = vadd.f32 %v1778, %v2511
      %v2530 = vadd.f32 %v1781, %v2511
      %v2531 = vadd.f32 %v1786, %v2511
      %v2532 = vadd.f32 %v1789, %v2511
      %v2533 = vadd.f32 %v1794, %v2511
      %v2534 = vadd.f32 %v1797, %v2511
      %v2535 = vadd.f32 %v1802, %v2511
      %v2536 = vadd.f32 %v1805, %v2511
      %v2537 = vadd.f32 %v1810, %v2511
      %v2538 = vadd.f32 %v1813, %v2511
      %v2539 = vadd.f32 %v1818, %v2511
      %v2540 = vadd.f32 %v1821, %v2511
      %v2541 = vadd.f32 %v1826, %v2511
      %v2542 = vadd.f32 %v1829, %v2511
      %v2543 = vadd.f32 %v1834, %v2511
      %v2544 = vadd.f32 %v1837, %v2511
      %v2545 = vmax.f32 %v2513, 0.0
      %v2546 = vmax.f32 %v2514, 0.0
      %v2547 = vmax.f32 %v2515, 0.0
      %v2548 = vmax.f32 %v2516, 0.0
      %v2549 = vmax.f32 %v2517, 0.0
      %v2550 = vmax.f32 %v2518, 0.0
      %v2551 = vmax.f32 %v2519, 0.0
      %v2552 = vmax.f32 %v2520, 0.0
      %v2553 = vmax.f32 %v2521, 0.0
      %v2554 = vmax.f32 %v2522, 0.0
      %v2555 = vmax.f32 %v2523, 0.0
      %v2556 = vmax.f32 %v2524, 0.0
      %v2557 = vmax.f32 %v2525, 0.0
      %v2558 = vmax.f32 %v2526, 0.0
      %v2559 = vmax.f32 %v2527, 0.0
      %v2560 = vmax.f32 %v2528, 0.0
      %v2561 = vmax.f32 %v2529, 0.0
      %v2562 = vmax.f32 %v2530, 0.0
      %v2563 = vmax.f32 %v2531, 0.0
      %v2564 = vmax.f32 %v2532, 0.0
      %v2565 = vmax.f32 %v2533, 0.0
      %v2566 = vmax.f32 %v2534, 0.0
      %v2567 = vmax.f32 %v2535, 0.0
      %v2568 = vmax.f32 %v2536, 0.0
      %v2569 = vmax.f32 %v2537, 0.0
      %v2570 = vmax.f32 %v2538, 0.0
      %v2571 = vmax.f32 %v2539, 0.0
      %v2572 = vmax.f32 %v2540, 0.0
      %v2573 = vmax.f32 %v2541, 0.0
      %v2574 = vmax.f32 %v2542, 0.0
      %v2575 = vmax.f32 %v2543, 0.0
      %v2576 = vmax.f32 %v2544, 0.0
      %v2577 = vpack.c.bf16 %v2546, %v2545
      %v2578 = vpack.c.bf16 %v2548, %v2547
      %v2579 = vpack.c.bf16 %v2550, %v2549
      %v2580 = vpack.c.bf16 %v2552, %v2551
      %v2581 = vpack.c.bf16 %v2554, %v2553
      %v2582 = vpack.c.bf16 %v2556, %v2555
      %v2583 = vpack.c.bf16 %v2558, %v2557
      %v2584 = vpack.c.bf16 %v2560, %v2559
      %v2585 = vpack.c.bf16 %v2562, %v2561
      %v2586 = vpack.c.bf16 %v2564, %v2563
      %v2587 = vpack.c.bf16 %v2566, %v2565
      %v2588 = vpack.c.bf16 %v2568, %v2567
      %v2589 = vpack.c.bf16 %v2570, %v2569
      %v2590 = vpack.c.bf16 %v2572, %v2571
      %v2591 = vpack.c.bf16 %v2574, %v2573
      %v2592 = vpack.c.bf16 %v2576, %v2575
      %v2593 = vld [vmem:[%s2 + $0xe4] sm:$0xf]
      %v2594 = vld [vmem:[%s2 + $0xe8] sm:$0xf]
      %v2595 = vld [vmem:[%s2 + $0xec] sm:$0xf]
      %v2596 = vld [vmem:[%s2 + $0xf0] sm:$0xf]
      %v2597 = vld [vmem:[%s2 + $0xf4] sm:$0x1]
      %v2598 = vunpack.c.l.bf16 %v2597
      %v2599 = vlaneseq
      %v2600 = vshrl.u32 %v2599, 7
      %v2601 = vsub.s32 0, %v2600
      %v2602 = vrot.slane %v2598, %v2601
      %2619 = vrot.lane.b32.xlu0 %v2577, 96
      %v2620 = vpop.permute.xlu0 %2619
      %2621 = vrot.lane.b32.xlu0 %v2578, 96
      %v2622 = vpop.permute.xlu0 %2621
      %2623 = vrot.lane.b32.xlu0 %v2579, 96
      %v2624 = vpop.permute.xlu0 %2623
      %2625 = vrot.lane.b32.xlu0 %v2580, 96
      %v2626 = vpop.permute.xlu0 %2625
      %2627 = vrot.lane.b32.xlu0 %v2581, 96
      %v2628 = vpop.permute.xlu0 %2627
      %2629 = vrot.lane.b32.xlu0 %v2582, 96
      %v2630 = vpop.permute.xlu0 %2629
      %2631 = vrot.lane.b32.xlu0 %v2583, 96
      %v2632 = vpop.permute.xlu0 %2631
      %2633 = vrot.lane.b32.xlu0 %v2584, 96
      %v2634 = vpop.permute.xlu0 %2633
      %2635 = vrot.lane.b32.xlu0 %v2585, 96
      %v2636 = vpop.permute.xlu0 %2635
      %2637 = vrot.lane.b32.xlu0 %v2586, 96
      %v2638 = vpop.permute.xlu0 %2637
      %2639 = vrot.lane.b32.xlu0 %v2587, 96
      %v2640 = vpop.permute.xlu0 %2639
      %2641 = vrot.lane.b32.xlu0 %v2588, 96
      %v2642 = vpop.permute.xlu0 %2641
      %2643 = vrot.lane.b32.xlu0 %v2589, 96
      %v2644 = vpop.permute.xlu0 %2643
      %2645 = vrot.lane.b32.xlu0 %v2590, 96
      %v2646 = vpop.permute.xlu0 %2645
      %2647 = vrot.lane.b32.xlu0 %v2591, 96
      %v2648 = vpop.permute.xlu0 %2647
      %2649 = vrot.lane.b32.xlu0 %v2592, 96
      %v2650 = vpop.permute.xlu0 %2649
      %v2655 = vunpack.c.l.b16 %v2593
      %v2656 = vunpack.c.l.b16 %v2594
      %v2657 = vunpack.c.l.b16 %v2595
      %v2658 = vunpack.c.l.b16 %v2596
      %v2659 = vpack.c.b16 %v2656, %v2655
      %v2660 = vpack.c.b16 %v2658, %v2657
      %v2664 = vsel %vm862, %v2620, 0
      %v2667 = vsel %vm862, %v2622, 0
      %v2670 = vsel %vm862, %v2624, 0
      %v2673 = vsel %vm862, %v2626, 0
      %v2676 = vsel %vm862, %v2628, 0
      %v2679 = vsel %vm862, %v2630, 0
      %v2682 = vsel %vm862, %v2632, 0
      %v2685 = vsel %vm862, %v2634, 0
      %v2688 = vsel %vm862, %v2636, 0
      %v2691 = vsel %vm862, %v2638, 0
      %v2694 = vsel %vm862, %v2640, 0
      %v2697 = vsel %vm862, %v2642, 0
      %v2700 = vsel %vm862, %v2644, 0
      %v2703 = vsel %vm862, %v2646, 0
      %v2706 = vsel %vm862, %v2648, 0
      %v2709 = vsel %vm862, %v2650, 0
      %2711 = vmatprep.subr.bf16.mxu0 0
      %2712 = vmatpush1.bf16.msra.mxu0 %v2659
      %2713 = vmatprep.subr.bf16.mxu0 0
      %2714 = vmatpush1.bf16.msra.mxu0 %v2660
      %2715 = vmatprep.subr.bf16.mxu0 0
      %2716 = vmatpush1.bf16.msra.mxu0 0
      %2717 = vmatprep.subr.bf16.mxu0 0
      %2718 = vmatpush1.bf16.msra.mxu0 0
      %2719 = vmatprep.subr.bf16.mxu0 0
      %2720 = vmatpush1.bf16.msra.mxu0 0
      %2721 = vmatprep.subr.bf16.mxu0 0
      %2722 = vmatpush1.bf16.msra.mxu0 0
      %2723 = vmatprep.subr.bf16.mxu0 0
      %2724 = vmatpush1.bf16.msra.mxu0 0
      %2725 = vmatprep.subr.bf16.mxu0 0
      %2726 = vmatpush1.bf16.msra.mxu0 0
      %2727 = vmatprep.subr.bf16.mxu0 0
      %2728 = vmatpush1.bf16.msra.mxu0 0
      %2729 = vmatprep.subr.bf16.mxu0 0
      %2730 = vmatpush1.bf16.msra.mxu0 0
      %2731 = vmatprep.subr.bf16.mxu0 0
      %2732 = vmatpush1.bf16.msra.mxu0 0
      %2733 = vmatprep.subr.bf16.mxu0 0
      %2734 = vmatpush1.bf16.msra.mxu0 0
      %2735 = vmatprep.subr.bf16.mxu0 0
      %2736 = vmatpush1.bf16.msra.mxu0 0
      %2737 = vmatprep.subr.bf16.mxu0 0
      %2738 = vmatpush1.bf16.msra.mxu0 0
      %2739 = vmatprep.subr.bf16.mxu0 0
      %2740 = vmatpush1.bf16.msra.mxu0 0
      %2741 = vmatprep.subr.bf16.mxu0 0
      %2742 = vmatpush1.bf16.msra.mxu0 0
      %2743 = vmatprep.mubr.bf16.mxu0 0
      %2744 = vmatmul.mubr.bf16.gmra.mrb[0].mxu0 %v2664
      %v2745 = vpop.f32.mrb[0].mxu0
      %v2746 = vadd.f32 %v2602, %v2745
      %v2747 = vpop.f32.mrb[0].mxu0
      %v2748 = vpop.f32.mrb[0].mxu0
      %v2749 = vadd.f32 %v2602, %v2748
      %v2750 = vpop.f32.mrb[0].mxu0
      %2751 = vmatprep.mubr.bf16.mxu0 0
      %2752 = vmatmul.mubr.bf16.gmra.mrb[0].mxu0 %v2667
      %v2753 = vpop.f32.mrb[0].mxu0
      %v2754 = vadd.f32 %v2602, %v2753
      %v2755 = vpop.f32.mrb[0].mxu0
      %v2756 = vpop.f32.mrb[0].mxu0
      %v2757 = vadd.f32 %v2602, %v2756
      %v2758 = vpop.f32.mrb[0].mxu0
      %2759 = vmatprep.mubr.bf16.mxu0 0
      %2760 = vmatmul.mubr.bf16.gmra.mrb[0].mxu0 %v2670
      %v2761 = vpop.f32.mrb[0].mxu0
      %v2762 = vadd.f32 %v2602, %v2761
      %v2763 = vpop.f32.mrb[0].mxu0
      %v2764 = vpop.f32.mrb[0].mxu0
      %v2765 = vadd.f32 %v2602, %v2764
      %v2766 = vpop.f32.mrb[0].mxu0
      %2767 = vmatprep.mubr.bf16.mxu0 0
      %2768 = vmatmul.mubr.bf16.gmra.mrb[0].mxu0 %v2673
      %v2769 = vpop.f32.mrb[0].mxu0
      %v2770 = vadd.f32 %v2602, %v2769
      %v2771 = vpop.f32.mrb[0].mxu0
      %v2772 = vpop.f32.mrb[0].mxu0
      %v2773 = vadd.f32 %v2602, %v2772
      %v2774 = vpop.f32.mrb[0].mxu0
      %2775 = vmatprep.mubr.bf16.mxu0 0
      %2776 = vmatmul.mubr.bf16.gmra.mrb[0].mxu0 %v2676
      %v2777 = vpop.f32.mrb[0].mxu0
      %v2778 = vadd.f32 %v2602, %v2777
      %v2779 = vpop.f32.mrb[0].mxu0
      %v2780 = vpop.f32.mrb[0].mxu0
      %v2781 = vadd.f32 %v2602, %v2780
      %v2782 = vpop.f32.mrb[0].mxu0
      %2783 = vmatprep.mubr.bf16.mxu0 0
      %2784 = vmatmul.mubr.bf16.gmra.mrb[0].mxu0 %v2679
      %v2785 = vpop.f32.mrb[0].mxu0
      %v2786 = vadd.f32 %v2602, %v2785
      %v2787 = vpop.f32.mrb[0].mxu0
      %v2788 = vpop.f32.mrb[0].mxu0
      %v2789 = vadd.f32 %v2602, %v2788
      %v2790 = vpop.f32.mrb[0].mxu0
      %2791 = vmatprep.mubr.bf16.mxu0 0
      %2792 = vmatmul.mubr.bf16.gmra.mrb[0].mxu0 %v2682
      %v2793 = vpop.f32.mrb[0].mxu0
      %v2794 = vadd.f32 %v2602, %v2793
      %v2795 = vpop.f32.mrb[0].mxu0
      %v2796 = vpop.f32.mrb[0].mxu0
      %v2797 = vadd.f32 %v2602, %v2796
      %v2798 = vpop.f32.mrb[0].mxu0
      %2799 = vmatprep.mubr.bf16.mxu0 0
      %2800 = vmatmul.mubr.bf16.gmra.mrb[0].mxu0 %v2685
      %v2801 = vpop.f32.mrb[0].mxu0
      %v2802 = vadd.f32 %v2602, %v2801
      %v2803 = vpop.f32.mrb[0].mxu0
      %v2804 = vpop.f32.mrb[0].mxu0
      %v2805 = vadd.f32 %v2602, %v2804
      %v2806 = vpop.f32.mrb[0].mxu0
      %2807 = vmatprep.mubr.bf16.mxu0 0
      %2808 = vmatmul.mubr.bf16.gmra.mrb[0].mxu0 %v2688
      %v2809 = vpop.f32.mrb[0].mxu0
      %v2810 = vadd.f32 %v2602, %v2809
      %v2811 = vpop.f32.mrb[0].mxu0
      %v2812 = vpop.f32.mrb[0].mxu0
      %v2813 = vadd.f32 %v2602, %v2812
      %v2814 = vpop.f32.mrb[0].mxu0
      %2815 = vmatprep.mubr.bf16.mxu0 0
      %2816 = vmatmul.mubr.bf16.gmra.mrb[0].mxu0 %v2691
      %v2817 = vpop.f32.mrb[0].mxu0
      %v2818 = vadd.f32 %v2602, %v2817
      %v2819 = vpop.f32.mrb[0].mxu0
      %v2820 = vpop.f32.mrb[0].mxu0
      %v2821 = vadd.f32 %v2602, %v2820
      %v2822 = vpop.f32.mrb[0].mxu0
      %2823 = vmatprep.mubr.bf16.mxu0 0
      %2824 = vmatmul.mubr.bf16.gmra.mrb[0].mxu0 %v2694
      %v2825 = vpop.f32.mrb[0].mxu0
      %v2826 = vadd.f32 %v2602, %v2825
      %v2827 = vpop.f32.mrb[0].mxu0
      %v2828 = vpop.f32.mrb[0].mxu0
      %v2829 = vadd.f32 %v2602, %v2828
      %v2830 = vpop.f32.mrb[0].mxu0
      %2831 = vmatprep.mubr.bf16.mxu0 0
      %2832 = vmatmul.mubr.bf16.gmra.mrb[0].mxu0 %v2697
      %v2833 = vpop.f32.mrb[0].mxu0
      %v2834 = vadd.f32 %v2602, %v2833
      %v2835 = vpop.f32.mrb[0].mxu0
      %v2836 = vpop.f32.mrb[0].mxu0
      %v2837 = vadd.f32 %v2602, %v2836
      %v2838 = vpop.f32.mrb[0].mxu0
      %2839 = vmatprep.mubr.bf16.mxu0 0
      %2840 = vmatmul.mubr.bf16.gmra.mrb[0].mxu0 %v2700
      %v2841 = vpop.f32.mrb[0].mxu0
      %v2842 = vadd.f32 %v2602, %v2841
      %v2843 = vpop.f32.mrb[0].mxu0
      %v2844 = vpop.f32.mrb[0].mxu0
      %v2845 = vadd.f32 %v2602, %v2844
      %v2846 = vpop.f32.mrb[0].mxu0
      %2847 = vmatprep.mubr.bf16.mxu0 0
      %2848 = vmatmul.mubr.bf16.gmra.mrb[0].mxu0 %v2703
      %v2849 = vpop.f32.mrb[0].mxu0
      %v2850 = vadd.f32 %v2602, %v2849
      %v2851 = vpop.f32.mrb[0].mxu0
      %v2852 = vpop.f32.mrb[0].mxu0
      %v2853 = vadd.f32 %v2602, %v2852
      %v2854 = vpop.f32.mrb[0].mxu0
      %2855 = vmatprep.mubr.bf16.mxu0 0
      %2856 = vmatmul.mubr.bf16.gmra.mrb[0].mxu0 %v2706
      %v2857 = vpop.f32.mrb[0].mxu0
      %v2858 = vadd.f32 %v2602, %v2857
      %v2859 = vpop.f32.mrb[0].mxu0
      %v2860 = vpop.f32.mrb[0].mxu0
      %v2861 = vadd.f32 %v2602, %v2860
      %v2862 = vpop.f32.mrb[0].mxu0
      %2863 = vmatprep.mubr.bf16.mxu0 0
      %2864 = vmatmul.mubr.bf16.gmra.mrb[0].mxu0 %v2709
      %v2865 = vpop.f32.mrb[0].mxu0
      %v2866 = vadd.f32 %v2602, %v2865
      %v2867 = vpop.f32.mrb[0].mxu0
      %v2868 = vpop.f32.mrb[0].mxu0
      %v2869 = vadd.f32 %v2602, %v2868
      %v2870 = vpop.f32.mrb[0].mxu0
      %2871 = vdwg.mxu0
      %v2872 = vmax.f32 %v2746, 0.0
      %v2873 = vmax.f32 %v2749, 0.0
      %v2874 = vmax.f32 %v2754, 0.0
      %v2875 = vmax.f32 %v2757, 0.0
      %v2876 = vmax.f32 %v2762, 0.0
      %v2877 = vmax.f32 %v2765, 0.0
      %v2878 = vmax.f32 %v2770, 0.0
      %v2879 = vmax.f32 %v2773, 0.0
      %v2880 = vmax.f32 %v2778, 0.0
      %v2881 = vmax.f32 %v2781, 0.0
      %v2882 = vmax.f32 %v2786, 0.0
      %v2883 = vmax.f32 %v2789, 0.0
      %v2884 = vmax.f32 %v2794, 0.0
      %v2885 = vmax.f32 %v2797, 0.0
      %v2886 = vmax.f32 %v2802, 0.0
      %v2887 = vmax.f32 %v2805, 0.0
      %v2888 = vmax.f32 %v2810, 0.0
      %v2889 = vmax.f32 %v2813, 0.0
      %v2890 = vmax.f32 %v2818, 0.0
      %v2891 = vmax.f32 %v2821, 0.0
      %v2892 = vmax.f32 %v2826, 0.0
      %v2893 = vmax.f32 %v2829, 0.0
      %v2894 = vmax.f32 %v2834, 0.0
      %v2895 = vmax.f32 %v2837, 0.0
      %v2896 = vmax.f32 %v2842, 0.0
      %v2897 = vmax.f32 %v2845, 0.0
      %v2898 = vmax.f32 %v2850, 0.0
      %v2899 = vmax.f32 %v2853, 0.0
      %v2900 = vmax.f32 %v2858, 0.0
      %v2901 = vmax.f32 %v2861, 0.0
      %v2902 = vmax.f32 %v2866, 0.0
      %v2903 = vmax.f32 %v2869, 0.0
      %v2904 = vpack.c.bf16 %v2873, %v2872
      %v2905 = vpack.c.bf16 %v2875, %v2874
      %v2906 = vpack.c.bf16 %v2877, %v2876
      %v2907 = vpack.c.bf16 %v2879, %v2878
      %v2908 = vpack.c.bf16 %v2881, %v2880
      %v2909 = vpack.c.bf16 %v2883, %v2882
      %v2910 = vpack.c.bf16 %v2885, %v2884
      %v2911 = vpack.c.bf16 %v2887, %v2886
      %v2912 = vpack.c.bf16 %v2889, %v2888
      %v2913 = vpack.c.bf16 %v2891, %v2890
      %v2914 = vpack.c.bf16 %v2893, %v2892
      %v2915 = vpack.c.bf16 %v2895, %v2894
      %v2916 = vpack.c.bf16 %v2897, %v2896
      %v2917 = vpack.c.bf16 %v2899, %v2898
      %v2918 = vpack.c.bf16 %v2901, %v2900
      %v2919 = vpack.c.bf16 %v2903, %v2902
      %v2920 = vld [vmem:[%s2 + $0xf8] sm:$0xf]
      %v2921 = vld [vmem:[%s2 + $0xfc] sm:$0xf]
      %v2922 = vld [vmem:[%s2 + $0x100] sm:$0x1]
      %v2923 = vunpack.c.l.bf16 %v2922
      %v2924 = vlaneseq
      %v2925 = vshrl.u32 %v2924, 7
      %v2926 = vsub.s32 0, %v2925
      %v2927 = vrot.slane %v2923, %v2926
      %v2930 = vunpack.c.l.b16 %v2920
      %v2931 = vunpack.c.l.b16 %v2921
      %v2932 = vpack.c.b16 %v2931, %v2930
      %v2935 = vsel %vm582, %v2904, 0
      %v2938 = vsel %vm582, %v2905, 0
      %v2941 = vsel %vm582, %v2906, 0
      %v2944 = vsel %vm582, %v2907, 0
      %v2947 = vsel %vm582, %v2908, 0
      %v2950 = vsel %vm582, %v2909, 0
      %v2953 = vsel %vm582, %v2910, 0
      %v2956 = vsel %vm582, %v2911, 0
      %v2959 = vsel %vm582, %v2912, 0
      %v2962 = vsel %vm582, %v2913, 0
      %v2965 = vsel %vm582, %v2914, 0
      %v2968 = vsel %vm582, %v2915, 0
      %v2971 = vsel %vm582, %v2916, 0
      %v2974 = vsel %vm582, %v2917, 0
      %v2977 = vsel %vm582, %v2918, 0
      %v2980 = vsel %vm582, %v2919, 0
      %2982 = vmatprep.subr.bf16.mxu0 0
      %2983 = vmatpush1.bf16.msra.mxu0 %v2932
      %2984 = vmatprep.subr.bf16.mxu0 0
      %2985 = vmatpush1.bf16.msra.mxu0 0
      %2986 = vmatprep.subr.bf16.mxu0 0
      %2987 = vmatpush1.bf16.msra.mxu0 0
      %2988 = vmatprep.subr.bf16.mxu0 0
      %2989 = vmatpush1.bf16.msra.mxu0 0
      %2990 = vmatprep.subr.bf16.mxu0 0
      %2991 = vmatpush1.bf16.msra.mxu0 0
      %2992 = vmatprep.subr.bf16.mxu0 0
      %2993 = vmatpush1.bf16.msra.mxu0 0
      %2994 = vmatprep.subr.bf16.mxu0 0
      %2995 = vmatpush1.bf16.msra.mxu0 0
      %2996 = vmatprep.subr.bf16.mxu0 0
      %2997 = vmatpush1.bf16.msra.mxu0 0
      %2998 = vmatprep.subr.bf16.mxu0 0
      %2999 = vmatpush1.bf16.msra.mxu0 0
      %3000 = vmatprep.subr.bf16.mxu0 0
      %3001 = vmatpush1.bf16.msra.mxu0 0
      %3002 = vmatprep.subr.bf16.mxu0 0
      %3003 = vmatpush1.bf16.msra.mxu0 0
      %3004 = vmatprep.subr.bf16.mxu0 0
      %3005 = vmatpush1.bf16.msra.mxu0 0
      %3006 = vmatprep.subr.bf16.mxu0 0
      %3007 = vmatpush1.bf16.msra.mxu0 0
      %3008 = vmatprep.subr.bf16.mxu0 0
      %3009 = vmatpush1.bf16.msra.mxu0 0
      %3010 = vmatprep.subr.bf16.mxu0 0
      %3011 = vmatpush1.bf16.msra.mxu0 0
      %3012 = vmatprep.subr.bf16.mxu0 0
      %3013 = vmatpush1.bf16.msra.mxu0 0
      %3014 = vmatprep.mubr.bf16.mxu0 0
      %3015 = vmatmul.mubr.bf16.gmra.mrb[0].mxu0 %v2935
      %v3016 = vpop.f32.mrb[0].mxu0
      %v3017 = vadd.f32 %v2927, %v3016
      %v3018 = vpop.f32.mrb[0].mxu0
      %v3019 = vpop.f32.mrb[0].mxu0
      %v3020 = vadd.f32 %v2927, %v3019
      %v3021 = vpop.f32.mrb[0].mxu0
      %3022 = vmatprep.mubr.bf16.mxu0 0
      %3023 = vmatmul.mubr.bf16.gmra.mrb[0].mxu0 %v2938
      %v3024 = vpop.f32.mrb[0].mxu0
      %v3025 = vadd.f32 %v2927, %v3024
      %v3026 = vpop.f32.mrb[0].mxu0
      %v3027 = vpop.f32.mrb[0].mxu0
      %v3028 = vadd.f32 %v2927, %v3027
      %v3029 = vpop.f32.mrb[0].mxu0
      %3030 = vmatprep.mubr.bf16.mxu0 0
      %3031 = vmatmul.mubr.bf16.gmra.mrb[0].mxu0 %v2941
      %v3032 = vpop.f32.mrb[0].mxu0
      %v3033 = vadd.f32 %v2927, %v3032
      %v3034 = vpop.f32.mrb[0].mxu0
      %v3035 = vpop.f32.mrb[0].mxu0
      %v3036 = vadd.f32 %v2927, %v3035
      %v3037 = vpop.f32.mrb[0].mxu0
      %3038 = vmatprep.mubr.bf16.mxu0 0
      %3039 = vmatmul.mubr.bf16.gmra.mrb[0].mxu0 %v2944
      %v3040 = vpop.f32.mrb[0].mxu0
      %v3041 = vadd.f32 %v2927, %v3040
      %v3042 = vpop.f32.mrb[0].mxu0
      %v3043 = vpop.f32.mrb[0].mxu0
      %v3044 = vadd.f32 %v2927, %v3043
      %v3045 = vpop.f32.mrb[0].mxu0
      %3046 = vmatprep.mubr.bf16.mxu0 0
      %3047 = vmatmul.mubr.bf16.gmra.mrb[0].mxu0 %v2947
      %v3048 = vpop.f32.mrb[0].mxu0
      %v3049 = vadd.f32 %v2927, %v3048
      %v3050 = vpop.f32.mrb[0].mxu0
      %v3051 = vpop.f32.mrb[0].mxu0
      %v3052 = vadd.f32 %v2927, %v3051
      %v3053 = vpop.f32.mrb[0].mxu0
      %3054 = vmatprep.mubr.bf16.mxu0 0
      %3055 = vmatmul.mubr.bf16.gmra.mrb[0].mxu0 %v2950
      %v3056 = vpop.f32.mrb[0].mxu0
      %v3057 = vadd.f32 %v2927, %v3056
      %v3058 = vpop.f32.mrb[0].mxu0
      %v3059 = vpop.f32.mrb[0].mxu0
      %v3060 = vadd.f32 %v2927, %v3059
      %v3061 = vpop.f32.mrb[0].mxu0
      %3062 = vmatprep.mubr.bf16.mxu0 0
      %3063 = vmatmul.mubr.bf16.gmra.mrb[0].mxu0 %v2953
      %v3064 = vpop.f32.mrb[0].mxu0
      %v3065 = vadd.f32 %v2927, %v3064
      %v3066 = vpop.f32.mrb[0].mxu0
      %v3067 = vpop.f32.mrb[0].mxu0
      %v3068 = vadd.f32 %v2927, %v3067
      %v3069 = vpop.f32.mrb[0].mxu0
      %3070 = vmatprep.mubr.bf16.mxu0 0
      %3071 = vmatmul.mubr.bf16.gmra.mrb[0].mxu0 %v2956
      %v3072 = vpop.f32.mrb[0].mxu0
      %v3073 = vadd.f32 %v2927, %v3072
      %v3074 = vpop.f32.mrb[0].mxu0
      %v3075 = vpop.f32.mrb[0].mxu0
      %v3076 = vadd.f32 %v2927, %v3075
      %v3077 = vpop.f32.mrb[0].mxu0
      %3078 = vmatprep.mubr.bf16.mxu0 0
      %3079 = vmatmul.mubr.bf16.gmra.mrb[0].mxu0 %v2959
      %v3080 = vpop.f32.mrb[0].mxu0
      %v3081 = vadd.f32 %v2927, %v3080
      %v3082 = vpop.f32.mrb[0].mxu0
      %v3083 = vpop.f32.mrb[0].mxu0
      %v3084 = vadd.f32 %v2927, %v3083
      %v3085 = vpop.f32.mrb[0].mxu0
      %3086 = vmatprep.mubr.bf16.mxu0 0
      %3087 = vmatmul.mubr.bf16.gmra.mrb[0].mxu0 %v2962
      %v3088 = vpop.f32.mrb[0].mxu0
      %v3089 = vadd.f32 %v2927, %v3088
      %v3090 = vpop.f32.mrb[0].mxu0
      %v3091 = vpop.f32.mrb[0].mxu0
      %v3092 = vadd.f32 %v2927, %v3091
      %v3093 = vpop.f32.mrb[0].mxu0
      %3094 = vmatprep.mubr.bf16.mxu0 0
      %3095 = vmatmul.mubr.bf16.gmra.mrb[0].mxu0 %v2965
      %v3096 = vpop.f32.mrb[0].mxu0
      %v3097 = vadd.f32 %v2927, %v3096
      %v3098 = vpop.f32.mrb[0].mxu0
      %v3099 = vpop.f32.mrb[0].mxu0
      %v3100 = vadd.f32 %v2927, %v3099
      %v3101 = vpop.f32.mrb[0].mxu0
      %3102 = vmatprep.mubr.bf16.mxu0 0
      %3103 = vmatmul.mubr.bf16.gmra.mrb[0].mxu0 %v2968
      %v3104 = vpop.f32.mrb[0].mxu0
      %v3105 = vadd.f32 %v2927, %v3104
      %v3106 = vpop.f32.mrb[0].mxu0
      %v3107 = vpop.f32.mrb[0].mxu0
      %v3108 = vadd.f32 %v2927, %v3107
      %v3109 = vpop.f32.mrb[0].mxu0
      %3110 = vmatprep.mubr.bf16.mxu0 0
      %3111 = vmatmul.mubr.bf16.gmra.mrb[0].mxu0 %v2971
      %v3112 = vpop.f32.mrb[0].mxu0
      %v3113 = vadd.f32 %v2927, %v3112
      %v3114 = vpop.f32.mrb[0].mxu0
      %v3115 = vpop.f32.mrb[0].mxu0
      %v3116 = vadd.f32 %v2927, %v3115
      %v3117 = vpop.f32.mrb[0].mxu0
      %3118 = vmatprep.mubr.bf16.mxu0 0
      %3119 = vmatmul.mubr.bf16.gmra.mrb[0].mxu0 %v2974
      %v3120 = vpop.f32.mrb[0].mxu0
      %v3121 = vadd.f32 %v2927, %v3120
      %v3122 = vpop.f32.mrb[0].mxu0
      %v3123 = vpop.f32.mrb[0].mxu0
      %v3124 = vadd.f32 %v2927, %v3123
      %v3125 = vpop.f32.mrb[0].mxu0
      %3126 = vmatprep.mubr.bf16.mxu0 0
      %3127 = vmatmul.mubr.bf16.gmra.mrb[0].mxu0 %v2977
      %v3128 = vpop.f32.mrb[0].mxu0
      %v3129 = vadd.f32 %v2927, %v3128
      %v3130 = vpop.f32.mrb[0].mxu0
      %v3131 = vpop.f32.mrb[0].mxu0
      %v3132 = vadd.f32 %v2927, %v3131
      %v3133 = vpop.f32.mrb[0].mxu0
      %3134 = vmatprep.mubr.bf16.mxu0 0
      %3135 = vmatmul.mubr.bf16.gmra.mrb[0].mxu0 %v2980
      %v3136 = vpop.f32.mrb[0].mxu0
      %v3137 = vadd.f32 %v2927, %v3136
      %v3138 = vpop.f32.mrb[0].mxu0
      %v3139 = vpop.f32.mrb[0].mxu0
      %v3140 = vadd.f32 %v2927, %v3139
      %v3141 = vpop.f32.mrb[0].mxu0
      %3142 = vdwg.mxu0
      %3143 = vst [vmem:[%s184] sm:$0xff] %v3017
      %3144 = vst [vmem:[%s184 + $0x8] sm:$0xff] %v3020
      %3145 = vst [vmem:[%s184 + $0x10] sm:$0xff] %v3025
      %3146 = vst [vmem:[%s184 + $0x18] sm:$0xff] %v3028
      %3147 = vst [vmem:[%s184 + $0x20] sm:$0xff] %v3033
      %3148 = vst [vmem:[%s184 + $0x28] sm:$0xff] %v3036
      %3149 = vst [vmem:[%s184 + $0x30] sm:$0xff] %v3041
      %3150 = vst [vmem:[%s184 + $0x38] sm:$0xff] %v3044
      %3151 = vst [vmem:[%s184 + $0x40] sm:$0xff] %v3049
      %3152 = vst [vmem:[%s184 + $0x48] sm:$0xff] %v3052
      %3153 = vst [vmem:[%s184 + $0x50] sm:$0xff] %v3057
      %3154 = vst [vmem:[%s184 + $0x58] sm:$0xff] %v3060
      %3155 = vst [vmem:[%s184 + $0x60] sm:$0xff] %v3065
      %3156 = vst [vmem:[%s184 + $0x68] sm:$0xff] %v3068
      %3157 = vst [vmem:[%s184 + $0x70] sm:$0xff] %v3073
      %3158 = vst [vmem:[%s184 + $0x78] sm:$0xff] %v3076
      %3159 = vst [vmem:[%s184 + $0x80] sm:$0xff] %v3081
      %3160 = vst [vmem:[%s184 + $0x88] sm:$0xff] %v3084
      %3161 = vst [vmem:[%s184 + $0x90] sm:$0xff] %v3089
      %3162 = vst [vmem:[%s184 + $0x98] sm:$0xff] %v3092
      %3163 = vst [vmem:[%s184 + $0xa0] sm:$0xff] %v3097
      %3164 = vst [vmem:[%s184 + $0xa8] sm:$0xff] %v3100
      %3165 = vst [vmem:[%s184 + $0xb0] sm:$0xff] %v3105
      %3166 = vst [vmem:[%s184 + $0xb8] sm:$0xff] %v3108
      %3167 = vst [vmem:[%s184 + $0xc0] sm:$0xff] %v3113
      %3168 = vst [vmem:[%s184 + $0xc8] sm:$0xff] %v3116
      %3169 = vst [vmem:[%s184 + $0xd0] sm:$0xff] %v3121
      %3170 = vst [vmem:[%s184 + $0xd8] sm:$0xff] %v3124
      %3171 = vst [vmem:[%s184 + $0xe0] sm:$0xff] %v3129
      %3172 = vst [vmem:[%s184 + $0xe8] sm:$0xff] %v3132
      %3173 = vst [vmem:[%s184 + $0xf0] sm:$0xff] %v3137
      %3174 = vst [vmem:[%s184 + $0xf8] sm:$0xff] %v3140
      %p3175 = scmp.lt.s32.totalorder %s14, 1
      %s3176 = scalar_select %p3175, %s14, 1
      %s3177 = smul.addr %s3176, 32
      %s3178 = smul.addr %s3177, 8
      %s3179 = scalar_lea.vmem %s3, %s3178
      // Predicated region
      $region33: #{_lambda_.1} parent=31 // pred_check
        %p3180 = pneg %p105
      $region34: #{_lambda_.1} parent=31 // pred_check_branch
        %3182 = sbr.rel (%p3180) target = $region36
      $region35: #{_lambda_.1} parent=31 // pred_region
        _
      $region36: #{_lambda_.1} parent=31 // pred_fallthru
        _
    $region32: #{_lambda_.1} parent=5 // pred_fallthru
      _
    %p3183 = scmp.le.s32.totalorder 2, %s9
    // Predicated region
    $region37: #{_lambda_.1} parent=5 // pred_check
      %p3184 = pneg %p3183
    $region38: #{_lambda_.1} parent=5 // pred_check_branch
      %3186 = sbr.rel (%p3184) target = $region40
    $region39: #{_lambda_.1} parent=5 // pred_region
      %s3187 = ssub.s32 %s9, 2
      // Predicated region
      $region41: #{_lambda_.1} parent=39 // pred_check
        %p3188 = pneg %p111
      $region42: #{_lambda_.1} parent=39 // pred_check_branch
        %3190 = sbr.rel (%p3188) target = $region44
      $region43: #{_lambda_.1} parent=39 // pred_region
        %p3191 = scmp.lt.s32.totalorder %s15, 1
        %s3192 = scalar_select %p3191, %s15, 1
        %s3193 = smul.addr %s3192, 32
        %s3194 = smul.addr %s3193, 8
        %s3195 = scalar_lea.vmem %s3, %s3194
      $region44: #{_lambda_.1} parent=39 // pred_fallthru
        _
    $region40: #{_lambda_.1} parent=5 // pred_fallthru
      _
  $region6: #{_lambda_.1} parent=0 // loop_footer
    %s13 = sadd.s32 1, %s9
  $region7: #{_lambda_.1} parent=0 // loop_footer_branch
    %8 = sbr.rel target = $region3
  $region8: #{_lambda_.1} parent=0 // loop_exit
    _

</llo_original>
